<compile_context>
chip_gen: v7x
topology: tpu7x:2x2x1
jax: 0.10.0
libtpu: 0.0.40
codegen_flags: <defaults>
</compile_context>

<pallas_src>
import numpy as np
import jax
import jax.numpy as jnp
from jax.experimental import pallas as pl
from jax.experimental.pallas import tpu as pltpu  # noqa: F401  (kept for TPU-specific knobs)

# ----------------------------- configuration --------------------------------
VOCAB = 50        # tiny synthetic vocab
H = 32            # BERT hidden size (stands in for 768)
FFN = 64          # BERT FFN intermediate size
R = 16            # LSTM hidden size per direction (stands in for 150)
NUM_CLASS = 4
MAX_PE = 64       # positional-encoding table length


# ----------------------------- kernel helpers --------------------------------
def _ln(x, g, b, eps=1e-12):
    mu = jnp.mean(x, axis=-1, keepdims=True)
    var = jnp.mean((x - mu) ** 2, axis=-1, keepdims=True)
    return (x - mu) * jax.lax.rsqrt(var + eps) * g + b


def _gelu(x):
    # TODO(synk): HuggingFace BERT uses exact erf-GELU; tanh approximation kept here.
    return 0.5 * x * (1.0 + jnp.tanh(0.7978845608028654 * (x + 0.044715 * x * x * x)))


# ----------------------------- Pallas kernels -------------------------------
def fused_bert_kernel(emb_ref, bias_ref, tmask_ref,
                      wqkv_ref, bqkv_ref, wo_ref, bo_ref,
                      lng_e_ref, lnb_e_ref, ln1g_ref, ln1b_ref,
                      w1_ref, b1_ref, w2_ref, b2_ref, ln2g_ref, ln2b_ref,
                      hid_ref, seg_ref):
    # emb (N,S,H), bias (N,1,S), tmask (N,S,1).  All N sentences in one step.
    N, S, Hd = emb_ref.shape

    # embedding LayerNorm on the flattened (N*S, H) slab
    x = _ln(emb_ref[...].reshape(N * S, Hd), lng_e_ref[...], lnb_e_ref[...])

    # fused QKV projection: one (H, 3H) matmul, slice lanes afterwards
    qkv = jnp.dot(x, wqkv_ref[...], preferred_element_type=jnp.float32) + bqkv_ref[...]
    q = qkv[:, :Hd].reshape(N, S, Hd)
    k = qkv[:, Hd:2 * Hd].reshape(N, S, Hd)
    v = qkv[:, 2 * Hd:].reshape(N, S, Hd)

    scale = 1.0 / float(np.sqrt(Hd))
    scores = jnp.einsum('nqd,nkd->nqk', q, k,
                        preferred_element_type=jnp.float32) * scale + bias_ref[...]
    scores = scores - jnp.max(scores, axis=-1, keepdims=True)
    probs = jnp.exp(scores)
    probs = probs * pl.reciprocal(jnp.sum(probs, axis=-1, keepdims=True), approx=True)
    ctx = jnp.einsum('nqk,nkd->nqd', probs, v,
                     preferred_element_type=jnp.float32).reshape(N * S, Hd)

    attn = jnp.dot(ctx, wo_ref[...], preferred_element_type=jnp.float32) + bo_ref[...]
    h1 = _ln(x + attn, ln1g_ref[...], ln1b_ref[...])
    ffn = jnp.dot(_gelu(jnp.dot(h1, w1_ref[...], preferred_element_type=jnp.float32) + b1_ref[...]),
                  w2_ref[...], preferred_element_type=jnp.float32) + b2_ref[...]
    h2 = _ln(h1 + ffn, ln2g_ref[...], ln2b_ref[...]).reshape(N, S, Hd)

    hid_ref[...] = h2
    # per-sentence masked mean (segment vectors); fully-padded rows come out as 0.
    m = tmask_ref[...]
    seg_ref[...] = jnp.sum(h2 * m, axis=1) / jnp.maximum(jnp.sum(m, axis=1), 1.0)


def attention_kernel(pk_ref, pm_ref, docs_ref, dm_ref,
                     ga_wk_ref, ga_bk_ref, ga_v_ref, ga_vb_ref,
                     ba_wk_ref, ba_bk_ref, ba_wq_ref, ba_bq_ref, ba_v_ref, ba_vb_ref,
                     ctx_ref):
    # prompt keys (1,Tp,H) + mask (1,Tp,1); docs (B,T,H) + mask (B,T,1).
    A = ga_wk_ref.shape[1]

    def additive_ctx(keys, mask_col, wk, bk, v, vb, qp):
        # keys (T,H), mask_col (T,1), qp (1,A) -> context (1,H)
        kp = jnp.dot(keys, wk, preferred_element_type=jnp.float32) + bk
        e = jnp.tanh(kp + qp)
        s = jnp.sum(e * v, axis=-1, keepdims=True) + vb           # (T,1)
        s = jnp.where(mask_col > 0.5, s, -1e30)
        s = s - jnp.max(s, axis=0, keepdims=True)
        p = jnp.exp(s)
        p = p * pl.reciprocal(jnp.sum(p, axis=0, keepdims=True), approx=True)
        return jnp.sum(p * keys, axis=0, keepdims=True)           # (1,H)

    # GlobalAttention over the prompt tokens (no query term)
    zero_q = jnp.zeros((1, A), jnp.float32)
    prompt_ctx = additive_ctx(pk_ref[0], pm_ref[0],
                              ga_wk_ref[...], ga_bk_ref[...],
                              ga_v_ref[...], ga_vb_ref[...], zero_q)

    # BahdanauAttention over each document with the prompt context as query
    qp = jnp.dot(prompt_ctx, ba_wq_ref[...],
                 preferred_element_type=jnp.float32) + ba_bq_ref[...]
    B = docs_ref.shape[0]
    for b in range(B):                                            # B is tiny -> static unroll
        ctx_ref[pl.ds(b, 1), :] = additive_ctx(
            docs_ref[b], dm_ref[b],
            ba_wk_ref[...], ba_bk_ref[...], ba_v_ref[...], ba_vb_ref[...], qp)


def lstm_kernel(seg_ref, lens_ref, wif_ref, whf_ref, bf_ref,
                wib_ref, whb_ref, bb_ref, o_ref):
    # batched bidirectional LSTM; gates packed as (H,4R)/(R,4R); lens (B,1) float.
    B, C, Hd = seg_ref.shape
    Rh = whf_ref.shape[0]

    seg = seg_ref[...]
    lens = lens_ref[...]
    wif = wif_ref[...]; whf = whf_ref[...]; bf = bf_ref[...]      # hoisted loads
    wib = wib_ref[...]; whb = whb_ref[...]; bb = bb_ref[...]

    def step(xt, h, c, wi, wh, bias, valid):
        g = (jnp.dot(xt, wi, preferred_element_type=jnp.float32)
             + jnp.dot(h, wh, preferred_element_type=jnp.float32) + bias)
        i_g = jax.nn.sigmoid(g[:, :Rh])
        f_g = jax.nn.sigmoid(g[:, Rh:2 * Rh])
        g_g = jnp.tanh(g[:, 2 * Rh:3 * Rh])
        o_g = jax.nn.sigmoid(g[:, 3 * Rh:])
        c_n = f_g * c + i_g * g_g
        h_n = o_g * jnp.tanh(c_n)
        return jnp.where(valid, h_n, h), jnp.where(valid, c_n, c)

    hf = jnp.zeros((B, Rh), jnp.float32); cf = jnp.zeros((B, Rh), jnp.float32)
    hb = jnp.zeros((B, Rh), jnp.float32); cb = jnp.zeros((B, Rh), jnp.float32)
    for s in range(C):                                            # C small -> static unroll
        tf_, tb_ = s, C - 1 - s
        vf = lens > float(tf_)
        vb = lens > float(tb_)
        hf, cf = step(seg[:, tf_, :], hf, cf, wif, whf, bf, vf)
        hb, cb = step(seg[:, tb_, :], hb, cb, wib, whb, bb, vb)
    o_ref[...] = jnp.concatenate([hf, hb], axis=-1)


def tail_kernel(doc_ref, man_ref, fh_ref, mfw_ref, mfb_ref,
                w1_ref, w2_ref, w3_ref, b_ref, o_ref):
    doc_feat = jnp.tanh(doc_ref[...])
    man_feat = jnp.tanh(jnp.dot(man_ref[...], mfw_ref[...],
                                preferred_element_type=jnp.float32) + mfb_ref[...])
    fin_feat = jnp.tanh(fh_ref[...])
    logits = (jnp.dot(doc_feat, w1_ref[...], preferred_element_type=jnp.float32)
              + jnp.dot(man_feat, w2_ref[...], preferred_element_type=jnp.float32)
              + jnp.dot(fin_feat, w3_ref[...], preferred_element_type=jnp.float32)
              + b_ref[...])
    m = jnp.max(logits, axis=-1, keepdims=True)
    lse = jnp.log(jnp.sum(jnp.exp(logits - m), axis=-1, keepdims=True)) + m
    o_ref[...] = logits - lse


# ----------------------------- host-side glue --------------------------------
def sinusoidal_pe(length, d):
    pos = np.arange(length, dtype=np.float32)[:, None]
    i = np.arange(d, dtype=np.float32)[None, :]
    angle = pos / np.power(10000.0, (2.0 * np.floor(i / 2.0)) / d)
    pe = np.where((np.arange(d)[None, :] % 2) == 0, np.sin(angle), np.cos(angle))
    return jnp.asarray(pe, jnp.float32)


def init_params(key):
    keys = iter(jax.random.split(key, 64))

    def nrm(shape, scale=0.05):
        return jax.random.normal(next(keys), shape, jnp.float32) * scale

    def uni(shape, a):
        return jax.random.uniform(next(keys), shape, jnp.float32, -a, a)

    p = {}
    # tiny BERT (1 layer, 1 head)
    p["word_emb"] = nrm((VOCAB, H))
    p["pos_emb"] = nrm((MAX_PE, H))
    p["type_emb"] = nrm((1, H))
    p["emb_ln_g"] = jnp.ones((1, H), jnp.float32)
    p["emb_ln_b"] = jnp.zeros((1, H), jnp.float32)
    p["wqkv"] = nrm((H, 3 * H)); p["bqkv"] = jnp.zeros((1, 3 * H), jnp.float32)
    p["wo"] = nrm((H, H));       p["bo"] = jnp.zeros((1, H), jnp.float32)
    p["w1"] = nrm((H, FFN));     p["b1"] = jnp.zeros((1, FFN), jnp.float32)
    p["w2"] = nrm((FFN, H));     p["b2"] = jnp.zeros((1, H), jnp.float32)
    p["ln1_g"] = jnp.ones((1, H), jnp.float32); p["ln1_b"] = jnp.zeros((1, H), jnp.float32)
    p["ln2_g"] = jnp.ones((1, H), jnp.float32); p["ln2_b"] = jnp.zeros((1, H), jnp.float32)
    # GlobalAttention (prompt)
    p["ga_wk"] = nrm((H, H)); p["ga_bk"] = jnp.zeros((1, H), jnp.float32)
    p["ga_v"] = nrm((1, H));  p["ga_vb"] = jnp.zeros((1, 1), jnp.float32)
    # BahdanauAttention (doc)
    p["ba_wk"] = nrm((H, H)); p["ba_bk"] = jnp.zeros((1, H), jnp.float32)
    p["ba_wq"] = nrm((H, H)); p["ba_bq"] = jnp.zeros((1, H), jnp.float32)
    p["ba_v"] = nrm((1, H));  p["ba_vb"] = jnp.zeros((1, 1), jnp.float32)
    # manual feature layer (27 -> 5)
    p["mf_w"] = uni((27, 5), 1.0 / np.sqrt(27.0))
    p["mf_b"] = jnp.zeros((1, 5), jnp.float32)
    # bidirectional LSTM, gates packed (i,f,g,o)
    p["lstm_wif"] = nrm((H, 4 * R)); p["lstm_whf"] = nrm((R, 4 * R))
    p["lstm_bf"] = jnp.zeros((1, 4 * R), jnp.float32)
    p["lstm_wib"] = nrm((H, 4 * R)); p["lstm_whb"] = nrm((R, 4 * R))
    p["lstm_bb"] = jnp.zeros((1, 4 * R), jnp.float32)
    # classifier: uniform(-0.1, 0.1), zero bias
    p["cls_w"] = uni((H + 5 + 2 * R, NUM_CLASS), 0.1)
    p["cls_b"] = jnp.zeros((1, NUM_CLASS), jnp.float32)
    return p


def forward(p, inputs, mask, sent_counts, sent_lens, prompt_inputs, prompt_mask,
            prompt_sent_counts, prompt_sent_lens, manual_feature, label=None):
    B, C, S = inputs.shape
    P = prompt_inputs.shape[1]
    NC = B * C
    N = NC + P

    # ---- one BERT pass over all essay + prompt sentences (dropout = identity) ----
    ids_all = jnp.concatenate([inputs.reshape(NC, S), prompt_inputs.reshape(P, S)], axis=0)
    mask_all = jnp.concatenate([mask.reshape(NC, S), prompt_mask.reshape(P, S)],
                               axis=0).astype(jnp.float32)
    emb = p["word_emb"][ids_all] + p["pos_emb"][None, :S, :] + p["type_emb"][None]
    attn_bias = (1.0 - mask_all)[:, None, :] * -1e9          # (N,1,S)
    token_mask = mask_all[:, :, None]                        # (N,S,1)

    hid, seg_all = pl.pallas_call(
        fused_bert_kernel,
        out_shape=(jax.ShapeDtypeStruct((N, S, H), jnp.float32),
                   jax.ShapeDtypeStruct((N, H), jnp.float32)),
    )(emb, attn_bias, token_mask,
      p["wqkv"], p["bqkv"], p["wo"], p["bo"],
      p["emb_ln_g"], p["emb_ln_b"], p["ln1_g"], p["ln1_b"],
      p["w1"], p["b1"], p["w2"], p["b2"], p["ln2_g"], p["ln2_b"])

    essay_hidden = hid[:NC]                                  # (B*C, S, H)
    prompt_hidden = hid[NC:]                                 # (P, S, H)
    seg = seg_all[:NC].reshape(B, C, H)                      # per-sentence segment vectors

    pe = sinusoidal_pe(MAX_PE, H)

    # ---- ragged doc assembly -> single padded gather (static indices) ----
    doc_lens = [int(sum(sent_lens[b][j] for j in range(sent_counts[b]))) for b in range(B)]
    T = max(doc_lens)
    gidx = np.zeros((B, T), np.int32)
    for b in range(B):
        t = 0
        for j in range(sent_counts[b]):
            L = int(sent_lens[b][j])
            gidx[b, t:t + L] = b * C * S + j * S + np.arange(L)
            t += L
    docs_mask = (np.arange(T)[None, :] < np.asarray(doc_lens)[:, None]).astype(np.float32)
    docs = essay_hidden.reshape(NC * S, H)[jnp.asarray(gidx)]            # (B,T,H)
    docs = (docs + pe[None, :T, :]) * jnp.asarray(docs_mask)[:, :, None]

    # ---- prompt assembly (single gather) ----
    Tp = int(sum(prompt_sent_lens[0][j] for j in range(prompt_sent_counts)))
    pidx = np.zeros((Tp,), np.int32)
    t = 0
    for j in range(prompt_sent_counts):
        L = int(prompt_sent_lens[0][j])
        pidx[t:t + L] = j * S + np.arange(L)
        t += L
    prompt_vec = (prompt_hidden.reshape(P * S, H)[jnp.asarray(pidx)] + pe[:Tp])[None]  # (1,Tp,H)
    prompt_m = jnp.ones((1, Tp, 1), jnp.float32)

    # ---- GlobalAttention (prompt) + BahdanauAttention (docs), fused ----
    doc_ctx = pl.pallas_call(
        attention_kernel,
        out_shape=jax.ShapeDtypeStruct((B, H), jnp.float32),
    )(prompt_vec, prompt_m, docs, jnp.asarray(docs_mask)[:, :, None],
      p["ga_wk"], p["ga_bk"], p["ga_v"], p["ga_vb"],
      p["ba_wk"], p["ba_bk"], p["ba_wq"], p["ba_bq"], p["ba_v"], p["ba_vb"])

    # ---- bidirectional LSTM segment encoder (sort/unsort of the original is a no-op) ----
    lens_f = jnp.asarray(sent_counts, jnp.float32).reshape(B, 1)
    fh = pl.pallas_call(
        lstm_kernel,
        out_shape=jax.ShapeDtypeStruct((B, 2 * R), jnp.float32),
    )(seg, lens_f, p["lstm_wif"], p["lstm_whf"], p["lstm_bf"],
      p["lstm_wib"], p["lstm_whb"], p["lstm_bb"])

    # ---- fused tail: manual dense+tanh, feature fusion, classifier + log_softmax ----
    w1c = p["cls_w"][:H]
    w2c = p["cls_w"][H:H + 5]
    w3c = p["cls_w"][H + 5:]
    log_probs = pl.pallas_call(
        tail_kernel,
        out_shape=jax.ShapeDtypeStruct((B, NUM_CLASS), jnp.float32),
    )(doc_ctx, manual_feature, fh, p["mf_w"], p["mf_b"], w1c, w2c, w3c, p["cls_b"])

    if label is not None:
        loss = -jnp.sum(jnp.take_along_axis(log_probs, label[:, None], axis=1))  # NLL sum
    else:
        loss = None
    prediction = jnp.argmax(log_probs, axis=1)
    return {"loss": loss, "prediction": prediction}


# ---------------------------------- main -------------------------------------
if __name__ == "__main__":
    key = jax.random.PRNGKey(0)
    k_ids, k_pids, k_mf, k_lab, k_par = jax.random.split(key, 5)

    B, C, S = 2, 3, 8
    sent_counts = (3, 2)
    sent_lens = ((5, 8, 4), (6, 3, 0))
    prompt_sent_counts = 2
    prompt_sent_lens = ((6, 4),)

    inputs = jax.random.randint(k_ids, (B, C, S), 0, VOCAB, dtype=jnp.int32)
    mask_np = np.zeros((B, C, S), np.float32)
    for b in range(B):
        for j in range(sent_counts[b]):
            mask_np[b, j, :sent_lens[b][j]] = 1.0
    mask = jnp.asarray(mask_np)

    prompt_inputs = jax.random.randint(k_pids, (1, prompt_sent_counts, S), 0, VOCAB,
                                       dtype=jnp.int32)
    pmask_np = np.zeros((1, prompt_sent_counts, S), np.float32)
    for j in range(prompt_sent_counts):
        pmask_np[0, j, :prompt_sent_lens[0][j]] = 1.0
    prompt_mask = jnp.asarray(pmask_np)

    manual_feature = jax.random.normal(k_mf, (B, 27), jnp.float32)
    label = jax.random.randint(k_lab, (B,), 0, NUM_CLASS, dtype=jnp.int32)

    params = init_params(k_par)
    fwd = jax.jit(forward, static_argnums=(3, 4, 7, 8))
    out = fwd(params, inputs, mask, sent_counts, sent_lens, prompt_inputs, prompt_mask,
              prompt_sent_counts, prompt_sent_lens, manual_feature, label)
    jax.block_until_ready(out["loss"])
    jax.block_until_ready(out["prediction"])
    print("KERNEL_OK")
</pallas_src>

<mosaic_0001>
module attributes {stable_mosaic.version = 11 : i64} {
  func.func @fused_bert_kernel(%arg0: memref<8x8x32xf32, #tpu.memory_space<vmem>>, %arg1: memref<8x1x8xf32, #tpu.memory_space<vmem>>, %arg2: memref<8x8x1xf32, #tpu.memory_space<vmem>>, %arg3: memref<32x96xf32, #tpu.memory_space<vmem>>, %arg4: memref<1x96xf32, #tpu.memory_space<vmem>>, %arg5: memref<32x32xf32, #tpu.memory_space<vmem>>, %arg6: memref<1x32xf32, #tpu.memory_space<vmem>>, %arg7: memref<1x32xf32, #tpu.memory_space<vmem>>, %arg8: memref<1x32xf32, #tpu.memory_space<vmem>>, %arg9: memref<1x32xf32, #tpu.memory_space<vmem>>, %arg10: memref<1x32xf32, #tpu.memory_space<vmem>>, %arg11: memref<32x64xf32, #tpu.memory_space<vmem>>, %arg12: memref<1x64xf32, #tpu.memory_space<vmem>>, %arg13: memref<64x32xf32, #tpu.memory_space<vmem>>, %arg14: memref<1x32xf32, #tpu.memory_space<vmem>>, %arg15: memref<1x32xf32, #tpu.memory_space<vmem>>, %arg16: memref<1x32xf32, #tpu.memory_space<vmem>>, %arg17: memref<8x8x32xf32, #tpu.memory_space<vmem>>, %arg18: memref<8x32xf32, #tpu.memory_space<vmem>>) attributes {dimension_semantics = [], scalar_prefetch = 0 : i64, scratch_operands = 0 : i64, tpu.core_type = #tpu.core_type<tc>} {
    %c0 = arith.constant 0 : index
    %c0_0 = arith.constant 0 : index
    %c0_1 = arith.constant 0 : index
    %0 = vector.load %arg0[%c0, %c0_0, %c0_1] : memref<8x8x32xf32, #tpu.memory_space<vmem>>, vector<8x8x32xf32>
    %1 = vector.shape_cast %0 : vector<8x8x32xf32> to vector<64x32xf32>
    %c0_2 = arith.constant 0 : index
    %c0_3 = arith.constant 0 : index
    %2 = vector.load %arg7[%c0_2, %c0_3] : memref<1x32xf32, #tpu.memory_space<vmem>>, vector<1x32xf32>
    %c0_4 = arith.constant 0 : index
    %c0_5 = arith.constant 0 : index
    %3 = vector.load %arg8[%c0_4, %c0_5] : memref<1x32xf32, #tpu.memory_space<vmem>>, vector<1x32xf32>
    %cst = arith.constant dense<0.000000e+00> : vector<64xf32>
    %4 = vector.multi_reduction <add>, %1, %cst [1] : vector<64x32xf32> to vector<64xf32>
    %5 = vector.shape_cast %4 : vector<64xf32> to vector<64x1xf32>
    %cst_6 = arith.constant 3.200000e+01 : f32
    %6 = vector.broadcast %cst_6 : f32 to vector<64x1xf32>
    %7 = arith.divf %5, %6 : vector<64x1xf32>
    %8 = vector.broadcast %7 : vector<64x1xf32> to vector<64x32xf32>
    %9 = arith.subf %1, %8 : vector<64x32xf32>
    %10 = arith.mulf %9, %9 : vector<64x32xf32>
    %cst_7 = arith.constant dense<0.000000e+00> : vector<64xf32>
    %11 = vector.multi_reduction <add>, %10, %cst_7 [1] : vector<64x32xf32> to vector<64xf32>
    %12 = vector.shape_cast %11 : vector<64xf32> to vector<64x1xf32>
    %cst_8 = arith.constant 3.200000e+01 : f32
    %13 = vector.broadcast %cst_8 : f32 to vector<64x1xf32>
    %14 = arith.divf %12, %13 : vector<64x1xf32>
    %15 = vector.broadcast %7 : vector<64x1xf32> to vector<64x32xf32>
    %16 = arith.subf %1, %15 : vector<64x32xf32>
    %cst_9 = arith.constant 9.99999996E-13 : f32
    %17 = vector.broadcast %cst_9 : f32 to vector<64x1xf32>
    %18 = arith.addf %14, %17 : vector<64x1xf32>
    %19 = math.rsqrt %18 : vector<64x1xf32>
    %20 = vector.broadcast %19 : vector<64x1xf32> to vector<64x32xf32>
    %21 = arith.mulf %16, %20 : vector<64x32xf32>
    %22 = vector.broadcast %2 : vector<1x32xf32> to vector<64x32xf32>
    %23 = arith.mulf %21, %22 : vector<64x32xf32>
    %24 = vector.broadcast %3 : vector<1x32xf32> to vector<64x32xf32>
    %25 = arith.addf %23, %24 : vector<64x32xf32>
    %c0_10 = arith.constant 0 : index
    %c0_11 = arith.constant 0 : index
    %26 = vector.load %arg3[%c0_10, %c0_11] : memref<32x96xf32, #tpu.memory_space<vmem>>, vector<32x96xf32>
    %cst_12 = arith.constant dense<0.000000e+00> : vector<64x96xf32>
    %27 = tpu.matmul %25, %26, %cst_12 {dimension_numbers = #tpu.dot_dimension_numbers<[1], [0], [0], [1], [0, 0, 1, 1], [], []>} : vector<64x32xf32>, vector<32x96xf32>, vector<64x96xf32> -> vector<64x96xf32>
    %c0_13 = arith.constant 0 : index
    %c0_14 = arith.constant 0 : index
    %28 = vector.load %arg4[%c0_13, %c0_14] : memref<1x96xf32, #tpu.memory_space<vmem>>, vector<1x96xf32>
    %29 = vector.broadcast %28 : vector<1x96xf32> to vector<64x96xf32>
    %30 = arith.addf %27, %29 : vector<64x96xf32>
    %31 = vector.extract_strided_slice %30 {offsets = [0, 0], sizes = [64, 32], strides = [1, 1]} : vector<64x96xf32> to vector<64x32xf32>
    %32 = vector.shape_cast %31 : vector<64x32xf32> to vector<8x8x32xf32>
    %33 = vector.extract_strided_slice %30 {offsets = [0, 32], sizes = [64, 32], strides = [1, 1]} : vector<64x96xf32> to vector<64x32xf32>
    %34 = vector.shape_cast %33 : vector<64x32xf32> to vector<8x8x32xf32>
    %35 = vector.extract_strided_slice %30 {offsets = [0, 64], sizes = [64, 32], strides = [1, 1]} : vector<64x96xf32> to vector<64x32xf32>
    %36 = vector.shape_cast %35 : vector<64x32xf32> to vector<8x8x32xf32>
    "tpu.trace_start"() <{level = 10 : i32, message = "nqd,nkd->nqk"}> : () -> ()
    %cst_15 = arith.constant dense<0.000000e+00> : vector<8x8x8xf32>
    %37 = tpu.matmul %32, %34, %cst_15 {dimension_numbers = #tpu.dot_dimension_numbers<[2], [2], [1], [1], [0, 0, 0, 1, 1, 1], [0], [0]>} : vector<8x8x32xf32>, vector<8x8x32xf32>, vector<8x8x8xf32> -> vector<8x8x8xf32>
    "tpu.trace_stop"() : () -> ()
    %cst_16 = arith.constant 0.176776692 : f32
    %38 = vector.broadcast %cst_16 : f32 to vector<8x8x8xf32>
    %39 = arith.mulf %37, %38 : vector<8x8x8xf32>
    %c0_17 = arith.constant 0 : index
    %c0_18 = arith.constant 0 : index
    %c0_19 = arith.constant 0 : index
    %40 = vector.load %arg1[%c0_17, %c0_18, %c0_19] : memref<8x1x8xf32, #tpu.memory_space<vmem>>, vector<8x1x8xf32>
    %41 = vector.broadcast %40 : vector<8x1x8xf32> to vector<8x8x8xf32>
    %42 = arith.addf %39, %41 : vector<8x8x8xf32>
    %cst_20 = arith.constant dense<0xFF800000> : vector<8x8xf32>
    %43 = vector.multi_reduction <maximumf>, %42, %cst_20 [2] : vector<8x8x8xf32> to vector<8x8xf32>
    %44 = vector.shape_cast %43 : vector<8x8xf32> to vector<8x8x1xf32>
    %45 = vector.broadcast %44 : vector<8x8x1xf32> to vector<8x8x8xf32>
    %46 = arith.subf %42, %45 : vector<8x8x8xf32>
    %47 = math.exp %46 : vector<8x8x8xf32>
    %cst_21 = arith.constant dense<0.000000e+00> : vector<8x8xf32>
    %48 = vector.multi_reduction <add>, %47, %cst_21 [2] : vector<8x8x8xf32> to vector<8x8xf32>
    %49 = vector.shape_cast %48 : vector<8x8xf32> to vector<8x8x1xf32>
    %50 = tpu.reciprocal %49 {approx = true} : vector<8x8x1xf32> -> vector<8x8x1xf32>
    %51 = vector.broadcast %50 : vector<8x8x1xf32> to vector<8x8x8xf32>
    %52 = arith.mulf %47, %51 : vector<8x8x8xf32>
    "tpu.trace_start"() <{level = 10 : i32, message = "nqk,nkd->nqd"}> : () -> ()
    %cst_22 = arith.constant dense<0.000000e+00> : vector<8x8x32xf32>
    %53 = tpu.matmul %52, %36, %cst_22 {dimension_numbers = #tpu.dot_dimension_numbers<[2], [1], [1], [2], [0, 0, 0, 1, 1, 2], [0], [0]>} : vector<8x8x8xf32>, vector<8x8x32xf32>, vector<8x8x32xf32> -> vector<8x8x32xf32>
    "tpu.trace_stop"() : () -> ()
    %54 = vector.shape_cast %53 : vector<8x8x32xf32> to vector<64x32xf32>
    %c0_23 = arith.constant 0 : index
    %c0_24 = arith.constant 0 : index
    %55 = vector.load %arg5[%c0_23, %c0_24] : memref<32x32xf32, #tpu.memory_space<vmem>>, vector<32x32xf32>
    %cst_25 = arith.constant dense<0.000000e+00> : vector<64x32xf32>
    %56 = tpu.matmul %54, %55, %cst_25 {dimension_numbers = #tpu.dot_dimension_numbers<[1], [0], [0], [1], [0, 0, 1, 1], [], []>} : vector<64x32xf32>, vector<32x32xf32>, vector<64x32xf32> -> vector<64x32xf32>
    %c0_26 = arith.constant 0 : index
    %c0_27 = arith.constant 0 : index
    %57 = vector.load %arg6[%c0_26, %c0_27] : memref<1x32xf32, #tpu.memory_space<vmem>>, vector<1x32xf32>
    %58 = vector.broadcast %57 : vector<1x32xf32> to vector<64x32xf32>
    %59 = arith.addf %56, %58 : vector<64x32xf32>
    %60 = arith.addf %25, %59 : vector<64x32xf32>
    %c0_28 = arith.constant 0 : index
    %c0_29 = arith.constant 0 : index
    %61 = vector.load %arg9[%c0_28, %c0_29] : memref<1x32xf32, #tpu.memory_space<vmem>>, vector<1x32xf32>
    %c0_30 = arith.constant 0 : index
    %c0_31 = arith.constant 0 : index
    %62 = vector.load %arg10[%c0_30, %c0_31] : memref<1x32xf32, #tpu.memory_space<vmem>>, vector<1x32xf32>
    %cst_32 = arith.constant dense<0.000000e+00> : vector<64xf32>
    %63 = vector.multi_reduction <add>, %60, %cst_32 [1] : vector<64x32xf32> to vector<64xf32>
    %64 = vector.shape_cast %63 : vector<64xf32> to vector<64x1xf32>
    %cst_33 = arith.constant 3.200000e+01 : f32
    %65 = vector.broadcast %cst_33 : f32 to vector<64x1xf32>
    %66 = arith.divf %64, %65 : vector<64x1xf32>
    %67 = vector.broadcast %66 : vector<64x1xf32> to vector<64x32xf32>
    %68 = arith.subf %60, %67 : vector<64x32xf32>
    %69 = arith.mulf %68, %68 : vector<64x32xf32>
    %cst_34 = arith.constant dense<0.000000e+00> : vector<64xf32>
    %70 = vector.multi_reduction <add>, %69, %cst_34 [1] : vector<64x32xf32> to vector<64xf32>
    %71 = vector.shape_cast %70 : vector<64xf32> to vector<64x1xf32>
    %cst_35 = arith.constant 3.200000e+01 : f32
    %72 = vector.broadcast %cst_35 : f32 to vector<64x1xf32>
    %73 = arith.divf %71, %72 : vector<64x1xf32>
    %74 = vector.broadcast %66 : vector<64x1xf32> to vector<64x32xf32>
    %75 = arith.subf %60, %74 : vector<64x32xf32>
    %cst_36 = arith.constant 9.99999996E-13 : f32
    %76 = vector.broadcast %cst_36 : f32 to vector<64x1xf32>
    %77 = arith.addf %73, %76 : vector<64x1xf32>
    %78 = math.rsqrt %77 : vector<64x1xf32>
    %79 = vector.broadcast %78 : vector<64x1xf32> to vector<64x32xf32>
    %80 = arith.mulf %75, %79 : vector<64x32xf32>
    %81 = vector.broadcast %61 : vector<1x32xf32> to vector<64x32xf32>
    %82 = arith.mulf %80, %81 : vector<64x32xf32>
    %83 = vector.broadcast %62 : vector<1x32xf32> to vector<64x32xf32>
    %84 = arith.addf %82, %83 : vector<64x32xf32>
    %c0_37 = arith.constant 0 : index
    %c0_38 = arith.constant 0 : index
    %85 = vector.load %arg11[%c0_37, %c0_38] : memref<32x64xf32, #tpu.memory_space<vmem>>, vector<32x64xf32>
    %cst_39 = arith.constant dense<0.000000e+00> : vector<64x64xf32>
    %86 = tpu.matmul %84, %85, %cst_39 {dimension_numbers = #tpu.dot_dimension_numbers<[1], [0], [0], [1], [0, 0, 1, 1], [], []>} : vector<64x32xf32>, vector<32x64xf32>, vector<64x64xf32> -> vector<64x64xf32>
    %c0_40 = arith.constant 0 : index
    %c0_41 = arith.constant 0 : index
    %87 = vector.load %arg12[%c0_40, %c0_41] : memref<1x64xf32, #tpu.memory_space<vmem>>, vector<1x64xf32>
    %88 = vector.broadcast %87 : vector<1x64xf32> to vector<64x64xf32>
    %89 = arith.addf %86, %88 : vector<64x64xf32>
    %cst_42 = arith.constant 5.000000e-01 : f32
    %90 = vector.broadcast %cst_42 : f32 to vector<64x64xf32>
    %91 = arith.mulf %90, %89 : vector<64x64xf32>
    %cst_43 = arith.constant 4.471500e-02 : f32
    %92 = vector.broadcast %cst_43 : f32 to vector<64x64xf32>
    %93 = arith.mulf %92, %89 : vector<64x64xf32>
    %94 = arith.mulf %93, %89 : vector<64x64xf32>
    %95 = arith.mulf %94, %89 : vector<64x64xf32>
    %96 = arith.addf %89, %95 : vector<64x64xf32>
    %cst_44 = arith.constant 0.797884583 : f32
    %97 = vector.broadcast %cst_44 : f32 to vector<64x64xf32>
    %98 = arith.mulf %97, %96 : vector<64x64xf32>
    %99 = math.tanh %98 : vector<64x64xf32>
    %cst_45 = arith.constant 1.000000e+00 : f32
    %100 = vector.broadcast %cst_45 : f32 to vector<64x64xf32>
    %101 = arith.addf %100, %99 : vector<64x64xf32>
    %102 = arith.mulf %91, %101 : vector<64x64xf32>
    %c0_46 = arith.constant 0 : index
    %c0_47 = arith.constant 0 : index
    %103 = vector.load %arg13[%c0_46, %c0_47] : memref<64x32xf32, #tpu.memory_space<vmem>>, vector<64x32xf32>
    %cst_48 = arith.constant dense<0.000000e+00> : vector<64x32xf32>
    %104 = tpu.matmul %102, %103, %cst_48 {dimension_numbers = #tpu.dot_dimension_numbers<[1], [0], [0], [1], [0, 0, 1, 1], [], []>} : vector<64x64xf32>, vector<64x32xf32>, vector<64x32xf32> -> vector<64x32xf32>
    %c0_49 = arith.constant 0 : index
    %c0_50 = arith.constant 0 : index
    %105 = vector.load %arg14[%c0_49, %c0_50] : memref<1x32xf32, #tpu.memory_space<vmem>>, vector<1x32xf32>
    %106 = vector.broadcast %105 : vector<1x32xf32> to vector<64x32xf32>
    %107 = arith.addf %104, %106 : vector<64x32xf32>
    %108 = arith.addf %84, %107 : vector<64x32xf32>
    %c0_51 = arith.constant 0 : index
    %c0_52 = arith.constant 0 : index
    %109 = vector.load %arg15[%c0_51, %c0_52] : memref<1x32xf32, #tpu.memory_space<vmem>>, vector<1x32xf32>
    %c0_53 = arith.constant 0 : index
    %c0_54 = arith.constant 0 : index
    %110 = vector.load %arg16[%c0_53, %c0_54] : memref<1x32xf32, #tpu.memory_space<vmem>>, vector<1x32xf32>
    %cst_55 = arith.constant dense<0.000000e+00> : vector<64xf32>
    %111 = vector.multi_reduction <add>, %108, %cst_55 [1] : vector<64x32xf32> to vector<64xf32>
    %112 = vector.shape_cast %111 : vector<64xf32> to vector<64x1xf32>
    %cst_56 = arith.constant 3.200000e+01 : f32
    %113 = vector.broadcast %cst_56 : f32 to vector<64x1xf32>
    %114 = arith.divf %112, %113 : vector<64x1xf32>
    %115 = vector.broadcast %114 : vector<64x1xf32> to vector<64x32xf32>
    %116 = arith.subf %108, %115 : vector<64x32xf32>
    %117 = arith.mulf %116, %116 : vector<64x32xf32>
    %cst_57 = arith.constant dense<0.000000e+00> : vector<64xf32>
    %118 = vector.multi_reduction <add>, %117, %cst_57 [1] : vector<64x32xf32> to vector<64xf32>
    %119 = vector.shape_cast %118 : vector<64xf32> to vector<64x1xf32>
    %cst_58 = arith.constant 3.200000e+01 : f32
    %120 = vector.broadcast %cst_58 : f32 to vector<64x1xf32>
    %121 = arith.divf %119, %120 : vector<64x1xf32>
    %122 = vector.broadcast %114 : vector<64x1xf32> to vector<64x32xf32>
    %123 = arith.subf %108, %122 : vector<64x32xf32>
    %cst_59 = arith.constant 9.99999996E-13 : f32
    %124 = vector.broadcast %cst_59 : f32 to vector<64x1xf32>
    %125 = arith.addf %121, %124 : vector<64x1xf32>
    %126 = math.rsqrt %125 : vector<64x1xf32>
    %127 = vector.broadcast %126 : vector<64x1xf32> to vector<64x32xf32>
    %128 = arith.mulf %123, %127 : vector<64x32xf32>
    %129 = vector.broadcast %109 : vector<1x32xf32> to vector<64x32xf32>
    %130 = arith.mulf %128, %129 : vector<64x32xf32>
    %131 = vector.broadcast %110 : vector<1x32xf32> to vector<64x32xf32>
    %132 = arith.addf %130, %131 : vector<64x32xf32>
    %133 = vector.shape_cast %132 : vector<64x32xf32> to vector<8x8x32xf32>
    %c0_60 = arith.constant 0 : index
    %c0_61 = arith.constant 0 : index
    %c0_62 = arith.constant 0 : index
    %134 = vector.load %arg17[%c0_60, %c0_61, %c0_62] : memref<8x8x32xf32, #tpu.memory_space<vmem>>, vector<8x8x32xf32>
    tpu.vector_store %arg17[%c0_60, %c0_61, %c0_62], %133 {strides = array<i32>} : memref<8x8x32xf32, #tpu.memory_space<vmem>>, vector<8x8x32xf32>,
    %c0_63 = arith.constant 0 : index
    %c0_64 = arith.constant 0 : index
    %c0_65 = arith.constant 0 : index
    %135 = vector.load %arg2[%c0_63, %c0_64, %c0_65] : memref<8x8x1xf32, #tpu.memory_space<vmem>>, vector<8x8x1xf32>
    %136 = vector.broadcast %135 : vector<8x8x1xf32> to vector<8x8x32xf32>
    %137 = arith.mulf %133, %136 : vector<8x8x32xf32>
    %cst_66 = arith.constant dense<0.000000e+00> : vector<8x32xf32>
    %138 = vector.multi_reduction <add>, %137, %cst_66 [1] : vector<8x8x32xf32> to vector<8x32xf32>
    %cst_67 = arith.constant dense<0.000000e+00> : vector<8x1xf32>
    %139 = vector.multi_reduction <add>, %135, %cst_67 [1] : vector<8x8x1xf32> to vector<8x1xf32>
    %cst_68 = arith.constant 1.000000e+00 : f32
    %140 = vector.broadcast %cst_68 : f32 to vector<8x1xf32>
    %141 = arith.maximumf %139, %140 : vector<8x1xf32>
    %142 = vector.broadcast %141 : vector<8x1xf32> to vector<8x32xf32>
    %143 = arith.divf %138, %142 : vector<8x32xf32>
    %c0_69 = arith.constant 0 : index
    %c0_70 = arith.constant 0 : index
    %144 = vector.load %arg18[%c0_69, %c0_70] : memref<8x32xf32, #tpu.memory_space<vmem>>, vector<8x32xf32>
    tpu.vector_store %arg18[%c0_69, %c0_70], %143 {strides = array<i32>} : memref<8x32xf32, #tpu.memory_space<vmem>>, vector<8x32xf32>,
    return
  }
}

module attributes {stable_mosaic.version = 11 : i64} {
  func.func @attention_kernel(%arg0: memref<1x10x32xf32, #tpu.memory_space<vmem>>, %arg1: memref<1x10x1xf32, #tpu.memory_space<vmem>>, %arg2: memref<2x17x32xf32, #tpu.memory_space<vmem>>, %arg3: memref<2x17x1xf32, #tpu.memory_space<vmem>>, %arg4: memref<32x32xf32, #tpu.memory_space<vmem>>, %arg5: memref<1x32xf32, #tpu.memory_space<vmem>>, %arg6: memref<1x32xf32, #tpu.memory_space<vmem>>, %arg7: memref<1x1xf32, #tpu.memory_space<vmem>>, %arg8: memref<32x32xf32, #tpu.memory_space<vmem>>, %arg9: memref<1x32xf32, #tpu.memory_space<vmem>>, %arg10: memref<32x32xf32, #tpu.memory_space<vmem>>, %arg11: memref<1x32xf32, #tpu.memory_space<vmem>>, %arg12: memref<1x32xf32, #tpu.memory_space<vmem>>, %arg13: memref<1x1xf32, #tpu.memory_space<vmem>>, %arg14: memref<2x32xf32, #tpu.memory_space<vmem>>) attributes {dimension_semantics = [], scalar_prefetch = 0 : i64, scratch_operands = 0 : i64, tpu.core_type = #tpu.core_type<tc>} {
    %cst = arith.constant 0.000000e+00 : f32
    %0 = vector.broadcast %cst : f32 to vector<1x32xf32>
    %c0 = arith.constant 0 : index
    %c0_0 = arith.constant 0 : index
    %c0_1 = arith.constant 0 : index
    %1 = vector.load %arg0[%c0, %c0_0, %c0_1] : memref<1x10x32xf32, #tpu.memory_space<vmem>>, vector<1x10x32xf32>
    %2 = vector.shape_cast %1 : vector<1x10x32xf32> to vector<10x32xf32>
    %c0_2 = arith.constant 0 : index
    %c0_3 = arith.constant 0 : index
    %c0_4 = arith.constant 0 : index
    %3 = vector.load %arg1[%c0_2, %c0_3, %c0_4] : memref<1x10x1xf32, #tpu.memory_space<vmem>>, vector<1x10x1xf32>
    %4 = vector.shape_cast %3 : vector<1x10x1xf32> to vector<10x1xf32>
    %c0_5 = arith.constant 0 : index
    %c0_6 = arith.constant 0 : index
    %5 = vector.load %arg4[%c0_5, %c0_6] : memref<32x32xf32, #tpu.memory_space<vmem>>, vector<32x32xf32>
    %c0_7 = arith.constant 0 : index
    %c0_8 = arith.constant 0 : index
    %6 = vector.load %arg5[%c0_7, %c0_8] : memref<1x32xf32, #tpu.memory_space<vmem>>, vector<1x32xf32>
    %c0_9 = arith.constant 0 : index
    %c0_10 = arith.constant 0 : index
    %7 = vector.load %arg6[%c0_9, %c0_10] : memref<1x32xf32, #tpu.memory_space<vmem>>, vector<1x32xf32>
    %c0_11 = arith.constant 0 : index
    %c0_12 = arith.constant 0 : index
    %8 = vector.load %arg7[%c0_11, %c0_12] : memref<1x1xf32, #tpu.memory_space<vmem>>, vector<1x1xf32>
    %cst_13 = arith.constant dense<0.000000e+00> : vector<10x32xf32>
    %9 = tpu.matmul %2, %5, %cst_13 {dimension_numbers = #tpu.dot_dimension_numbers<[1], [0], [0], [1], [0, 0, 1, 1], [], []>} : vector<10x32xf32>, vector<32x32xf32>, vector<10x32xf32> -> vector<10x32xf32>
    %10 = vector.broadcast %6 : vector<1x32xf32> to vector<10x32xf32>
    %11 = arith.addf %9, %10 : vector<10x32xf32>
    %12 = vector.broadcast %0 : vector<1x32xf32> to vector<10x32xf32>
    %13 = arith.addf %11, %12 : vector<10x32xf32>
    %14 = math.tanh %13 : vector<10x32xf32>
    %15 = vector.broadcast %7 : vector<1x32xf32> to vector<10x32xf32>
    %16 = arith.mulf %14, %15 : vector<10x32xf32>
    %cst_14 = arith.constant dense<0.000000e+00> : vector<10xf32>
    %17 = vector.multi_reduction <add>, %16, %cst_14 [1] : vector<10x32xf32> to vector<10xf32>
    %18 = vector.shape_cast %17 : vector<10xf32> to vector<10x1xf32>
    %19 = vector.broadcast %8 : vector<1x1xf32> to vector<10x1xf32>
    %20 = arith.addf %18, %19 : vector<10x1xf32>
    %cst_15 = arith.constant 5.000000e-01 : f32
    %21 = vector.broadcast %cst_15 : f32 to vector<10x1xf32>
    %22 = arith.cmpf ogt, %4, %21 : vector<10x1xf32>
    %cst_16 = arith.constant -1.000000e+30 : f32
    %23 = vector.broadcast %cst_16 : f32 to vector<10x1xf32>
    %24 = arith.select %22, %20, %23 : vector<10x1xi1>, vector<10x1xf32>
    %cst_17 = arith.constant dense<0xFF800000> : vector<1xf32>
    %25 = vector.multi_reduction <maximumf>, %24, %cst_17 [0] : vector<10x1xf32> to vector<1xf32>
    %26 = vector.shape_cast %25 : vector<1xf32> to vector<1x1xf32>
    %27 = vector.broadcast %26 : vector<1x1xf32> to vector<10x1xf32>
    %28 = arith.subf %24, %27 : vector<10x1xf32>
    %29 = math.exp %28 : vector<10x1xf32>
    %cst_18 = arith.constant dense<0.000000e+00> : vector<1xf32>
    %30 = vector.multi_reduction <add>, %29, %cst_18 [0] : vector<10x1xf32> to vector<1xf32>
    %31 = vector.shape_cast %30 : vector<1xf32> to vector<1x1xf32>
    %32 = tpu.reciprocal %31 {approx = true} : vector<1x1xf32> -> vector<1x1xf32>
    %33 = vector.broadcast %32 : vector<1x1xf32> to vector<10x1xf32>
    %34 = arith.mulf %29, %33 : vector<10x1xf32>
    %35 = vector.broadcast %34 : vector<10x1xf32> to vector<10x32xf32>
    %36 = arith.mulf %35, %2 : vector<10x32xf32>
    %cst_19 = arith.constant dense<0.000000e+00> : vector<32xf32>
    %37 = vector.multi_reduction <add>, %36, %cst_19 [0] : vector<10x32xf32> to vector<32xf32>
    %38 = vector.shape_cast %37 : vector<32xf32> to vector<1x32xf32>
    %c0_20 = arith.constant 0 : index
    %c0_21 = arith.constant 0 : index
    %39 = vector.load %arg10[%c0_20, %c0_21] : memref<32x32xf32, #tpu.memory_space<vmem>>, vector<32x32xf32>
    %cst_22 = arith.constant dense<0.000000e+00> : vector<1x32xf32>
    %40 = tpu.matmul %38, %39, %cst_22 {dimension_numbers = #tpu.dot_dimension_numbers<[1], [0], [0], [1], [0, 0, 1, 1], [], []>} : vector<1x32xf32>, vector<32x32xf32>, vector<1x32xf32> -> vector<1x32xf32>
    %c0_23 = arith.constant 0 : index
    %c0_24 = arith.constant 0 : index
    %41 = vector.load %arg11[%c0_23, %c0_24] : memref<1x32xf32, #tpu.memory_space<vmem>>, vector<1x32xf32>
    %42 = arith.addf %40, %41 : vector<1x32xf32>
    %c0_25 = arith.constant 0 : index
    %c0_26 = arith.constant 0 : index
    %c0_27 = arith.constant 0 : index
    %43 = vector.load %arg2[%c0_25, %c0_26, %c0_27] : memref<2x17x32xf32, #tpu.memory_space<vmem>>, vector<1x17x32xf32>
    %44 = vector.shape_cast %43 : vector<1x17x32xf32> to vector<17x32xf32>
    %c0_28 = arith.constant 0 : index
    %c0_29 = arith.constant 0 : index
    %c0_30 = arith.constant 0 : index
    %45 = vector.load %arg3[%c0_28, %c0_29, %c0_30] : memref<2x17x1xf32, #tpu.memory_space<vmem>>, vector<1x17x1xf32>
    %46 = vector.shape_cast %45 : vector<1x17x1xf32> to vector<17x1xf32>
    %c0_31 = arith.constant 0 : index
    %c0_32 = arith.constant 0 : index
    %47 = vector.load %arg8[%c0_31, %c0_32] : memref<32x32xf32, #tpu.memory_space<vmem>>, vector<32x32xf32>
    %c0_33 = arith.constant 0 : index
    %c0_34 = arith.constant 0 : index
    %48 = vector.load %arg9[%c0_33, %c0_34] : memref<1x32xf32, #tpu.memory_space<vmem>>, vector<1x32xf32>
    %c0_35 = arith.constant 0 : index
    %c0_36 = arith.constant 0 : index
    %49 = vector.load %arg12[%c0_35, %c0_36] : memref<1x32xf32, #tpu.memory_space<vmem>>, vector<1x32xf32>
    %c0_37 = arith.constant 0 : index
    %c0_38 = arith.constant 0 : index
    %50 = vector.load %arg13[%c0_37, %c0_38] : memref<1x1xf32, #tpu.memory_space<vmem>>, vector<1x1xf32>
    %cst_39 = arith.constant dense<0.000000e+00> : vector<17x32xf32>
    %51 = tpu.matmul %44, %47, %cst_39 {dimension_numbers = #tpu.dot_dimension_numbers<[1], [0], [0], [1], [0, 0, 1, 1], [], []>} : vector<17x32xf32>, vector<32x32xf32>, vector<17x32xf32> -> vector<17x32xf32>
    %52 = vector.broadcast %48 : vector<1x32xf32> to vector<17x32xf32>
    %53 = arith.addf %51, %52 : vector<17x32xf32>
    %54 = vector.broadcast %42 : vector<1x32xf32> to vector<17x32xf32>
    %55 = arith.addf %53, %54 : vector<17x32xf32>
    %56 = math.tanh %55 : vector<17x32xf32>
    %57 = vector.broadcast %49 : vector<1x32xf32> to vector<17x32xf32>
    %58 = arith.mulf %56, %57 : vector<17x32xf32>
    %cst_40 = arith.constant dense<0.000000e+00> : vector<17xf32>
    %59 = vector.multi_reduction <add>, %58, %cst_40 [1] : vector<17x32xf32> to vector<17xf32>
    %60 = vector.shape_cast %59 : vector<17xf32> to vector<17x1xf32>
    %61 = vector.broadcast %50 : vector<1x1xf32> to vector<17x1xf32>
    %62 = arith.addf %60, %61 : vector<17x1xf32>
    %cst_41 = arith.constant 5.000000e-01 : f32
    %63 = vector.broadcast %cst_41 : f32 to vector<17x1xf32>
    %64 = arith.cmpf ogt, %46, %63 : vector<17x1xf32>
    %cst_42 = arith.constant -1.000000e+30 : f32
    %65 = vector.broadcast %cst_42 : f32 to vector<17x1xf32>
    %66 = arith.select %64, %62, %65 : vector<17x1xi1>, vector<17x1xf32>
    %cst_43 = arith.constant dense<0xFF800000> : vector<1xf32>
    %67 = vector.multi_reduction <maximumf>, %66, %cst_43 [0] : vector<17x1xf32> to vector<1xf32>
    %68 = vector.shape_cast %67 : vector<1xf32> to vector<1x1xf32>
    %69 = vector.broadcast %68 : vector<1x1xf32> to vector<17x1xf32>
    %70 = arith.subf %66, %69 : vector<17x1xf32>
    %71 = math.exp %70 : vector<17x1xf32>
    %cst_44 = arith.constant dense<0.000000e+00> : vector<1xf32>
    %72 = vector.multi_reduction <add>, %71, %cst_44 [0] : vector<17x1xf32> to vector<1xf32>
    %73 = vector.shape_cast %72 : vector<1xf32> to vector<1x1xf32>
    %74 = tpu.reciprocal %73 {approx = true} : vector<1x1xf32> -> vector<1x1xf32>
    %75 = vector.broadcast %74 : vector<1x1xf32> to vector<17x1xf32>
    %76 = arith.mulf %71, %75 : vector<17x1xf32>
    %77 = vector.broadcast %76 : vector<17x1xf32> to vector<17x32xf32>
    %78 = arith.mulf %77, %44 : vector<17x32xf32>
    %cst_45 = arith.constant dense<0.000000e+00> : vector<32xf32>
    %79 = vector.multi_reduction <add>, %78, %cst_45 [0] : vector<17x32xf32> to vector<32xf32>
    %80 = vector.shape_cast %79 : vector<32xf32> to vector<1x32xf32>
    %c0_46 = arith.constant 0 : index
    %c0_47 = arith.constant 0 : index
    %81 = vector.load %arg14[%c0_46, %c0_47] : memref<2x32xf32, #tpu.memory_space<vmem>>, vector<1x32xf32>
    tpu.vector_store %arg14[%c0_46, %c0_47], %80 {strides = array<i32>} : memref<2x32xf32, #tpu.memory_space<vmem>>, vector<1x32xf32>,
    %c1 = arith.constant 1 : index
    %c0_48 = arith.constant 0 : index
    %c0_49 = arith.constant 0 : index
    %82 = vector.load %arg2[%c1, %c0_48, %c0_49] : memref<2x17x32xf32, #tpu.memory_space<vmem>>, vector<1x17x32xf32>
    %83 = vector.shape_cast %82 : vector<1x17x32xf32> to vector<17x32xf32>
    %c1_50 = arith.constant 1 : index
    %c0_51 = arith.constant 0 : index
    %c0_52 = arith.constant 0 : index
    %84 = vector.load %arg3[%c1_50, %c0_51, %c0_52] : memref<2x17x1xf32, #tpu.memory_space<vmem>>, vector<1x17x1xf32>
    %85 = vector.shape_cast %84 : vector<1x17x1xf32> to vector<17x1xf32>
    %c0_53 = arith.constant 0 : index
    %c0_54 = arith.constant 0 : index
    %86 = vector.load %arg8[%c0_53, %c0_54] : memref<32x32xf32, #tpu.memory_space<vmem>>, vector<32x32xf32>
    %c0_55 = arith.constant 0 : index
    %c0_56 = arith.constant 0 : index
    %87 = vector.load %arg9[%c0_55, %c0_56] : memref<1x32xf32, #tpu.memory_space<vmem>>, vector<1x32xf32>
    %c0_57 = arith.constant 0 : index
    %c0_58 = arith.constant 0 : index
    %88 = vector.load %arg12[%c0_57, %c0_58] : memref<1x32xf32, #tpu.memory_space<vmem>>, vector<1x32xf32>
    %c0_59 = arith.constant 0 : index
    %c0_60 = arith.constant 0 : index
    %89 = vector.load %arg13[%c0_59, %c0_60] : memref<1x1xf32, #tpu.memory_space<vmem>>, vector<1x1xf32>
    %cst_61 = arith.constant dense<0.000000e+00> : vector<17x32xf32>
    %90 = tpu.matmul %83, %86, %cst_61 {dimension_numbers = #tpu.dot_dimension_numbers<[1], [0], [0], [1], [0, 0, 1, 1], [], []>} : vector<17x32xf32>, vector<32x32xf32>, vector<17x32xf32> -> vector<17x32xf32>
    %91 = vector.broadcast %87 : vector<1x32xf32> to vector<17x32xf32>
    %92 = arith.addf %90, %91 : vector<17x32xf32>
    %93 = vector.broadcast %42 : vector<1x32xf32> to vector<17x32xf32>
    %94 = arith.addf %92, %93 : vector<17x32xf32>
    %95 = math.tanh %94 : vector<17x32xf32>
    %96 = vector.broadcast %88 : vector<1x32xf32> to vector<17x32xf32>
    %97 = arith.mulf %95, %96 : vector<17x32xf32>
    %cst_62 = arith.constant dense<0.000000e+00> : vector<17xf32>
    %98 = vector.multi_reduction <add>, %97, %cst_62 [1] : vector<17x32xf32> to vector<17xf32>
    %99 = vector.shape_cast %98 : vector<17xf32> to vector<17x1xf32>
    %100 = vector.broadcast %89 : vector<1x1xf32> to vector<17x1xf32>
    %101 = arith.addf %99, %100 : vector<17x1xf32>
    %cst_63 = arith.constant 5.000000e-01 : f32
    %102 = vector.broadcast %cst_63 : f32 to vector<17x1xf32>
    %103 = arith.cmpf ogt, %85, %102 : vector<17x1xf32>
    %cst_64 = arith.constant -1.000000e+30 : f32
    %104 = vector.broadcast %cst_64 : f32 to vector<17x1xf32>
    %105 = arith.select %103, %101, %104 : vector<17x1xi1>, vector<17x1xf32>
    %cst_65 = arith.constant dense<0xFF800000> : vector<1xf32>
    %106 = vector.multi_reduction <maximumf>, %105, %cst_65 [0] : vector<17x1xf32> to vector<1xf32>
    %107 = vector.shape_cast %106 : vector<1xf32> to vector<1x1xf32>
    %108 = vector.broadcast %107 : vector<1x1xf32> to vector<17x1xf32>
    %109 = arith.subf %105, %108 : vector<17x1xf32>
    %110 = math.exp %109 : vector<17x1xf32>
    %cst_66 = arith.constant dense<0.000000e+00> : vector<1xf32>
    %111 = vector.multi_reduction <add>, %110, %cst_66 [0] : vector<17x1xf32> to vector<1xf32>
    %112 = vector.shape_cast %111 : vector<1xf32> to vector<1x1xf32>
    %113 = tpu.reciprocal %112 {approx = true} : vector<1x1xf32> -> vector<1x1xf32>
    %114 = vector.broadcast %113 : vector<1x1xf32> to vector<17x1xf32>
    %115 = arith.mulf %110, %114 : vector<17x1xf32>
    %116 = vector.broadcast %115 : vector<17x1xf32> to vector<17x32xf32>
    %117 = arith.mulf %116, %83 : vector<17x32xf32>
    %cst_67 = arith.constant dense<0.000000e+00> : vector<32xf32>
    %118 = vector.multi_reduction <add>, %117, %cst_67 [0] : vector<17x32xf32> to vector<32xf32>
    %119 = vector.shape_cast %118 : vector<32xf32> to vector<1x32xf32>
    %c1_68 = arith.constant 1 : index
    %c0_69 = arith.constant 0 : index
    %120 = vector.load %arg14[%c1_68, %c0_69] : memref<2x32xf32, #tpu.memory_space<vmem>>, vector<1x32xf32>
    tpu.vector_store %arg14[%c1_68, %c0_69], %119 {strides = array<i32>} : memref<2x32xf32, #tpu.memory_space<vmem>>, vector<1x32xf32>,
    return
  }
}

module attributes {stable_mosaic.version = 11 : i64} {
  func.func @lstm_kernel(%arg0: memref<2x3x32xf32, #tpu.memory_space<vmem>>, %arg1: memref<2x1xf32, #tpu.memory_space<vmem>>, %arg2: memref<32x64xf32, #tpu.memory_space<vmem>>, %arg3: memref<16x64xf32, #tpu.memory_space<vmem>>, %arg4: memref<1x64xf32, #tpu.memory_space<vmem>>, %arg5: memref<32x64xf32, #tpu.memory_space<vmem>>, %arg6: memref<16x64xf32, #tpu.memory_space<vmem>>, %arg7: memref<1x64xf32, #tpu.memory_space<vmem>>, %arg8: memref<2x32xf32, #tpu.memory_space<vmem>>) attributes {dimension_semantics = [], scalar_prefetch = 0 : i64, scratch_operands = 0 : i64, tpu.core_type = #tpu.core_type<tc>} {
    %c0 = arith.constant 0 : index
    %c0_0 = arith.constant 0 : index
    %c0_1 = arith.constant 0 : index
    %0 = vector.load %arg0[%c0, %c0_0, %c0_1] : memref<2x3x32xf32, #tpu.memory_space<vmem>>, vector<2x3x32xf32>
    %c0_2 = arith.constant 0 : index
    %c0_3 = arith.constant 0 : index
    %1 = vector.load %arg1[%c0_2, %c0_3] : memref<2x1xf32, #tpu.memory_space<vmem>>, vector<2x1xf32>
    %c0_4 = arith.constant 0 : index
    %c0_5 = arith.constant 0 : index
    %2 = vector.load %arg2[%c0_4, %c0_5] : memref<32x64xf32, #tpu.memory_space<vmem>>, vector<32x64xf32>
    %c0_6 = arith.constant 0 : index
    %c0_7 = arith.constant 0 : index
    %3 = vector.load %arg3[%c0_6, %c0_7] : memref<16x64xf32, #tpu.memory_space<vmem>>, vector<16x64xf32>
    %c0_8 = arith.constant 0 : index
    %c0_9 = arith.constant 0 : index
    %4 = vector.load %arg4[%c0_8, %c0_9] : memref<1x64xf32, #tpu.memory_space<vmem>>, vector<1x64xf32>
    %c0_10 = arith.constant 0 : index
    %c0_11 = arith.constant 0 : index
    %5 = vector.load %arg5[%c0_10, %c0_11] : memref<32x64xf32, #tpu.memory_space<vmem>>, vector<32x64xf32>
    %c0_12 = arith.constant 0 : index
    %c0_13 = arith.constant 0 : index
    %6 = vector.load %arg6[%c0_12, %c0_13] : memref<16x64xf32, #tpu.memory_space<vmem>>, vector<16x64xf32>
    %c0_14 = arith.constant 0 : index
    %c0_15 = arith.constant 0 : index
    %7 = vector.load %arg7[%c0_14, %c0_15] : memref<1x64xf32, #tpu.memory_space<vmem>>, vector<1x64xf32>
    %cst = arith.constant 0.000000e+00 : f32
    %8 = vector.broadcast %cst : f32 to vector<2x16xf32>
    %cst_16 = arith.constant 0.000000e+00 : f32
    %9 = vector.broadcast %cst_16 : f32 to vector<2x16xf32>
    %cst_17 = arith.constant 0.000000e+00 : f32
    %10 = vector.broadcast %cst_17 : f32 to vector<2x16xf32>
    %cst_18 = arith.constant 0.000000e+00 : f32
    %11 = vector.broadcast %cst_18 : f32 to vector<2x16xf32>
    %cst_19 = arith.constant 0.000000e+00 : f32
    %12 = vector.broadcast %cst_19 : f32 to vector<2x1xf32>
    %13 = arith.cmpf ogt, %1, %12 : vector<2x1xf32>
    %cst_20 = arith.constant 2.000000e+00 : f32
    %14 = vector.broadcast %cst_20 : f32 to vector<2x1xf32>
    %15 = arith.cmpf ogt, %1, %14 : vector<2x1xf32>
    %16 = vector.extract_strided_slice %0 {offsets = [0, 0, 0], sizes = [2, 1, 32], strides = [1, 1, 1]} : vector<2x3x32xf32> to vector<2x1x32xf32>
    %17 = vector.shape_cast %16 : vector<2x1x32xf32> to vector<2x32xf32>
    %cst_21 = arith.constant dense<0.000000e+00> : vector<2x64xf32>
    %18 = tpu.matmul %17, %2, %cst_21 {dimension_numbers = #tpu.dot_dimension_numbers<[1], [0], [0], [1], [0, 0, 1, 1], [], []>} : vector<2x32xf32>, vector<32x64xf32>, vector<2x64xf32> -> vector<2x64xf32>
    %cst_22 = arith.constant dense<0.000000e+00> : vector<2x64xf32>
    %19 = tpu.matmul %8, %3, %cst_22 {dimension_numbers = #tpu.dot_dimension_numbers<[1], [0], [0], [1], [0, 0, 1, 1], [], []>} : vector<2x16xf32>, vector<16x64xf32>, vector<2x64xf32> -> vector<2x64xf32>
    %20 = arith.addf %18, %19 : vector<2x64xf32>
    %21 = vector.broadcast %4 : vector<1x64xf32> to vector<2x64xf32>
    %22 = arith.addf %20, %21 : vector<2x64xf32>
    %23 = vector.extract_strided_slice %22 {offsets = [0, 0], sizes = [2, 16], strides = [1, 1]} : vector<2x64xf32> to vector<2x16xf32>
    %24 = arith.negf %23 : vector<2x16xf32>
    %25 = math.exp %24 : vector<2x16xf32>
    %cst_23 = arith.constant 1.000000e+00 : f32
    %26 = vector.broadcast %cst_23 : f32 to vector<2x16xf32>
    %27 = arith.addf %26, %25 : vector<2x16xf32>
    %28 = arith.divf %26, %27 : vector<2x16xf32>
    %29 = vector.extract_strided_slice %22 {offsets = [0, 16], sizes = [2, 16], strides = [1, 1]} : vector<2x64xf32> to vector<2x16xf32>
    %30 = arith.negf %29 : vector<2x16xf32>
    %31 = math.exp %30 : vector<2x16xf32>
    %cst_24 = arith.constant 1.000000e+00 : f32
    %32 = vector.broadcast %cst_24 : f32 to vector<2x16xf32>
    %33 = arith.addf %32, %31 : vector<2x16xf32>
    %34 = arith.divf %32, %33 : vector<2x16xf32>
    %35 = vector.extract_strided_slice %22 {offsets = [0, 32], sizes = [2, 16], strides = [1, 1]} : vector<2x64xf32> to vector<2x16xf32>
    %36 = math.tanh %35 : vector<2x16xf32>
    %37 = vector.extract_strided_slice %22 {offsets = [0, 48], sizes = [2, 16], strides = [1, 1]} : vector<2x64xf32> to vector<2x16xf32>
    %38 = arith.negf %37 : vector<2x16xf32>
    %39 = math.exp %38 : vector<2x16xf32>
    %cst_25 = arith.constant 1.000000e+00 : f32
    %40 = vector.broadcast %cst_25 : f32 to vector<2x16xf32>
    %41 = arith.addf %40, %39 : vector<2x16xf32>
    %42 = arith.divf %40, %41 : vector<2x16xf32>
    %43 = arith.mulf %34, %9 : vector<2x16xf32>
    %44 = arith.mulf %28, %36 : vector<2x16xf32>
    %45 = arith.addf %43, %44 : vector<2x16xf32>
    %46 = math.tanh %45 : vector<2x16xf32>
    %47 = arith.mulf %42, %46 : vector<2x16xf32>
    %48 = vector.shape_cast %13 : vector<2x1xi1> to vector<2x1xi1>
    %49 = vector.broadcast %48 : vector<2x1xi1> to vector<2x16xi1>
    %50 = arith.select %49, %47, %8 : vector<2x16xi1>, vector<2x16xf32>
    %51 = vector.shape_cast %13 : vector<2x1xi1> to vector<2x1xi1>
    %52 = vector.broadcast %51 : vector<2x1xi1> to vector<2x16xi1>
    %53 = arith.select %52, %45, %9 : vector<2x16xi1>, vector<2x16xf32>
    %54 = vector.extract_strided_slice %0 {offsets = [0, 2, 0], sizes = [2, 1, 32], strides = [1, 1, 1]} : vector<2x3x32xf32> to vector<2x1x32xf32>
    %55 = vector.shape_cast %54 : vector<2x1x32xf32> to vector<2x32xf32>
    %cst_26 = arith.constant dense<0.000000e+00> : vector<2x64xf32>
    %56 = tpu.matmul %55, %5, %cst_26 {dimension_numbers = #tpu.dot_dimension_numbers<[1], [0], [0], [1], [0, 0, 1, 1], [], []>} : vector<2x32xf32>, vector<32x64xf32>, vector<2x64xf32> -> vector<2x64xf32>
    %cst_27 = arith.constant dense<0.000000e+00> : vector<2x64xf32>
    %57 = tpu.matmul %10, %6, %cst_27 {dimension_numbers = #tpu.dot_dimension_numbers<[1], [0], [0], [1], [0, 0, 1, 1], [], []>} : vector<2x16xf32>, vector<16x64xf32>, vector<2x64xf32> -> vector<2x64xf32>
    %58 = arith.addf %56, %57 : vector<2x64xf32>
    %59 = vector.broadcast %7 : vector<1x64xf32> to vector<2x64xf32>
    %60 = arith.addf %58, %59 : vector<2x64xf32>
    %61 = vector.extract_strided_slice %60 {offsets = [0, 0], sizes = [2, 16], strides = [1, 1]} : vector<2x64xf32> to vector<2x16xf32>
    %62 = arith.negf %61 : vector<2x16xf32>
    %63 = math.exp %62 : vector<2x16xf32>
    %cst_28 = arith.constant 1.000000e+00 : f32
    %64 = vector.broadcast %cst_28 : f32 to vector<2x16xf32>
    %65 = arith.addf %64, %63 : vector<2x16xf32>
    %66 = arith.divf %64, %65 : vector<2x16xf32>
    %67 = vector.extract_strided_slice %60 {offsets = [0, 16], sizes = [2, 16], strides = [1, 1]} : vector<2x64xf32> to vector<2x16xf32>
    %68 = arith.negf %67 : vector<2x16xf32>
    %69 = math.exp %68 : vector<2x16xf32>
    %cst_29 = arith.constant 1.000000e+00 : f32
    %70 = vector.broadcast %cst_29 : f32 to vector<2x16xf32>
    %71 = arith.addf %70, %69 : vector<2x16xf32>
    %72 = arith.divf %70, %71 : vector<2x16xf32>
    %73 = vector.extract_strided_slice %60 {offsets = [0, 32], sizes = [2, 16], strides = [1, 1]} : vector<2x64xf32> to vector<2x16xf32>
    %74 = math.tanh %73 : vector<2x16xf32>
    %75 = vector.extract_strided_slice %60 {offsets = [0, 48], sizes = [2, 16], strides = [1, 1]} : vector<2x64xf32> to vector<2x16xf32>
    %76 = arith.negf %75 : vector<2x16xf32>
    %77 = math.exp %76 : vector<2x16xf32>
    %cst_30 = arith.constant 1.000000e+00 : f32
    %78 = vector.broadcast %cst_30 : f32 to vector<2x16xf32>
    %79 = arith.addf %78, %77 : vector<2x16xf32>
    %80 = arith.divf %78, %79 : vector<2x16xf32>
    %81 = arith.mulf %72, %11 : vector<2x16xf32>
    %82 = arith.mulf %66, %74 : vector<2x16xf32>
    %83 = arith.addf %81, %82 : vector<2x16xf32>
    %84 = math.tanh %83 : vector<2x16xf32>
    %85 = arith.mulf %80, %84 : vector<2x16xf32>
    %86 = vector.shape_cast %15 : vector<2x1xi1> to vector<2x1xi1>
    %87 = vector.broadcast %86 : vector<2x1xi1> to vector<2x16xi1>
    %88 = arith.select %87, %85, %10 : vector<2x16xi1>, vector<2x16xf32>
    %89 = vector.shape_cast %15 : vector<2x1xi1> to vector<2x1xi1>
    %90 = vector.broadcast %89 : vector<2x1xi1> to vector<2x16xi1>
    %91 = arith.select %90, %83, %11 : vector<2x16xi1>, vector<2x16xf32>
    %cst_31 = arith.constant 1.000000e+00 : f32
    %92 = vector.broadcast %cst_31 : f32 to vector<2x1xf32>
    %93 = arith.cmpf ogt, %1, %92 : vector<2x1xf32>
    %cst_32 = arith.constant 1.000000e+00 : f32
    %94 = vector.broadcast %cst_32 : f32 to vector<2x1xf32>
    %95 = arith.cmpf ogt, %1, %94 : vector<2x1xf32>
    %96 = vector.extract_strided_slice %0 {offsets = [0, 1, 0], sizes = [2, 1, 32], strides = [1, 1, 1]} : vector<2x3x32xf32> to vector<2x1x32xf32>
    %97 = vector.shape_cast %96 : vector<2x1x32xf32> to vector<2x32xf32>
    %cst_33 = arith.constant dense<0.000000e+00> : vector<2x64xf32>
    %98 = tpu.matmul %97, %2, %cst_33 {dimension_numbers = #tpu.dot_dimension_numbers<[1], [0], [0], [1], [0, 0, 1, 1], [], []>} : vector<2x32xf32>, vector<32x64xf32>, vector<2x64xf32> -> vector<2x64xf32>
    %cst_34 = arith.constant dense<0.000000e+00> : vector<2x64xf32>
    %99 = tpu.matmul %50, %3, %cst_34 {dimension_numbers = #tpu.dot_dimension_numbers<[1], [0], [0], [1], [0, 0, 1, 1], [], []>} : vector<2x16xf32>, vector<16x64xf32>, vector<2x64xf32> -> vector<2x64xf32>
    %100 = arith.addf %98, %99 : vector<2x64xf32>
    %101 = vector.broadcast %4 : vector<1x64xf32> to vector<2x64xf32>
    %102 = arith.addf %100, %101 : vector<2x64xf32>
    %103 = vector.extract_strided_slice %102 {offsets = [0, 0], sizes = [2, 16], strides = [1, 1]} : vector<2x64xf32> to vector<2x16xf32>
    %104 = arith.negf %103 : vector<2x16xf32>
    %105 = math.exp %104 : vector<2x16xf32>
    %cst_35 = arith.constant 1.000000e+00 : f32
    %106 = vector.broadcast %cst_35 : f32 to vector<2x16xf32>
    %107 = arith.addf %106, %105 : vector<2x16xf32>
    %108 = arith.divf %106, %107 : vector<2x16xf32>
    %109 = vector.extract_strided_slice %102 {offsets = [0, 16], sizes = [2, 16], strides = [1, 1]} : vector<2x64xf32> to vector<2x16xf32>
    %110 = arith.negf %109 : vector<2x16xf32>
    %111 = math.exp %110 : vector<2x16xf32>
    %cst_36 = arith.constant 1.000000e+00 : f32
    %112 = vector.broadcast %cst_36 : f32 to vector<2x16xf32>
    %113 = arith.addf %112, %111 : vector<2x16xf32>
    %114 = arith.divf %112, %113 : vector<2x16xf32>
    %115 = vector.extract_strided_slice %102 {offsets = [0, 32], sizes = [2, 16], strides = [1, 1]} : vector<2x64xf32> to vector<2x16xf32>
    %116 = math.tanh %115 : vector<2x16xf32>
    %117 = vector.extract_strided_slice %102 {offsets = [0, 48], sizes = [2, 16], strides = [1, 1]} : vector<2x64xf32> to vector<2x16xf32>
    %118 = arith.negf %117 : vector<2x16xf32>
    %119 = math.exp %118 : vector<2x16xf32>
    %cst_37 = arith.constant 1.000000e+00 : f32
    %120 = vector.broadcast %cst_37 : f32 to vector<2x16xf32>
    %121 = arith.addf %120, %119 : vector<2x16xf32>
    %122 = arith.divf %120, %121 : vector<2x16xf32>
    %123 = arith.mulf %114, %53 : vector<2x16xf32>
    %124 = arith.mulf %108, %116 : vector<2x16xf32>
    %125 = arith.addf %123, %124 : vector<2x16xf32>
    %126 = math.tanh %125 : vector<2x16xf32>
    %127 = arith.mulf %122, %126 : vector<2x16xf32>
    %128 = vector.shape_cast %93 : vector<2x1xi1> to vector<2x1xi1>
    %129 = vector.broadcast %128 : vector<2x1xi1> to vector<2x16xi1>
    %130 = arith.select %129, %127, %50 : vector<2x16xi1>, vector<2x16xf32>
    %131 = vector.shape_cast %93 : vector<2x1xi1> to vector<2x1xi1>
    %132 = vector.broadcast %131 : vector<2x1xi1> to vector<2x16xi1>
    %133 = arith.select %132, %125, %53 : vector<2x16xi1>, vector<2x16xf32>
    %134 = vector.extract_strided_slice %0 {offsets = [0, 1, 0], sizes = [2, 1, 32], strides = [1, 1, 1]} : vector<2x3x32xf32> to vector<2x1x32xf32>
    %135 = vector.shape_cast %134 : vector<2x1x32xf32> to vector<2x32xf32>
    %cst_38 = arith.constant dense<0.000000e+00> : vector<2x64xf32>
    %136 = tpu.matmul %135, %5, %cst_38 {dimension_numbers = #tpu.dot_dimension_numbers<[1], [0], [0], [1], [0, 0, 1, 1], [], []>} : vector<2x32xf32>, vector<32x64xf32>, vector<2x64xf32> -> vector<2x64xf32>
    %cst_39 = arith.constant dense<0.000000e+00> : vector<2x64xf32>
    %137 = tpu.matmul %88, %6, %cst_39 {dimension_numbers = #tpu.dot_dimension_numbers<[1], [0], [0], [1], [0, 0, 1, 1], [], []>} : vector<2x16xf32>, vector<16x64xf32>, vector<2x64xf32> -> vector<2x64xf32>
    %138 = arith.addf %136, %137 : vector<2x64xf32>
    %139 = vector.broadcast %7 : vector<1x64xf32> to vector<2x64xf32>
    %140 = arith.addf %138, %139 : vector<2x64xf32>
    %141 = vector.extract_strided_slice %140 {offsets = [0, 0], sizes = [2, 16], strides = [1, 1]} : vector<2x64xf32> to vector<2x16xf32>
    %142 = arith.negf %141 : vector<2x16xf32>
    %143 = math.exp %142 : vector<2x16xf32>
    %cst_40 = arith.constant 1.000000e+00 : f32
    %144 = vector.broadcast %cst_40 : f32 to vector<2x16xf32>
    %145 = arith.addf %144, %143 : vector<2x16xf32>
    %146 = arith.divf %144, %145 : vector<2x16xf32>
    %147 = vector.extract_strided_slice %140 {offsets = [0, 16], sizes = [2, 16], strides = [1, 1]} : vector<2x64xf32> to vector<2x16xf32>
    %148 = arith.negf %147 : vector<2x16xf32>
    %149 = math.exp %148 : vector<2x16xf32>
    %cst_41 = arith.constant 1.000000e+00 : f32
    %150 = vector.broadcast %cst_41 : f32 to vector<2x16xf32>
    %151 = arith.addf %150, %149 : vector<2x16xf32>
    %152 = arith.divf %150, %151 : vector<2x16xf32>
    %153 = vector.extract_strided_slice %140 {offsets = [0, 32], sizes = [2, 16], strides = [1, 1]} : vector<2x64xf32> to vector<2x16xf32>
    %154 = math.tanh %153 : vector<2x16xf32>
    %155 = vector.extract_strided_slice %140 {offsets = [0, 48], sizes = [2, 16], strides = [1, 1]} : vector<2x64xf32> to vector<2x16xf32>
    %156 = arith.negf %155 : vector<2x16xf32>
    %157 = math.exp %156 : vector<2x16xf32>
    %cst_42 = arith.constant 1.000000e+00 : f32
    %158 = vector.broadcast %cst_42 : f32 to vector<2x16xf32>
    %159 = arith.addf %158, %157 : vector<2x16xf32>
    %160 = arith.divf %158, %159 : vector<2x16xf32>
    %161 = arith.mulf %152, %91 : vector<2x16xf32>
    %162 = arith.mulf %146, %154 : vector<2x16xf32>
    %163 = arith.addf %161, %162 : vector<2x16xf32>
    %164 = math.tanh %163 : vector<2x16xf32>
    %165 = arith.mulf %160, %164 : vector<2x16xf32>
    %166 = vector.shape_cast %95 : vector<2x1xi1> to vector<2x1xi1>
    %167 = vector.broadcast %166 : vector<2x1xi1> to vector<2x16xi1>
    %168 = arith.select %167, %165, %88 : vector<2x16xi1>, vector<2x16xf32>
    %169 = vector.shape_cast %95 : vector<2x1xi1> to vector<2x1xi1>
    %170 = vector.broadcast %169 : vector<2x1xi1> to vector<2x16xi1>
    %171 = arith.select %170, %163, %91 : vector<2x16xi1>, vector<2x16xf32>
    %cst_43 = arith.constant 2.000000e+00 : f32
    %172 = vector.broadcast %cst_43 : f32 to vector<2x1xf32>
    %173 = arith.cmpf ogt, %1, %172 : vector<2x1xf32>
    %cst_44 = arith.constant 0.000000e+00 : f32
    %174 = vector.broadcast %cst_44 : f32 to vector<2x1xf32>
    %175 = arith.cmpf ogt, %1, %174 : vector<2x1xf32>
    %176 = vector.extract_strided_slice %0 {offsets = [0, 2, 0], sizes = [2, 1, 32], strides = [1, 1, 1]} : vector<2x3x32xf32> to vector<2x1x32xf32>
    %177 = vector.shape_cast %176 : vector<2x1x32xf32> to vector<2x32xf32>
    %cst_45 = arith.constant dense<0.000000e+00> : vector<2x64xf32>
    %178 = tpu.matmul %177, %2, %cst_45 {dimension_numbers = #tpu.dot_dimension_numbers<[1], [0], [0], [1], [0, 0, 1, 1], [], []>} : vector<2x32xf32>, vector<32x64xf32>, vector<2x64xf32> -> vector<2x64xf32>
    %cst_46 = arith.constant dense<0.000000e+00> : vector<2x64xf32>
    %179 = tpu.matmul %130, %3, %cst_46 {dimension_numbers = #tpu.dot_dimension_numbers<[1], [0], [0], [1], [0, 0, 1, 1], [], []>} : vector<2x16xf32>, vector<16x64xf32>, vector<2x64xf32> -> vector<2x64xf32>
    %180 = arith.addf %178, %179 : vector<2x64xf32>
    %181 = vector.broadcast %4 : vector<1x64xf32> to vector<2x64xf32>
    %182 = arith.addf %180, %181 : vector<2x64xf32>
    %183 = vector.extract_strided_slice %182 {offsets = [0, 0], sizes = [2, 16], strides = [1, 1]} : vector<2x64xf32> to vector<2x16xf32>
    %184 = arith.negf %183 : vector<2x16xf32>
    %185 = math.exp %184 : vector<2x16xf32>
    %cst_47 = arith.constant 1.000000e+00 : f32
    %186 = vector.broadcast %cst_47 : f32 to vector<2x16xf32>
    %187 = arith.addf %186, %185 : vector<2x16xf32>
    %188 = arith.divf %186, %187 : vector<2x16xf32>
    %189 = vector.extract_strided_slice %182 {offsets = [0, 16], sizes = [2, 16], strides = [1, 1]} : vector<2x64xf32> to vector<2x16xf32>
    %190 = arith.negf %189 : vector<2x16xf32>
    %191 = math.exp %190 : vector<2x16xf32>
    %cst_48 = arith.constant 1.000000e+00 : f32
    %192 = vector.broadcast %cst_48 : f32 to vector<2x16xf32>
    %193 = arith.addf %192, %191 : vector<2x16xf32>
    %194 = arith.divf %192, %193 : vector<2x16xf32>
    %195 = vector.extract_strided_slice %182 {offsets = [0, 32], sizes = [2, 16], strides = [1, 1]} : vector<2x64xf32> to vector<2x16xf32>
    %196 = math.tanh %195 : vector<2x16xf32>
    %197 = vector.extract_strided_slice %182 {offsets = [0, 48], sizes = [2, 16], strides = [1, 1]} : vector<2x64xf32> to vector<2x16xf32>
    %198 = arith.negf %197 : vector<2x16xf32>
    %199 = math.exp %198 : vector<2x16xf32>
    %cst_49 = arith.constant 1.000000e+00 : f32
    %200 = vector.broadcast %cst_49 : f32 to vector<2x16xf32>
    %201 = arith.addf %200, %199 : vector<2x16xf32>
    %202 = arith.divf %200, %201 : vector<2x16xf32>
    %203 = arith.mulf %194, %133 : vector<2x16xf32>
    %204 = arith.mulf %188, %196 : vector<2x16xf32>
    %205 = arith.addf %203, %204 : vector<2x16xf32>
    %206 = math.tanh %205 : vector<2x16xf32>
    %207 = arith.mulf %202, %206 : vector<2x16xf32>
    %208 = vector.shape_cast %173 : vector<2x1xi1> to vector<2x1xi1>
    %209 = vector.broadcast %208 : vector<2x1xi1> to vector<2x16xi1>
    %210 = arith.select %209, %207, %130 : vector<2x16xi1>, vector<2x16xf32>
    %211 = vector.extract_strided_slice %0 {offsets = [0, 0, 0], sizes = [2, 1, 32], strides = [1, 1, 1]} : vector<2x3x32xf32> to vector<2x1x32xf32>
    %212 = vector.shape_cast %211 : vector<2x1x32xf32> to vector<2x32xf32>
    %cst_50 = arith.constant dense<0.000000e+00> : vector<2x64xf32>
    %213 = tpu.matmul %212, %5, %cst_50 {dimension_numbers = #tpu.dot_dimension_numbers<[1], [0], [0], [1], [0, 0, 1, 1], [], []>} : vector<2x32xf32>, vector<32x64xf32>, vector<2x64xf32> -> vector<2x64xf32>
    %cst_51 = arith.constant dense<0.000000e+00> : vector<2x64xf32>
    %214 = tpu.matmul %168, %6, %cst_51 {dimension_numbers = #tpu.dot_dimension_numbers<[1], [0], [0], [1], [0, 0, 1, 1], [], []>} : vector<2x16xf32>, vector<16x64xf32>, vector<2x64xf32> -> vector<2x64xf32>
    %215 = arith.addf %213, %214 : vector<2x64xf32>
    %216 = vector.broadcast %7 : vector<1x64xf32> to vector<2x64xf32>
    %217 = arith.addf %215, %216 : vector<2x64xf32>
    %218 = vector.extract_strided_slice %217 {offsets = [0, 0], sizes = [2, 16], strides = [1, 1]} : vector<2x64xf32> to vector<2x16xf32>
    %219 = arith.negf %218 : vector<2x16xf32>
    %220 = math.exp %219 : vector<2x16xf32>
    %cst_52 = arith.constant 1.000000e+00 : f32
    %221 = vector.broadcast %cst_52 : f32 to vector<2x16xf32>
    %222 = arith.addf %221, %220 : vector<2x16xf32>
    %223 = arith.divf %221, %222 : vector<2x16xf32>
    %224 = vector.extract_strided_slice %217 {offsets = [0, 16], sizes = [2, 16], strides = [1, 1]} : vector<2x64xf32> to vector<2x16xf32>
    %225 = arith.negf %224 : vector<2x16xf32>
    %226 = math.exp %225 : vector<2x16xf32>
    %cst_53 = arith.constant 1.000000e+00 : f32
    %227 = vector.broadcast %cst_53 : f32 to vector<2x16xf32>
    %228 = arith.addf %227, %226 : vector<2x16xf32>
    %229 = arith.divf %227, %228 : vector<2x16xf32>
    %230 = vector.extract_strided_slice %217 {offsets = [0, 32], sizes = [2, 16], strides = [1, 1]} : vector<2x64xf32> to vector<2x16xf32>
    %231 = math.tanh %230 : vector<2x16xf32>
    %232 = vector.extract_strided_slice %217 {offsets = [0, 48], sizes = [2, 16], strides = [1, 1]} : vector<2x64xf32> to vector<2x16xf32>
    %233 = arith.negf %232 : vector<2x16xf32>
    %234 = math.exp %233 : vector<2x16xf32>
    %cst_54 = arith.constant 1.000000e+00 : f32
    %235 = vector.broadcast %cst_54 : f32 to vector<2x16xf32>
    %236 = arith.addf %235, %234 : vector<2x16xf32>
    %237 = arith.divf %235, %236 : vector<2x16xf32>
    %238 = arith.mulf %229, %171 : vector<2x16xf32>
    %239 = arith.mulf %223, %231 : vector<2x16xf32>
    %240 = arith.addf %238, %239 : vector<2x16xf32>
    %241 = math.tanh %240 : vector<2x16xf32>
    %242 = arith.mulf %237, %241 : vector<2x16xf32>
    %243 = vector.shape_cast %175 : vector<2x1xi1> to vector<2x1xi1>
    %244 = vector.broadcast %243 : vector<2x1xi1> to vector<2x16xi1>
    %245 = arith.select %244, %242, %168 : vector<2x16xi1>, vector<2x16xf32>
    %246 = tpu.concatenate %210, %245 in 1 : vector<2x16xf32>, vector<2x16xf32> -> vector<2x32xf32>
    %c0_55 = arith.constant 0 : index
    %c0_56 = arith.constant 0 : index
    %247 = vector.load %arg8[%c0_55, %c0_56] : memref<2x32xf32, #tpu.memory_space<vmem>>, vector<2x32xf32>
    tpu.vector_store %arg8[%c0_55, %c0_56], %246 {strides = array<i32>} : memref<2x32xf32, #tpu.memory_space<vmem>>, vector<2x32xf32>,
    return
  }
}

module attributes {stable_mosaic.version = 11 : i64} {
  func.func @tail_kernel(%arg0: memref<2x32xf32, #tpu.memory_space<vmem>>, %arg1: memref<2x27xf32, #tpu.memory_space<vmem>>, %arg2: memref<2x32xf32, #tpu.memory_space<vmem>>, %arg3: memref<27x5xf32, #tpu.memory_space<vmem>>, %arg4: memref<1x5xf32, #tpu.memory_space<vmem>>, %arg5: memref<32x4xf32, #tpu.memory_space<vmem>>, %arg6: memref<5x4xf32, #tpu.memory_space<vmem>>, %arg7: memref<32x4xf32, #tpu.memory_space<vmem>>, %arg8: memref<1x4xf32, #tpu.memory_space<vmem>>, %arg9: memref<2x4xf32, #tpu.memory_space<vmem>>) attributes {dimension_semantics = [], scalar_prefetch = 0 : i64, scratch_operands = 0 : i64, tpu.core_type = #tpu.core_type<tc>} {
    %c0 = arith.constant 0 : index
    %c0_0 = arith.constant 0 : index
    %0 = vector.load %arg0[%c0, %c0_0] : memref<2x32xf32, #tpu.memory_space<vmem>>, vector<2x32xf32>
    %1 = math.tanh %0 : vector<2x32xf32>
    %c0_1 = arith.constant 0 : index
    %c0_2 = arith.constant 0 : index
    %2 = vector.load %arg1[%c0_1, %c0_2] : memref<2x27xf32, #tpu.memory_space<vmem>>, vector<2x27xf32>
    %c0_3 = arith.constant 0 : index
    %c0_4 = arith.constant 0 : index
    %3 = vector.load %arg3[%c0_3, %c0_4] : memref<27x5xf32, #tpu.memory_space<vmem>>, vector<27x5xf32>
    %cst = arith.constant dense<0.000000e+00> : vector<2x5xf32>
    %4 = tpu.matmul %2, %3, %cst {dimension_numbers = #tpu.dot_dimension_numbers<[1], [0], [0], [1], [0, 0, 1, 1], [], []>} : vector<2x27xf32>, vector<27x5xf32>, vector<2x5xf32> -> vector<2x5xf32>
    %c0_5 = arith.constant 0 : index
    %c0_6 = arith.constant 0 : index
    %5 = vector.load %arg4[%c0_5, %c0_6] : memref<1x5xf32, #tpu.memory_space<vmem>>, vector<1x5xf32>
    %6 = vector.broadcast %5 : vector<1x5xf32> to vector<2x5xf32>
    %7 = arith.addf %4, %6 : vector<2x5xf32>
    %8 = math.tanh %7 : vector<2x5xf32>
    %c0_7 = arith.constant 0 : index
    %c0_8 = arith.constant 0 : index
    %9 = vector.load %arg2[%c0_7, %c0_8] : memref<2x32xf32, #tpu.memory_space<vmem>>, vector<2x32xf32>
    %10 = math.tanh %9 : vector<2x32xf32>
    %c0_9 = arith.constant 0 : index
    %c0_10 = arith.constant 0 : index
    %11 = vector.load %arg5[%c0_9, %c0_10] : memref<32x4xf32, #tpu.memory_space<vmem>>, vector<32x4xf32>
    %cst_11 = arith.constant dense<0.000000e+00> : vector<2x4xf32>
    %12 = tpu.matmul %1, %11, %cst_11 {dimension_numbers = #tpu.dot_dimension_numbers<[1], [0], [0], [1], [0, 0, 1, 1], [], []>} : vector<2x32xf32>, vector<32x4xf32>, vector<2x4xf32> -> vector<2x4xf32>
    %c0_12 = arith.constant 0 : index
    %c0_13 = arith.constant 0 : index
    %13 = vector.load %arg6[%c0_12, %c0_13] : memref<5x4xf32, #tpu.memory_space<vmem>>, vector<5x4xf32>
    %cst_14 = arith.constant dense<0.000000e+00> : vector<2x4xf32>
    %14 = tpu.matmul %8, %13, %cst_14 {dimension_numbers = #tpu.dot_dimension_numbers<[1], [0], [0], [1], [0, 0, 1, 1], [], []>} : vector<2x5xf32>, vector<5x4xf32>, vector<2x4xf32> -> vector<2x4xf32>
    %15 = arith.addf %12, %14 : vector<2x4xf32>
    %c0_15 = arith.constant 0 : index
    %c0_16 = arith.constant 0 : index
    %16 = vector.load %arg7[%c0_15, %c0_16] : memref<32x4xf32, #tpu.memory_space<vmem>>, vector<32x4xf32>
    %cst_17 = arith.constant dense<0.000000e+00> : vector<2x4xf32>
    %17 = tpu.matmul %10, %16, %cst_17 {dimension_numbers = #tpu.dot_dimension_numbers<[1], [0], [0], [1], [0, 0, 1, 1], [], []>} : vector<2x32xf32>, vector<32x4xf32>, vector<2x4xf32> -> vector<2x4xf32>
    %18 = arith.addf %15, %17 : vector<2x4xf32>
    %c0_18 = arith.constant 0 : index
    %c0_19 = arith.constant 0 : index
    %19 = vector.load %arg8[%c0_18, %c0_19] : memref<1x4xf32, #tpu.memory_space<vmem>>, vector<1x4xf32>
    %20 = vector.broadcast %19 : vector<1x4xf32> to vector<2x4xf32>
    %21 = arith.addf %18, %20 : vector<2x4xf32>
    %cst_20 = arith.constant dense<0xFF800000> : vector<2xf32>
    %22 = vector.multi_reduction <maximumf>, %21, %cst_20 [1] : vector<2x4xf32> to vector<2xf32>
    %23 = vector.shape_cast %22 : vector<2xf32> to vector<2x1xf32>
    %24 = vector.broadcast %23 : vector<2x1xf32> to vector<2x4xf32>
    %25 = arith.subf %21, %24 : vector<2x4xf32>
    %26 = math.exp %25 : vector<2x4xf32>
    %cst_21 = arith.constant dense<0.000000e+00> : vector<2xf32>
    %27 = vector.multi_reduction <add>, %26, %cst_21 [1] : vector<2x4xf32> to vector<2xf32>
    %28 = vector.shape_cast %27 : vector<2xf32> to vector<2x1xf32>
    %29 = math.log %28 : vector<2x1xf32>
    %30 = arith.addf %29, %23 : vector<2x1xf32>
    %31 = vector.broadcast %30 : vector<2x1xf32> to vector<2x4xf32>
    %32 = arith.subf %21, %31 : vector<2x4xf32>
    %c0_22 = arith.constant 0 : index
    %c0_23 = arith.constant 0 : index
    %33 = vector.load %arg9[%c0_22, %c0_23] : memref<2x4xf32, #tpu.memory_space<vmem>>, vector<2x4xf32>
    tpu.vector_store %arg9[%c0_22, %c0_23], %32 {strides = array<i32>} : memref<2x4xf32, #tpu.memory_space<vmem>>, vector<2x4xf32>,
    return
  }
}

</mosaic_0001>

<llo_original>
// kernel: forward.7
$region0: #{forward.7}
  #allocation0 [shape = 'u32[]', space=smem, size = 0x4, offset = 0x4, fixed_abs, tag = 'smem constant byte address 0x4 - core index']
  #allocation1 [shape = 'u32[144,128]{1,0:T(1,128)}', space=vmem, size = 0x12000, scoped, tag = 'internal scratch']
  %s0 = inlined_call_operand.vmem [shape: f32[2,32], index: 0, kind: input, shape index: {}]
  %s1 = inlined_call_operand.vmem [shape: f32[2,27], index: 1, kind: input, shape index: {}]
  %s2 = inlined_call_operand.vmem [shape: f32[2,32], index: 2, kind: input, shape index: {}]
  %s3 = inlined_call_operand.vmem [shape: f32[27,5], index: 3, kind: input, shape index: {}]
  %s4 = inlined_call_operand.vmem [shape: f32[1,5], index: 4, kind: input, shape index: {}]
  %s5 = inlined_call_operand.vmem [shape: f32[32,4], index: 5, kind: input, shape index: {}]
  %s6 = inlined_call_operand.vmem [shape: f32[5,4], index: 6, kind: input, shape index: {}]
  %s7 = inlined_call_operand.vmem [shape: f32[32,4], index: 7, kind: input, shape index: {}]
  %s8 = inlined_call_operand.vmem [shape: f32[1,4], index: 8, kind: input, shape index: {}]
  %s9 = inlined_call_operand.vmem [shape: f32[2,4], index: 9, kind: output, shape index: {}]
  %s10 = sld [smem:[#allocation0]]
  $region46: #{forward.7} parent=0
    _
  %s12 = ssub.s32 1, %s10
  %s13 = scalar_select 0, %s12, %s10
  // Predicated region
  $region2: #{forward.7} parent=0 // pred_check
    _
  $region3: #{forward.7} parent=0 // pred_check_branch
    %15 = sbr.rel (0) target = $region5
  $region4: #{forward.7} parent=0 // pred_region
    _
  $region5: #{forward.7} parent=0 // pred_fallthru
    _
  // Predicated region
  $region6: #{forward.7} parent=0 // pred_check
    _
  $region7: #{forward.7} parent=0 // pred_check_branch
    %17 = sbr.rel (0) target = $region9
  $region8: #{forward.7} parent=0 // pred_region
    _
  $region9: #{forward.7} parent=0 // pred_fallthru
    _
  // Predicated region
  $region10: #{forward.7} parent=0 // pred_check
    _
  $region11: #{forward.7} parent=0 // pred_check_branch
    %19 = sbr.rel (0) target = $region13
  $region12: #{forward.7} parent=0 // pred_region
    _
  $region13: #{forward.7} parent=0 // pred_fallthru
    _
  // Predicated region
  $region14: #{forward.7} parent=0 // pred_check
    _
  $region15: #{forward.7} parent=0 // pred_check_branch
    %21 = sbr.rel (0) target = $region17
  $region16: #{forward.7} parent=0 // pred_region
    _
  $region17: #{forward.7} parent=0 // pred_fallthru
    _
  // Predicated region
  $region18: #{forward.7} parent=0 // pred_check
    _
  $region19: #{forward.7} parent=0 // pred_check_branch
    %23 = sbr.rel (0) target = $region21
  $region20: #{forward.7} parent=0 // pred_region
    _
  $region21: #{forward.7} parent=0 // pred_fallthru
    _
  // Predicated region
  $region22: #{forward.7} parent=0 // pred_check
    _
  $region23: #{forward.7} parent=0 // pred_check_branch
    %25 = sbr.rel (0) target = $region25
  $region24: #{forward.7} parent=0 // pred_region
    _
  $region25: #{forward.7} parent=0 // pred_fallthru
    _
  // Predicated region
  $region26: #{forward.7} parent=0 // pred_check
    _
  $region27: #{forward.7} parent=0 // pred_check_branch
    %27 = sbr.rel (0) target = $region29
  $region28: #{forward.7} parent=0 // pred_region
    _
  $region29: #{forward.7} parent=0 // pred_fallthru
    _
  // Predicated region
  $region30: #{forward.7} parent=0 // pred_check
    _
  $region31: #{forward.7} parent=0 // pred_check_branch
    %29 = sbr.rel (0) target = $region33
  $region32: #{forward.7} parent=0 // pred_region
    _
  $region33: #{forward.7} parent=0 // pred_fallthru
    _
  // Predicated region
  $region34: #{forward.7} parent=0 // pred_check
    _
  $region35: #{forward.7} parent=0 // pred_check_branch
    %31 = sbr.rel (0) target = $region37
  $region36: #{forward.7} parent=0 // pred_region
    _
  $region37: #{forward.7} parent=0 // pred_fallthru
    _
  %v32 = vld [vmem:[%s0] sm:$0x3]
  %v33 = vtanh.pop %v32
  %v34 = vld [vmem:[%s1] sm:$0x3]
  %v35 = vld [vmem:[%s3] sm:$0xff]
  %v36 = vld [vmem:[%s3 + $0x8] sm:$0xff]
  %v37 = vld [vmem:[%s3 + $0x10] sm:$0xff]
  %v38 = vld [vmem:[%s3 + $0x18] sm:$0x7]
  %v39 = vld [vmem:[%s4] sm:$0x1]
  %v41 = vlaneseq
  %v42 = vshrl.u32 %v41, 7
  %v43 = vsub.s32 0, %v42
  %v44 = vrot.slane %v39, %v43
  %vm46 = vcmask 220160
  %v48 = vsel %vm46, %v34, 0
  %vm50 = vcmask 1042432
  %v52 = vsel %vm50, %v38, 0
  %54 = vmatprep.subr.mxu0 0.0
  %55 = vmatpush1.msra.mxu0 %v35
  %56 = vmatprep.subr.mxu0 0.0
  %57 = vmatpush1.msra.mxu0 %v36
  %58 = vmatprep.subr.mxu0 0.0
  %59 = vmatpush1.msra.mxu0 %v37
  %60 = vmatprep.subr.mxu0 0.0
  %61 = vmatpush1.msra.mxu0 %v52
  %62 = vmatprep.subr.mxu0 0.0
  %63 = vmatpush1.msra.mxu0 0.0
  %64 = vmatprep.subr.mxu0 0.0
  %65 = vmatpush1.msra.mxu0 0.0
  %66 = vmatprep.subr.mxu0 0.0
  %67 = vmatpush1.msra.mxu0 0.0
  %68 = vmatprep.subr.mxu0 0.0
  %69 = vmatpush1.msra.mxu0 0.0
  %70 = vmatprep.subr.mxu0 0.0
  %71 = vmatpush1.msra.mxu0 0.0
  %72 = vmatprep.subr.mxu0 0.0
  %73 = vmatpush1.msra.mxu0 0.0
  %74 = vmatprep.subr.mxu0 0.0
  %75 = vmatpush1.msra.mxu0 0.0
  %76 = vmatprep.subr.mxu0 0.0
  %77 = vmatpush1.msra.mxu0 0.0
  %78 = vmatprep.subr.mxu0 0.0
  %79 = vmatpush1.msra.mxu0 0.0
  %80 = vmatprep.subr.mxu0 0.0
  %81 = vmatpush1.msra.mxu0 0.0
  %82 = vmatprep.subr.mxu0 0.0
  %83 = vmatpush1.msra.mxu0 0.0
  %84 = vmatprep.subr.mxu0 0.0
  %85 = vmatpush1.msra.mxu0 0.0
  %86 = vmatprep.subr.mxu0 0.0
  %87 = vmatpush1.msra.mxu0 0.0
  %88 = vmatprep.subr.mxu0 0.0
  %89 = vmatpush1.msra.mxu0 0.0
  %90 = vmatprep.subr.mxu0 0.0
  %91 = vmatpush1.msra.mxu0 0.0
  %92 = vmatprep.subr.mxu0 0.0
  %93 = vmatpush1.msra.mxu0 0.0
  %94 = vmatprep.subr.mxu0 0.0
  %95 = vmatpush1.msra.mxu0 0.0
  %96 = vmatprep.subr.mxu0 0.0
  %97 = vmatpush1.msra.mxu0 0.0
  %98 = vmatprep.subr.mxu0 0.0
  %99 = vmatpush1.msra.mxu0 0.0
  %100 = vmatprep.subr.mxu0 0.0
  %101 = vmatpush1.msra.mxu0 0.0
  %102 = vmatprep.subr.mxu0 0.0
  %103 = vmatpush1.msra.mxu0 0.0
  %104 = vmatprep.subr.mxu0 0.0
  %105 = vmatpush1.msra.mxu0 0.0
  %106 = vmatprep.subr.mxu0 0.0
  %107 = vmatpush1.msra.mxu0 0.0
  %108 = vmatprep.subr.mxu0 0.0
  %109 = vmatpush1.msra.mxu0 0.0
  %110 = vmatprep.subr.mxu0 0.0
  %111 = vmatpush1.msra.mxu0 0.0
  %112 = vmatprep.subr.mxu0 0.0
  %113 = vmatpush1.msra.mxu0 0.0
  %114 = vmatprep.subr.mxu0 0.0
  %115 = vmatpush1.msra.mxu0 0.0
  %116 = vmatprep.subr.mxu0 0.0
  %117 = vmatpush1.msra.mxu0 0.0
  %118 = vmatprep.mubr.f32.mxu0 0.0
  %119 = vmatmul.mubr.f32.gmra.mrb[0].mxu0 %v48
  %v120 = vpop.f32.mrb[0].mxu0
  %v121 = vadd.f32 %v44, %v120
  %v122 = vpop.f32.mrb[0].mxu0
  %123 = vdwg.mxu0
  %v124 = vtanh.pop %v121
  %v125 = vld [vmem:[%s2] sm:$0x3]
  %v126 = vtanh.pop %v125
  %v127 = vld [vmem:[%s5] sm:$0xff]
  %v128 = vld [vmem:[%s5 + $0x8] sm:$0xff]
  %v129 = vld [vmem:[%s5 + $0x10] sm:$0xff]
  %v130 = vld [vmem:[%s5 + $0x18] sm:$0xff]
  %v131 = vld [vmem:[%s6] sm:$0x1f]
  %vm132 = vcmask 39936
  %v134 = vsel %vm132, %v124, 0
  %vm136 = vcmask 1044480
  %v138 = vsel %vm136, %v131, 0
  %140 = vmatprep.subr.mxu0 0.0
  %141 = vmatpush1.msra.mxu0 %v138
  %142 = vmatprep.subr.mxu0 0.0
  %143 = vmatpush1.msra.mxu0 0.0
  %144 = vmatprep.subr.mxu0 0.0
  %145 = vmatpush1.msra.mxu0 0.0
  %146 = vmatprep.subr.mxu0 0.0
  %147 = vmatpush1.msra.mxu0 0.0
  %148 = vmatprep.subr.mxu0 0.0
  %149 = vmatpush1.msra.mxu0 0.0
  %150 = vmatprep.subr.mxu0 0.0
  %151 = vmatpush1.msra.mxu0 0.0
  %152 = vmatprep.subr.mxu0 0.0
  %153 = vmatpush1.msra.mxu0 0.0
  %154 = vmatprep.subr.mxu0 0.0
  %155 = vmatpush1.msra.mxu0 0.0
  %156 = vmatprep.subr.mxu0 0.0
  %157 = vmatpush1.msra.mxu0 0.0
  %158 = vmatprep.subr.mxu0 0.0
  %159 = vmatpush1.msra.mxu0 0.0
  %160 = vmatprep.subr.mxu0 0.0
  %161 = vmatpush1.msra.mxu0 0.0
  %162 = vmatprep.subr.mxu0 0.0
  %163 = vmatpush1.msra.mxu0 0.0
  %164 = vmatprep.subr.mxu0 0.0
  %165 = vmatpush1.msra.mxu0 0.0
  %166 = vmatprep.subr.mxu0 0.0
  %167 = vmatpush1.msra.mxu0 0.0
  %168 = vmatprep.subr.mxu0 0.0
  %169 = vmatpush1.msra.mxu0 0.0
  %170 = vmatprep.subr.mxu0 0.0
  %171 = vmatpush1.msra.mxu0 0.0
  %172 = vmatprep.subr.mxu0 0.0
  %173 = vmatpush1.msra.mxu0 0.0
  %174 = vmatprep.subr.mxu0 0.0
  %175 = vmatpush1.msra.mxu0 0.0
  %176 = vmatprep.subr.mxu0 0.0
  %177 = vmatpush1.msra.mxu0 0.0
  %178 = vmatprep.subr.mxu0 0.0
  %179 = vmatpush1.msra.mxu0 0.0
  %180 = vmatprep.subr.mxu0 0.0
  %181 = vmatpush1.msra.mxu0 0.0
  %182 = vmatprep.subr.mxu0 0.0
  %183 = vmatpush1.msra.mxu0 0.0
  %184 = vmatprep.subr.mxu0 0.0
  %185 = vmatpush1.msra.mxu0 0.0
  %186 = vmatprep.subr.mxu0 0.0
  %187 = vmatpush1.msra.mxu0 0.0
  %188 = vmatprep.subr.mxu0 0.0
  %189 = vmatpush1.msra.mxu0 0.0
  %190 = vmatprep.subr.mxu0 0.0
  %191 = vmatpush1.msra.mxu0 0.0
  %192 = vmatprep.subr.mxu0 0.0
  %193 = vmatpush1.msra.mxu0 0.0
  %194 = vmatprep.subr.mxu0 0.0
  %195 = vmatpush1.msra.mxu0 0.0
  %196 = vmatprep.subr.mxu0 0.0
  %197 = vmatpush1.msra.mxu0 0.0
  %198 = vmatprep.subr.mxu0 0.0
  %199 = vmatpush1.msra.mxu0 0.0
  %200 = vmatprep.subr.mxu0 0.0
  %201 = vmatpush1.msra.mxu0 0.0
  %202 = vmatprep.subr.mxu0 0.0
  %203 = vmatpush1.msra.mxu0 0.0
  %204 = vmatprep.mubr.f32.mxu0 0.0
  %205 = vmatmul.mubr.f32.gmra.mrb[0].mxu0 %v134
  %v206 = vpop.f32.mrb[0].mxu0
  %v207 = vadd.f32 0.0, %v206
  %v208 = vpop.f32.mrb[0].mxu0
  %209 = vdwg.mxu0
  %vm210 = vcmask 261120
  %v212 = vsel %vm210, %v33, 0
  %214 = vmatprep.subr.mxu0 0.0
  %215 = vmatpush1.msra.mxu0 %v127
  %216 = vmatprep.subr.mxu0 0.0
  %217 = vmatpush1.msra.mxu0 %v128
  %218 = vmatprep.subr.mxu0 0.0
  %219 = vmatpush1.msra.mxu0 %v129
  %220 = vmatprep.subr.mxu0 0.0
  %221 = vmatpush1.msra.mxu0 %v130
  %222 = vmatprep.subr.mxu0 0.0
  %223 = vmatpush1.msra.mxu0 0.0
  %224 = vmatprep.subr.mxu0 0.0
  %225 = vmatpush1.msra.mxu0 0.0
  %226 = vmatprep.subr.mxu0 0.0
  %227 = vmatpush1.msra.mxu0 0.0
  %228 = vmatprep.subr.mxu0 0.0
  %229 = vmatpush1.msra.mxu0 0.0
  %230 = vmatprep.subr.mxu0 0.0
  %231 = vmatpush1.msra.mxu0 0.0
  %232 = vmatprep.subr.mxu0 0.0
  %233 = vmatpush1.msra.mxu0 0.0
  %234 = vmatprep.subr.mxu0 0.0
  %235 = vmatpush1.msra.mxu0 0.0
  %236 = vmatprep.subr.mxu0 0.0
  %237 = vmatpush1.msra.mxu0 0.0
  %238 = vmatprep.subr.mxu0 0.0
  %239 = vmatpush1.msra.mxu0 0.0
  %240 = vmatprep.subr.mxu0 0.0
  %241 = vmatpush1.msra.mxu0 0.0
  %242 = vmatprep.subr.mxu0 0.0
  %243 = vmatpush1.msra.mxu0 0.0
  %244 = vmatprep.subr.mxu0 0.0
  %245 = vmatpush1.msra.mxu0 0.0
  %246 = vmatprep.subr.mxu0 0.0
  %247 = vmatpush1.msra.mxu0 0.0
  %248 = vmatprep.subr.mxu0 0.0
  %249 = vmatpush1.msra.mxu0 0.0
  %250 = vmatprep.subr.mxu0 0.0
  %251 = vmatpush1.msra.mxu0 0.0
  %252 = vmatprep.subr.mxu0 0.0
  %253 = vmatpush1.msra.mxu0 0.0
  %254 = vmatprep.subr.mxu0 0.0
  %255 = vmatpush1.msra.mxu0 0.0
  %256 = vmatprep.subr.mxu0 0.0
  %257 = vmatpush1.msra.mxu0 0.0
  %258 = vmatprep.subr.mxu0 0.0
  %259 = vmatpush1.msra.mxu0 0.0
  %260 = vmatprep.subr.mxu0 0.0
  %261 = vmatpush1.msra.mxu0 0.0
  %262 = vmatprep.subr.mxu0 0.0
  %263 = vmatpush1.msra.mxu0 0.0
  %264 = vmatprep.subr.mxu0 0.0
  %265 = vmatpush1.msra.mxu0 0.0
  %266 = vmatprep.subr.mxu0 0.0
  %267 = vmatpush1.msra.mxu0 0.0
  %268 = vmatprep.subr.mxu0 0.0
  %269 = vmatpush1.msra.mxu0 0.0
  %270 = vmatprep.subr.mxu0 0.0
  %271 = vmatpush1.msra.mxu0 0.0
  %272 = vmatprep.subr.mxu0 0.0
  %273 = vmatpush1.msra.mxu0 0.0
  %274 = vmatprep.subr.mxu0 0.0
  %275 = vmatpush1.msra.mxu0 0.0
  %276 = vmatprep.subr.mxu0 0.0
  %277 = vmatpush1.msra.mxu0 0.0
  %278 = vmatprep.mubr.f32.mxu0 0.0
  %279 = vmatmul.mubr.f32.gmra.mrb[0].mxu0 %v212
  %v280 = vpop.f32.mrb[0].mxu0
  %v281 = vadd.f32 %v207, %v280
  %v282 = vpop.f32.mrb[0].mxu0
  %283 = vdwg.mxu0
  %v284 = vld [vmem:[%s7] sm:$0xff]
  %v285 = vld [vmem:[%s7 + $0x8] sm:$0xff]
  %v286 = vld [vmem:[%s7 + $0x10] sm:$0xff]
  %v287 = vld [vmem:[%s7 + $0x18] sm:$0xff]
  %v289 = vsel %vm210, %v126, 0
  %291 = vmatprep.subr.mxu0 0.0
  %292 = vmatpush1.msra.mxu0 %v284
  %293 = vmatprep.subr.mxu0 0.0
  %294 = vmatpush1.msra.mxu0 %v285
  %295 = vmatprep.subr.mxu0 0.0
  %296 = vmatpush1.msra.mxu0 %v286
  %297 = vmatprep.subr.mxu0 0.0
  %298 = vmatpush1.msra.mxu0 %v287
  %299 = vmatprep.subr.mxu0 0.0
  %300 = vmatpush1.msra.mxu0 0.0
  %301 = vmatprep.subr.mxu0 0.0
  %302 = vmatpush1.msra.mxu0 0.0
  %303 = vmatprep.subr.mxu0 0.0
  %304 = vmatpush1.msra.mxu0 0.0
  %305 = vmatprep.subr.mxu0 0.0
  %306 = vmatpush1.msra.mxu0 0.0
  %307 = vmatprep.subr.mxu0 0.0
  %308 = vmatpush1.msra.mxu0 0.0
  %309 = vmatprep.subr.mxu0 0.0
  %310 = vmatpush1.msra.mxu0 0.0
  %311 = vmatprep.subr.mxu0 0.0
  %312 = vmatpush1.msra.mxu0 0.0
  %313 = vmatprep.subr.mxu0 0.0
  %314 = vmatpush1.msra.mxu0 0.0
  %315 = vmatprep.subr.mxu0 0.0
  %316 = vmatpush1.msra.mxu0 0.0
  %317 = vmatprep.subr.mxu0 0.0
  %318 = vmatpush1.msra.mxu0 0.0
  %319 = vmatprep.subr.mxu0 0.0
  %320 = vmatpush1.msra.mxu0 0.0
  %321 = vmatprep.subr.mxu0 0.0
  %322 = vmatpush1.msra.mxu0 0.0
  %323 = vmatprep.subr.mxu0 0.0
  %324 = vmatpush1.msra.mxu0 0.0
  %325 = vmatprep.subr.mxu0 0.0
  %326 = vmatpush1.msra.mxu0 0.0
  %327 = vmatprep.subr.mxu0 0.0
  %328 = vmatpush1.msra.mxu0 0.0
  %329 = vmatprep.subr.mxu0 0.0
  %330 = vmatpush1.msra.mxu0 0.0
  %331 = vmatprep.subr.mxu0 0.0
  %332 = vmatpush1.msra.mxu0 0.0
  %333 = vmatprep.subr.mxu0 0.0
  %334 = vmatpush1.msra.mxu0 0.0
  %335 = vmatprep.subr.mxu0 0.0
  %336 = vmatpush1.msra.mxu0 0.0
  %337 = vmatprep.subr.mxu0 0.0
  %338 = vmatpush1.msra.mxu0 0.0
  %339 = vmatprep.subr.mxu0 0.0
  %340 = vmatpush1.msra.mxu0 0.0
  %341 = vmatprep.subr.mxu0 0.0
  %342 = vmatpush1.msra.mxu0 0.0
  %343 = vmatprep.subr.mxu0 0.0
  %344 = vmatpush1.msra.mxu0 0.0
  %345 = vmatprep.subr.mxu0 0.0
  %346 = vmatpush1.msra.mxu0 0.0
  %347 = vmatprep.subr.mxu0 0.0
  %348 = vmatpush1.msra.mxu0 0.0
  %349 = vmatprep.subr.mxu0 0.0
  %350 = vmatpush1.msra.mxu0 0.0
  %351 = vmatprep.subr.mxu0 0.0
  %352 = vmatpush1.msra.mxu0 0.0
  %353 = vmatprep.subr.mxu0 0.0
  %354 = vmatpush1.msra.mxu0 0.0
  %355 = vmatprep.mubr.f32.mxu0 0.0
  %356 = vmatmul.mubr.f32.gmra.mrb[0].mxu0 %v289
  %v357 = vpop.f32.mrb[0].mxu0
  %v358 = vadd.f32 0.0, %v357
  %v359 = vpop.f32.mrb[0].mxu0
  %360 = vdwg.mxu0
  %v361 = vadd.f32 %v281, %v358
  %v362 = vld [vmem:[%s8] sm:$0x1]
  %v364 = vlaneseq
  %v365 = vshrl.u32 %v364, 7
  %v366 = vsub.s32 0, %v365
  %v367 = vrot.slane %v362, %v366
  %v369 = vadd.f32 %v361, %v367
  %vm370 = vcmask 25600
  %v371 = vsel %vm370, %v369, -inf
  %372 = vmax.xlane.f32.xlu0 %v371
  %v373 = vpop.xlane.xlu0 %372
  %v374 = vsub.f32 %v369, %v373
  %v375 = vmul.f32 %v374, 1.442695
  %v376 = vpow.pop %v375
  %v377 = vsel %vm370, %v376, 0.0
  %378 = vadd.xlane.f32.xlu0 %v377
  %v379 = vpop.xlane.xlu0 %378
  %v380 = vlog2.pop %v379
  %v381 = vmul.f32 %v380, 0.6931472
  %v382 = vadd.f32 %v381, %v373
  %v383 = vsub.f32 %v369, %v382
  %384 = vst.msk [vmem:[%s9] sm:$0x3] %vm370, %v383
  // Predicated region
  $region38: #{forward.7} parent=0 // pred_check
    _
  $region39: #{forward.7} parent=0 // pred_check_branch
    %386 = sbr.rel (0) target = $region41
  $region40: #{forward.7} parent=0 // pred_region
    _
  $region41: #{forward.7} parent=0 // pred_fallthru
    _
  // Predicated region
  $region42: #{forward.7} parent=0 // pred_check
    _
  $region43: #{forward.7} parent=0 // pred_check_branch
    %388 = sbr.rel (0) target = $region45
  $region44: #{forward.7} parent=0 // pred_region
    _
  $region45: #{forward.7} parent=0 // pred_fallthru
    _

// kernel: forward.5
$region0: #{forward.5}
  #allocation0 [shape = 'u32[]', space=smem, size = 0x4, offset = 0x4, fixed_abs, tag = 'smem constant byte address 0x4 - core index']
  #allocation1 [shape = 'u32[144,128]{1,0:T(1,128)}', space=vmem, size = 0x12000, scoped, tag = 'internal scratch']
  #allocation2 [shape = 'f32[1,1]{1,0:T(1,128)S(1)}', space=vmem, size = 0x200, scoped, tag = 'scoped memory for forward.5']
  #allocation3 [shape = 'f32[1,1]{1,0:T(1,128)S(1)}', space=vmem, size = 0x200, scoped, tag = 'scoped memory for forward.5']
  %s0 = inlined_call_operand.vmem [shape: f32[1,10,32], index: 0, kind: input, shape index: {}]
  %s1 = inlined_call_operand.vmem [shape: f32[1,10,1], index: 1, kind: input, shape index: {}]
  %s2 = inlined_call_operand.vmem [shape: f32[2,17,32], index: 2, kind: input, shape index: {}]
  %s3 = inlined_call_operand.vmem [shape: f32[2,17,1], index: 3, kind: input, shape index: {}]
  %s4 = inlined_call_operand.vmem [shape: f32[32,32], index: 4, kind: input, shape index: {}]
  %s5 = inlined_call_operand.vmem [shape: f32[1,32], index: 5, kind: input, shape index: {}]
  %s6 = inlined_call_operand.vmem [shape: f32[1,32], index: 6, kind: input, shape index: {}]
  %s7 = inlined_call_operand.<no memory space> [shape: f32[1,1], index: 7, kind: input, shape index: {}]
  %s8 = inlined_call_operand.vmem [shape: f32[32,32], index: 8, kind: input, shape index: {}]
  %s9 = inlined_call_operand.vmem [shape: f32[1,32], index: 9, kind: input, shape index: {}]
  %s10 = inlined_call_operand.vmem [shape: f32[32,32], index: 10, kind: input, shape index: {}]
  %s11 = inlined_call_operand.vmem [shape: f32[1,32], index: 11, kind: input, shape index: {}]
  %s12 = inlined_call_operand.vmem [shape: f32[1,32], index: 12, kind: input, shape index: {}]
  %s13 = inlined_call_operand.<no memory space> [shape: f32[1,1], index: 13, kind: input, shape index: {}]
  %s14 = inlined_call_operand.vmem [shape: f32[2,32], index: 14, kind: output, shape index: {}]
  %s15 = sld [smem:[#allocation0]]
  $region66: #{forward.5} parent=0
    _
  %s17 = ssub.s32 1, %s15
  %s18 = scalar_select 0, %s17, %s15
  %v19 = vstv %s7
  %20 = vst [vmem:[#allocation2] sm:$0x1] %v19
  %v21 = vstv %s13
  %22 = vst [vmem:[#allocation3] sm:$0x1] %v21
  // Predicated region
  $region2: #{forward.5} parent=0 // pred_check
    _
  $region3: #{forward.5} parent=0 // pred_check_branch
    %24 = sbr.rel (0) target = $region5
  $region4: #{forward.5} parent=0 // pred_region
    _
  $region5: #{forward.5} parent=0 // pred_fallthru
    _
  // Predicated region
  $region6: #{forward.5} parent=0 // pred_check
    _
  $region7: #{forward.5} parent=0 // pred_check_branch
    %26 = sbr.rel (0) target = $region9
  $region8: #{forward.5} parent=0 // pred_region
    _
  $region9: #{forward.5} parent=0 // pred_fallthru
    _
  // Predicated region
  $region10: #{forward.5} parent=0 // pred_check
    _
  $region11: #{forward.5} parent=0 // pred_check_branch
    %28 = sbr.rel (0) target = $region13
  $region12: #{forward.5} parent=0 // pred_region
    _
  $region13: #{forward.5} parent=0 // pred_fallthru
    _
  // Predicated region
  $region14: #{forward.5} parent=0 // pred_check
    _
  $region15: #{forward.5} parent=0 // pred_check_branch
    %30 = sbr.rel (0) target = $region17
  $region16: #{forward.5} parent=0 // pred_region
    _
  $region17: #{forward.5} parent=0 // pred_fallthru
    _
  // Predicated region
  $region18: #{forward.5} parent=0 // pred_check
    _
  $region19: #{forward.5} parent=0 // pred_check_branch
    %32 = sbr.rel (0) target = $region21
  $region20: #{forward.5} parent=0 // pred_region
    _
  $region21: #{forward.5} parent=0 // pred_fallthru
    _
  // Predicated region
  $region22: #{forward.5} parent=0 // pred_check
    _
  $region23: #{forward.5} parent=0 // pred_check_branch
    %34 = sbr.rel (0) target = $region25
  $region24: #{forward.5} parent=0 // pred_region
    _
  $region25: #{forward.5} parent=0 // pred_fallthru
    _
  // Predicated region
  $region26: #{forward.5} parent=0 // pred_check
    _
  $region27: #{forward.5} parent=0 // pred_check_branch
    %36 = sbr.rel (0) target = $region29
  $region28: #{forward.5} parent=0 // pred_region
    _
  $region29: #{forward.5} parent=0 // pred_fallthru
    _
  // Predicated region
  $region30: #{forward.5} parent=0 // pred_check
    _
  $region31: #{forward.5} parent=0 // pred_check_branch
    %38 = sbr.rel (0) target = $region33
  $region32: #{forward.5} parent=0 // pred_region
    _
  $region33: #{forward.5} parent=0 // pred_fallthru
    _
  // Predicated region
  $region34: #{forward.5} parent=0 // pred_check
    _
  $region35: #{forward.5} parent=0 // pred_check_branch
    %40 = sbr.rel (0) target = $region37
  $region36: #{forward.5} parent=0 // pred_region
    _
  $region37: #{forward.5} parent=0 // pred_fallthru
    _
  // Predicated region
  $region38: #{forward.5} parent=0 // pred_check
    _
  $region39: #{forward.5} parent=0 // pred_check_branch
    %42 = sbr.rel (0) target = $region41
  $region40: #{forward.5} parent=0 // pred_region
    _
  $region41: #{forward.5} parent=0 // pred_fallthru
    _
  // Predicated region
  $region42: #{forward.5} parent=0 // pred_check
    _
  $region43: #{forward.5} parent=0 // pred_check_branch
    %44 = sbr.rel (0) target = $region45
  $region44: #{forward.5} parent=0 // pred_region
    _
  $region45: #{forward.5} parent=0 // pred_fallthru
    _
  // Predicated region
  $region46: #{forward.5} parent=0 // pred_check
    _
  $region47: #{forward.5} parent=0 // pred_check_branch
    %46 = sbr.rel (0) target = $region49
  $region48: #{forward.5} parent=0 // pred_region
    _
  $region49: #{forward.5} parent=0 // pred_fallthru
    _
  // Predicated region
  $region50: #{forward.5} parent=0 // pred_check
    _
  $region51: #{forward.5} parent=0 // pred_check_branch
    %48 = sbr.rel (0) target = $region53
  $region52: #{forward.5} parent=0 // pred_region
    _
  $region53: #{forward.5} parent=0 // pred_fallthru
    _
  // Predicated region
  $region54: #{forward.5} parent=0 // pred_check
    _
  $region55: #{forward.5} parent=0 // pred_check_branch
    %50 = sbr.rel (0) target = $region57
  $region56: #{forward.5} parent=0 // pred_region
    _
  $region57: #{forward.5} parent=0 // pred_fallthru
    _
  %v51 = vld [vmem:[%s0] sm:$0xff]
  %v52 = vld [vmem:[%s0 + $0x8] sm:$0x3]
  %v53 = vld [vmem:[%s1] sm:$0xff]
  %v54 = vld [vmem:[%s1 + $0x8] sm:$0x3]
  %v55 = vld [vmem:[%s4] sm:$0xff]
  %v56 = vld [vmem:[%s4 + $0x8] sm:$0xff]
  %v57 = vld [vmem:[%s4 + $0x10] sm:$0xff]
  %v58 = vld [vmem:[%s4 + $0x18] sm:$0xff]
  %v59 = vld [vmem:[%s5] sm:$0x1]
  %v60 = vld [vmem:[%s6] sm:$0x1]
  %v61 = vld [vmem:[#allocation2] sm:$0x1]
  %v63 = vlaneseq
  %v64 = vshrl.u32 %v63, 7
  %v65 = vsub.s32 0, %v64
  %v66 = vrot.slane %v59, %v65
  %vm68 = vcmask 261120
  %v70 = vsel %vm68, %v51, 0
  %v73 = vsel %vm68, %v52, 0
  %75 = vmatprep.subr.mxu0 0.0
  %76 = vmatpush1.msra.mxu0 %v55
  %77 = vmatprep.subr.mxu0 0.0
  %78 = vmatpush1.msra.mxu0 %v56
  %79 = vmatprep.subr.mxu0 0.0
  %80 = vmatpush1.msra.mxu0 %v57
  %81 = vmatprep.subr.mxu0 0.0
  %82 = vmatpush1.msra.mxu0 %v58
  %83 = vmatprep.subr.mxu0 0.0
  %84 = vmatpush1.msra.mxu0 0.0
  %85 = vmatprep.subr.mxu0 0.0
  %86 = vmatpush1.msra.mxu0 0.0
  %87 = vmatprep.subr.mxu0 0.0
  %88 = vmatpush1.msra.mxu0 0.0
  %89 = vmatprep.subr.mxu0 0.0
  %90 = vmatpush1.msra.mxu0 0.0
  %91 = vmatprep.subr.mxu0 0.0
  %92 = vmatpush1.msra.mxu0 0.0
  %93 = vmatprep.subr.mxu0 0.0
  %94 = vmatpush1.msra.mxu0 0.0
  %95 = vmatprep.subr.mxu0 0.0
  %96 = vmatpush1.msra.mxu0 0.0
  %97 = vmatprep.subr.mxu0 0.0
  %98 = vmatpush1.msra.mxu0 0.0
  %99 = vmatprep.subr.mxu0 0.0
  %100 = vmatpush1.msra.mxu0 0.0
  %101 = vmatprep.subr.mxu0 0.0
  %102 = vmatpush1.msra.mxu0 0.0
  %103 = vmatprep.subr.mxu0 0.0
  %104 = vmatpush1.msra.mxu0 0.0
  %105 = vmatprep.subr.mxu0 0.0
  %106 = vmatpush1.msra.mxu0 0.0
  %107 = vmatprep.subr.mxu0 0.0
  %108 = vmatpush1.msra.mxu0 0.0
  %109 = vmatprep.subr.mxu0 0.0
  %110 = vmatpush1.msra.mxu0 0.0
  %111 = vmatprep.subr.mxu0 0.0
  %112 = vmatpush1.msra.mxu0 0.0
  %113 = vmatprep.subr.mxu0 0.0
  %114 = vmatpush1.msra.mxu0 0.0
  %115 = vmatprep.subr.mxu0 0.0
  %116 = vmatpush1.msra.mxu0 0.0
  %117 = vmatprep.subr.mxu0 0.0
  %118 = vmatpush1.msra.mxu0 0.0
  %119 = vmatprep.subr.mxu0 0.0
  %120 = vmatpush1.msra.mxu0 0.0
  %121 = vmatprep.subr.mxu0 0.0
  %122 = vmatpush1.msra.mxu0 0.0
  %123 = vmatprep.subr.mxu0 0.0
  %124 = vmatpush1.msra.mxu0 0.0
  %125 = vmatprep.subr.mxu0 0.0
  %126 = vmatpush1.msra.mxu0 0.0
  %127 = vmatprep.subr.mxu0 0.0
  %128 = vmatpush1.msra.mxu0 0.0
  %129 = vmatprep.subr.mxu0 0.0
  %130 = vmatpush1.msra.mxu0 0.0
  %131 = vmatprep.subr.mxu0 0.0
  %132 = vmatpush1.msra.mxu0 0.0
  %133 = vmatprep.subr.mxu0 0.0
  %134 = vmatpush1.msra.mxu0 0.0
  %135 = vmatprep.subr.mxu0 0.0
  %136 = vmatpush1.msra.mxu0 0.0
  %137 = vmatprep.subr.mxu0 0.0
  %138 = vmatpush1.msra.mxu0 0.0
  %139 = vmatprep.mubr.f32.mxu0 0.0
  %140 = vmatmul.mubr.f32.gmra.mrb[0].mxu0 %v70
  %v141 = vpop.f32.mrb[0].mxu0
  %v142 = vadd.f32 %v66, %v141
  %v143 = vpop.f32.mrb[0].mxu0
  %144 = vmatprep.mubr.f32.mxu0 0.0
  %145 = vmatmul.mubr.f32.gmra.mrb[0].mxu0 %v73
  %v146 = vpop.f32.mrb[0].mxu0
  %v147 = vadd.f32 %v66, %v146
  %v148 = vpop.f32.mrb[0].mxu0
  %149 = vdwg.mxu0
  %v150 = vadd.f32 %v142, 0.0
  %v151 = vadd.f32 %v147, 0.0
  %v152 = vtanh.pop %v150
  %v153 = vtanh.pop %v151
  %v155 = vlaneseq
  %v156 = vshrl.u32 %v155, 7
  %v157 = vsub.s32 0, %v156
  %v158 = vrot.slane %v60, %v157
  %v160 = vmul.f32 %v152, %v158
  %v161 = vmul.f32 %v153, %v158
  %v162 = vsel %vm68, %v160, 0.0
  %163 = vadd.xlane.f32.xlu0 %v162
  %v164 = vpop.xlane.xlu0 %163
  %vm165 = vcmask 254976
  %v166 = vsel %vm165, %v161, 0.0
  %167 = vadd.xlane.f32.xlu0 %v166
  %v168 = vpop.xlane.xlu0 %167
  %v170 = vlaneseq
  %v171 = vshrl.u32 %v170, 7
  %v172 = vsub.s32 0, %v171
  %v173 = vrot.slane %v61, %v172
  %v175 = vadd.f32 %v164, %v173
  %v176 = vadd.f32 %v168, %v173
  %vm177 = vcmp.gt.f32.partialorder %v53, 0.5
  %vm178 = vcmp.gt.f32.partialorder %v54, 0.5
  %v179 = vsel %vm177, %v175, -1e+30
  %v180 = vsel %vm178, %v176, -1e+30
  %vm181 = vcmask 7168
  %v182 = vsel %vm181, %v179, -inf
  %vm183 = vcmask 1024
  %v184 = vsel %vm183, %v180, -inf
  %v185 = vmax.f32 %v182, %v184
  %v186 = vrot.slane %v185, 4
  %v187 = vmax.f32 %v185, %v186
  %v188 = vrot.slane %v187, 2
  %v189 = vmax.f32 %v187, %v188
  %v190 = vrot.slane %v189, 1
  %v191 = vmax.f32 %v189, %v190
  %v192 = vsub.f32 %v179, %v191
  %v193 = vsub.f32 %v180, %v191
  %v194 = vmul.f32 %v192, 1.442695
  %v195 = vpow.pop %v194
  %v196 = vmul.f32 %v193, 1.442695
  %v197 = vpow.pop %v196
  %v198 = vsel %vm181, %v195, 0.0
  %v199 = vsel %vm183, %v197, 0.0
  %v200 = vadd.f32 %v198, %v199
  %v201 = vrot.slane %v200, 4
  %v202 = vadd.f32 %v200, %v201
  %v203 = vrot.slane %v202, 2
  %v204 = vadd.f32 %v202, %v203
  %v205 = vrot.slane %v204, 1
  %v206 = vadd.f32 %v204, %v205
  %v207 = vrcp.pop %v206
  %v208 = vmul.f32 %v195, %v207
  %v209 = vmul.f32 %v197, %v207
  %211 = vset.pattern.permute.xlu0 0
  %212 = vperm.xlu0 %211, %v208
  %v213 = vpop.permute.xlu0 %212
  %216 = vset.pattern.permute.xlu0 0
  %217 = vperm.xlu0 %216, %v209
  %v218 = vpop.permute.xlu0 %217
  %v220 = vmul.f32 %v213, %v51
  %v221 = vmul.f32 %v218, %v52
  %v222 = vsel %vm68, %v220, 0.0
  %v223 = vsel %vm165, %v221, 0.0
  %v224 = vadd.f32 %v222, %v223
  %v225 = vrot.slane %v224, 4
  %v226 = vadd.f32 %v224, %v225
  %v227 = vrot.slane %v226, 2
  %v228 = vadd.f32 %v226, %v227
  %v229 = vrot.slane %v228, 1
  %v230 = vadd.f32 %v228, %v229
  %v231 = vld [vmem:[%s10] sm:$0xff]
  %v232 = vld [vmem:[%s10 + $0x8] sm:$0xff]
  %v233 = vld [vmem:[%s10 + $0x10] sm:$0xff]
  %v234 = vld [vmem:[%s10 + $0x18] sm:$0xff]
  %v235 = vld [vmem:[%s11] sm:$0x1]
  %v237 = vsel %vm68, %v230, 0
  %239 = vmatprep.subr.mxu0 0.0
  %240 = vmatpush1.msra.mxu0 %v231
  %241 = vmatprep.subr.mxu0 0.0
  %242 = vmatpush1.msra.mxu0 %v232
  %243 = vmatprep.subr.mxu0 0.0
  %244 = vmatpush1.msra.mxu0 %v233
  %245 = vmatprep.subr.mxu0 0.0
  %246 = vmatpush1.msra.mxu0 %v234
  %247 = vmatprep.subr.mxu0 0.0
  %248 = vmatpush1.msra.mxu0 0.0
  %249 = vmatprep.subr.mxu0 0.0
  %250 = vmatpush1.msra.mxu0 0.0
  %251 = vmatprep.subr.mxu0 0.0
  %252 = vmatpush1.msra.mxu0 0.0
  %253 = vmatprep.subr.mxu0 0.0
  %254 = vmatpush1.msra.mxu0 0.0
  %255 = vmatprep.subr.mxu0 0.0
  %256 = vmatpush1.msra.mxu0 0.0
  %257 = vmatprep.subr.mxu0 0.0
  %258 = vmatpush1.msra.mxu0 0.0
  %259 = vmatprep.subr.mxu0 0.0
  %260 = vmatpush1.msra.mxu0 0.0
  %261 = vmatprep.subr.mxu0 0.0
  %262 = vmatpush1.msra.mxu0 0.0
  %263 = vmatprep.subr.mxu0 0.0
  %264 = vmatpush1.msra.mxu0 0.0
  %265 = vmatprep.subr.mxu0 0.0
  %266 = vmatpush1.msra.mxu0 0.0
  %267 = vmatprep.subr.mxu0 0.0
  %268 = vmatpush1.msra.mxu0 0.0
  %269 = vmatprep.subr.mxu0 0.0
  %270 = vmatpush1.msra.mxu0 0.0
  %271 = vmatprep.subr.mxu0 0.0
  %272 = vmatpush1.msra.mxu0 0.0
  %273 = vmatprep.subr.mxu0 0.0
  %274 = vmatpush1.msra.mxu0 0.0
  %275 = vmatprep.subr.mxu0 0.0
  %276 = vmatpush1.msra.mxu0 0.0
  %277 = vmatprep.subr.mxu0 0.0
  %278 = vmatpush1.msra.mxu0 0.0
  %279 = vmatprep.subr.mxu0 0.0
  %280 = vmatpush1.msra.mxu0 0.0
  %281 = vmatprep.subr.mxu0 0.0
  %282 = vmatpush1.msra.mxu0 0.0
  %283 = vmatprep.subr.mxu0 0.0
  %284 = vmatpush1.msra.mxu0 0.0
  %285 = vmatprep.subr.mxu0 0.0
  %286 = vmatpush1.msra.mxu0 0.0
  %287 = vmatprep.subr.mxu0 0.0
  %288 = vmatpush1.msra.mxu0 0.0
  %289 = vmatprep.subr.mxu0 0.0
  %290 = vmatpush1.msra.mxu0 0.0
  %291 = vmatprep.subr.mxu0 0.0
  %292 = vmatpush1.msra.mxu0 0.0
  %293 = vmatprep.subr.mxu0 0.0
  %294 = vmatpush1.msra.mxu0 0.0
  %295 = vmatprep.subr.mxu0 0.0
  %296 = vmatpush1.msra.mxu0 0.0
  %297 = vmatprep.subr.mxu0 0.0
  %298 = vmatpush1.msra.mxu0 0.0
  %299 = vmatprep.subr.mxu0 0.0
  %300 = vmatpush1.msra.mxu0 0.0
  %301 = vmatprep.subr.mxu0 0.0
  %302 = vmatpush1.msra.mxu0 0.0
  %303 = vmatprep.mubr.f32.mxu0 0.0
  %304 = vmatmul.mubr.f32.gmra.mrb[0].mxu0 %v237
  %v305 = vpop.f32.mrb[0].mxu0
  %v306 = vadd.f32 %v235, %v305
  %v307 = vpop.f32.mrb[0].mxu0
  %308 = vdwg.mxu0
  %v309 = vld [vmem:[%s2] sm:$0xff]
  %v310 = vld [vmem:[%s2 + $0x8] sm:$0xff]
  %v311 = vld [vmem:[%s2 + $0x10] sm:$0x1]
  %v312 = vld [vmem:[%s3] sm:$0xff]
  %v313 = vld [vmem:[%s3 + $0x8] sm:$0xff]
  %v314 = vld [vmem:[%s3 + $0x10] sm:$0x1]
  %v315 = vld [vmem:[%s8] sm:$0xff]
  %v316 = vld [vmem:[%s8 + $0x8] sm:$0xff]
  %v317 = vld [vmem:[%s8 + $0x10] sm:$0xff]
  %v318 = vld [vmem:[%s8 + $0x18] sm:$0xff]
  %v319 = vld [vmem:[%s9] sm:$0x1]
  %v320 = vld [vmem:[%s12] sm:$0x1]
  %v321 = vld [vmem:[#allocation3] sm:$0x1]
  %v323 = vlaneseq
  %v324 = vshrl.u32 %v323, 7
  %v325 = vsub.s32 0, %v324
  %v326 = vrot.slane %v319, %v325
  %v329 = vsel %vm68, %v309, 0
  %v332 = vsel %vm68, %v310, 0
  %v335 = vsel %vm68, %v311, 0
  %337 = vmatprep.subr.mxu0 0.0
  %338 = vmatpush1.msra.mxu0 %v315
  %339 = vmatprep.subr.mxu0 0.0
  %340 = vmatpush1.msra.mxu0 %v316
  %341 = vmatprep.subr.mxu0 0.0
  %342 = vmatpush1.msra.mxu0 %v317
  %343 = vmatprep.subr.mxu0 0.0
  %344 = vmatpush1.msra.mxu0 %v318
  %345 = vmatprep.subr.mxu0 0.0
  %346 = vmatpush1.msra.mxu0 0.0
  %347 = vmatprep.subr.mxu0 0.0
  %348 = vmatpush1.msra.mxu0 0.0
  %349 = vmatprep.subr.mxu0 0.0
  %350 = vmatpush1.msra.mxu0 0.0
  %351 = vmatprep.subr.mxu0 0.0
  %352 = vmatpush1.msra.mxu0 0.0
  %353 = vmatprep.subr.mxu0 0.0
  %354 = vmatpush1.msra.mxu0 0.0
  %355 = vmatprep.subr.mxu0 0.0
  %356 = vmatpush1.msra.mxu0 0.0
  %357 = vmatprep.subr.mxu0 0.0
  %358 = vmatpush1.msra.mxu0 0.0
  %359 = vmatprep.subr.mxu0 0.0
  %360 = vmatpush1.msra.mxu0 0.0
  %361 = vmatprep.subr.mxu0 0.0
  %362 = vmatpush1.msra.mxu0 0.0
  %363 = vmatprep.subr.mxu0 0.0
  %364 = vmatpush1.msra.mxu0 0.0
  %365 = vmatprep.subr.mxu0 0.0
  %366 = vmatpush1.msra.mxu0 0.0
  %367 = vmatprep.subr.mxu0 0.0
  %368 = vmatpush1.msra.mxu0 0.0
  %369 = vmatprep.subr.mxu0 0.0
  %370 = vmatpush1.msra.mxu0 0.0
  %371 = vmatprep.subr.mxu0 0.0
  %372 = vmatpush1.msra.mxu0 0.0
  %373 = vmatprep.subr.mxu0 0.0
  %374 = vmatpush1.msra.mxu0 0.0
  %375 = vmatprep.subr.mxu0 0.0
  %376 = vmatpush1.msra.mxu0 0.0
  %377 = vmatprep.subr.mxu0 0.0
  %378 = vmatpush1.msra.mxu0 0.0
  %379 = vmatprep.subr.mxu0 0.0
  %380 = vmatpush1.msra.mxu0 0.0
  %381 = vmatprep.subr.mxu0 0.0
  %382 = vmatpush1.msra.mxu0 0.0
  %383 = vmatprep.subr.mxu0 0.0
  %384 = vmatpush1.msra.mxu0 0.0
  %385 = vmatprep.subr.mxu0 0.0
  %386 = vmatpush1.msra.mxu0 0.0
  %387 = vmatprep.subr.mxu0 0.0
  %388 = vmatpush1.msra.mxu0 0.0
  %389 = vmatprep.subr.mxu0 0.0
  %390 = vmatpush1.msra.mxu0 0.0
  %391 = vmatprep.subr.mxu0 0.0
  %392 = vmatpush1.msra.mxu0 0.0
  %393 = vmatprep.subr.mxu0 0.0
  %394 = vmatpush1.msra.mxu0 0.0
  %395 = vmatprep.subr.mxu0 0.0
  %396 = vmatpush1.msra.mxu0 0.0
  %397 = vmatprep.subr.mxu0 0.0
  %398 = vmatpush1.msra.mxu0 0.0
  %399 = vmatprep.subr.mxu0 0.0
  %400 = vmatpush1.msra.mxu0 0.0
  %401 = vmatprep.mubr.f32.mxu0 0.0
  %402 = vmatmul.mubr.f32.gmra.mrb[0].mxu0 %v329
  %v403 = vpop.f32.mrb[0].mxu0
  %v404 = vadd.f32 %v326, %v403
  %v405 = vpop.f32.mrb[0].mxu0
  %406 = vmatprep.mubr.f32.mxu0 0.0
  %407 = vmatmul.mubr.f32.gmra.mrb[0].mxu0 %v332
  %v408 = vpop.f32.mrb[0].mxu0
  %v409 = vadd.f32 %v326, %v408
  %v410 = vpop.f32.mrb[0].mxu0
  %411 = vmatprep.mubr.f32.mxu0 0.0
  %412 = vmatmul.mubr.f32.gmra.mrb[0].mxu0 %v335
  %v413 = vpop.f32.mrb[0].mxu0
  %v414 = vadd.f32 %v326, %v413
  %v415 = vpop.f32.mrb[0].mxu0
  %416 = vdwg.mxu0
  %v417 = vlaneseq
  %v418 = vshrl.u32 %v417, 7
  %v419 = vsub.s32 0, %v418
  %v420 = vrot.slane %v306, %v419
  %v421 = vadd.f32 %v404, %v420
  %v422 = vadd.f32 %v409, %v420
  %v423 = vadd.f32 %v414, %v420
  %v424 = vtanh.pop %v421
  %v425 = vtanh.pop %v422
  %v426 = vtanh.pop %v423
  %v428 = vlaneseq
  %v429 = vshrl.u32 %v428, 7
  %v430 = vsub.s32 0, %v429
  %v431 = vrot.slane %v320, %v430
  %v433 = vmul.f32 %v424, %v431
  %v434 = vmul.f32 %v425, %v431
  %v435 = vmul.f32 %v426, %v431
  %v436 = vsel %vm68, %v433, 0.0
  %437 = vadd.xlane.f32.xlu0 %v436
  %v438 = vpop.xlane.xlu0 %437
  %v439 = vsel %vm68, %v434, 0.0
  %440 = vadd.xlane.f32.xlu0 %v439
  %v441 = vpop.xlane.xlu0 %440
  %vm442 = vcmask 253952
  %v443 = vsel %vm442, %v435, 0.0
  %444 = vadd.xlane.f32.xlu0 %v443
  %v445 = vpop.xlane.xlu0 %444
  %v447 = vlaneseq
  %v448 = vshrl.u32 %v447, 7
  %v449 = vsub.s32 0, %v448
  %v450 = vrot.slane %v321, %v449
  %v452 = vadd.f32 %v438, %v450
  %v453 = vadd.f32 %v441, %v450
  %v454 = vadd.f32 %v445, %v450
  %vm455 = vcmp.gt.f32.partialorder %v312, 0.5
  %vm456 = vcmp.gt.f32.partialorder %v313, 0.5
  %vm457 = vcmp.gt.f32.partialorder %v314, 0.5
  %v458 = vsel %vm455, %v452, -1e+30
  %v459 = vsel %vm456, %v453, -1e+30
  %v460 = vsel %vm457, %v454, -1e+30
  %v461 = vsel %vm181, %v458, -inf
  %v462 = vsel %vm181, %v459, -inf
  %vm463 = vcmask 0
  %v464 = vsel %vm463, %v460, -inf
  %v465 = vmax.f32 %v461, %v462
  %v466 = vmax.f32 %v465, %v464
  %v467 = vrot.slane %v466, 4
  %v468 = vmax.f32 %v466, %v467
  %v469 = vrot.slane %v468, 2
  %v470 = vmax.f32 %v468, %v469
  %v471 = vrot.slane %v470, 1
  %v472 = vmax.f32 %v470, %v471
  %v473 = vsub.f32 %v458, %v472
  %v474 = vsub.f32 %v459, %v472
  %v475 = vsub.f32 %v460, %v472
  %v476 = vmul.f32 %v473, 1.442695
  %v477 = vpow.pop %v476
  %v478 = vmul.f32 %v474, 1.442695
  %v479 = vpow.pop %v478
  %v480 = vmul.f32 %v475, 1.442695
  %v481 = vpow.pop %v480
  %v482 = vsel %vm181, %v477, 0.0
  %v483 = vsel %vm181, %v479, 0.0
  %v484 = vadd.f32 %v482, %v483
  %v485 = vsel %vm463, %v481, 0.0
  %v486 = vadd.f32 %v484, %v485
  %v487 = vrot.slane %v486, 4
  %v488 = vadd.f32 %v486, %v487
  %v489 = vrot.slane %v488, 2
  %v490 = vadd.f32 %v488, %v489
  %v491 = vrot.slane %v490, 1
  %v492 = vadd.f32 %v490, %v491
  %v493 = vrcp.pop %v492
  %v494 = vmul.f32 %v477, %v493
  %v495 = vmul.f32 %v479, %v493
  %v496 = vmul.f32 %v481, %v493
  %498 = vset.pattern.permute.xlu0 0
  %499 = vperm.xlu0 %498, %v494
  %v500 = vpop.permute.xlu0 %499
  %503 = vset.pattern.permute.xlu0 0
  %504 = vperm.xlu0 %503, %v495
  %v505 = vpop.permute.xlu0 %504
  %508 = vset.pattern.permute.xlu0 0
  %509 = vperm.xlu0 %508, %v496
  %v510 = vpop.permute.xlu0 %509
  %v512 = vmul.f32 %v500, %v309
  %v513 = vmul.f32 %v505, %v310
  %v514 = vmul.f32 %v510, %v311
  %v515 = vsel %vm68, %v512, 0.0
  %v516 = vsel %vm68, %v513, 0.0
  %v517 = vadd.f32 %v515, %v516
  %v518 = vsel %vm442, %v514, 0.0
  %v519 = vadd.f32 %v517, %v518
  %v520 = vrot.slane %v519, 4
  %v521 = vadd.f32 %v519, %v520
  %v522 = vrot.slane %v521, 2
  %v523 = vadd.f32 %v521, %v522
  %v524 = vrot.slane %v523, 1
  %v525 = vadd.f32 %v523, %v524
  %526 = vst.msk [vmem:[%s14] sm:$0x1] %vm442, %v525
  %s527 = scalar_lea.vmem %s2, 24
  %v528 = vld [vmem:[%s527] sm:$0xff]
  %v529 = vld [vmem:[%s527 + $0x8] sm:$0xff]
  %v530 = vld [vmem:[%s527 + $0x10] sm:$0x1]
  %s531 = scalar_lea.vmem %s3, 24
  %v532 = vld [vmem:[%s531] sm:$0xff]
  %v533 = vld [vmem:[%s531 + $0x8] sm:$0xff]
  %v534 = vld [vmem:[%s531 + $0x10] sm:$0x1]
  %v535 = vld [vmem:[%s8] sm:$0xff]
  %v536 = vld [vmem:[%s8 + $0x8] sm:$0xff]
  %v537 = vld [vmem:[%s8 + $0x10] sm:$0xff]
  %v538 = vld [vmem:[%s8 + $0x18] sm:$0xff]
  %v539 = vld [vmem:[%s9] sm:$0x1]
  %v540 = vld [vmem:[%s12] sm:$0x1]
  %v541 = vld [vmem:[#allocation3] sm:$0x1]
  %v543 = vlaneseq
  %v544 = vshrl.u32 %v543, 7
  %v545 = vsub.s32 0, %v544
  %v546 = vrot.slane %v539, %v545
  %v549 = vsel %vm68, %v528, 0
  %v552 = vsel %vm68, %v529, 0
  %v555 = vsel %vm68, %v530, 0
  %557 = vmatprep.subr.mxu0 0.0
  %558 = vmatpush1.msra.mxu0 %v535
  %559 = vmatprep.subr.mxu0 0.0
  %560 = vmatpush1.msra.mxu0 %v536
  %561 = vmatprep.subr.mxu0 0.0
  %562 = vmatpush1.msra.mxu0 %v537
  %563 = vmatprep.subr.mxu0 0.0
  %564 = vmatpush1.msra.mxu0 %v538
  %565 = vmatprep.subr.mxu0 0.0
  %566 = vmatpush1.msra.mxu0 0.0
  %567 = vmatprep.subr.mxu0 0.0
  %568 = vmatpush1.msra.mxu0 0.0
  %569 = vmatprep.subr.mxu0 0.0
  %570 = vmatpush1.msra.mxu0 0.0
  %571 = vmatprep.subr.mxu0 0.0
  %572 = vmatpush1.msra.mxu0 0.0
  %573 = vmatprep.subr.mxu0 0.0
  %574 = vmatpush1.msra.mxu0 0.0
  %575 = vmatprep.subr.mxu0 0.0
  %576 = vmatpush1.msra.mxu0 0.0
  %577 = vmatprep.subr.mxu0 0.0
  %578 = vmatpush1.msra.mxu0 0.0
  %579 = vmatprep.subr.mxu0 0.0
  %580 = vmatpush1.msra.mxu0 0.0
  %581 = vmatprep.subr.mxu0 0.0
  %582 = vmatpush1.msra.mxu0 0.0
  %583 = vmatprep.subr.mxu0 0.0
  %584 = vmatpush1.msra.mxu0 0.0
  %585 = vmatprep.subr.mxu0 0.0
  %586 = vmatpush1.msra.mxu0 0.0
  %587 = vmatprep.subr.mxu0 0.0
  %588 = vmatpush1.msra.mxu0 0.0
  %589 = vmatprep.subr.mxu0 0.0
  %590 = vmatpush1.msra.mxu0 0.0
  %591 = vmatprep.subr.mxu0 0.0
  %592 = vmatpush1.msra.mxu0 0.0
  %593 = vmatprep.subr.mxu0 0.0
  %594 = vmatpush1.msra.mxu0 0.0
  %595 = vmatprep.subr.mxu0 0.0
  %596 = vmatpush1.msra.mxu0 0.0
  %597 = vmatprep.subr.mxu0 0.0
  %598 = vmatpush1.msra.mxu0 0.0
  %599 = vmatprep.subr.mxu0 0.0
  %600 = vmatpush1.msra.mxu0 0.0
  %601 = vmatprep.subr.mxu0 0.0
  %602 = vmatpush1.msra.mxu0 0.0
  %603 = vmatprep.subr.mxu0 0.0
  %604 = vmatpush1.msra.mxu0 0.0
  %605 = vmatprep.subr.mxu0 0.0
  %606 = vmatpush1.msra.mxu0 0.0
  %607 = vmatprep.subr.mxu0 0.0
  %608 = vmatpush1.msra.mxu0 0.0
  %609 = vmatprep.subr.mxu0 0.0
  %610 = vmatpush1.msra.mxu0 0.0
  %611 = vmatprep.subr.mxu0 0.0
  %612 = vmatpush1.msra.mxu0 0.0
  %613 = vmatprep.subr.mxu0 0.0
  %614 = vmatpush1.msra.mxu0 0.0
  %615 = vmatprep.subr.mxu0 0.0
  %616 = vmatpush1.msra.mxu0 0.0
  %617 = vmatprep.subr.mxu0 0.0
  %618 = vmatpush1.msra.mxu0 0.0
  %619 = vmatprep.subr.mxu0 0.0
  %620 = vmatpush1.msra.mxu0 0.0
  %621 = vmatprep.mubr.f32.mxu0 0.0
  %622 = vmatmul.mubr.f32.gmra.mrb[0].mxu0 %v549
  %v623 = vpop.f32.mrb[0].mxu0
  %v624 = vadd.f32 %v546, %v623
  %v625 = vpop.f32.mrb[0].mxu0
  %626 = vmatprep.mubr.f32.mxu0 0.0
  %627 = vmatmul.mubr.f32.gmra.mrb[0].mxu0 %v552
  %v628 = vpop.f32.mrb[0].mxu0
  %v629 = vadd.f32 %v546, %v628
  %v630 = vpop.f32.mrb[0].mxu0
  %631 = vmatprep.mubr.f32.mxu0 0.0
  %632 = vmatmul.mubr.f32.gmra.mrb[0].mxu0 %v555
  %v633 = vpop.f32.mrb[0].mxu0
  %v634 = vadd.f32 %v546, %v633
  %v635 = vpop.f32.mrb[0].mxu0
  %636 = vdwg.mxu0
  %v637 = vadd.f32 %v624, %v420
  %v638 = vadd.f32 %v629, %v420
  %v639 = vadd.f32 %v634, %v420
  %v640 = vtanh.pop %v637
  %v641 = vtanh.pop %v638
  %v642 = vtanh.pop %v639
  %v644 = vlaneseq
  %v645 = vshrl.u32 %v644, 7
  %v646 = vsub.s32 0, %v645
  %v647 = vrot.slane %v540, %v646
  %v649 = vmul.f32 %v640, %v647
  %v650 = vmul.f32 %v641, %v647
  %v651 = vmul.f32 %v642, %v647
  %v652 = vsel %vm68, %v649, 0.0
  %653 = vadd.xlane.f32.xlu0 %v652
  %v654 = vpop.xlane.xlu0 %653
  %v655 = vsel %vm68, %v650, 0.0
  %656 = vadd.xlane.f32.xlu0 %v655
  %v657 = vpop.xlane.xlu0 %656
  %v658 = vsel %vm442, %v651, 0.0
  %659 = vadd.xlane.f32.xlu0 %v658
  %v660 = vpop.xlane.xlu0 %659
  %v662 = vlaneseq
  %v663 = vshrl.u32 %v662, 7
  %v664 = vsub.s32 0, %v663
  %v665 = vrot.slane %v541, %v664
  %v667 = vadd.f32 %v654, %v665
  %v668 = vadd.f32 %v657, %v665
  %v669 = vadd.f32 %v660, %v665
  %vm670 = vcmp.gt.f32.partialorder %v532, 0.5
  %vm671 = vcmp.gt.f32.partialorder %v533, 0.5
  %vm672 = vcmp.gt.f32.partialorder %v534, 0.5
  %v673 = vsel %vm670, %v667, -1e+30
  %v674 = vsel %vm671, %v668, -1e+30
  %v675 = vsel %vm672, %v669, -1e+30
  %v676 = vsel %vm181, %v673, -inf
  %v677 = vsel %vm181, %v674, -inf
  %v678 = vsel %vm463, %v675, -inf
  %v679 = vmax.f32 %v676, %v677
  %v680 = vmax.f32 %v679, %v678
  %v681 = vrot.slane %v680, 4
  %v682 = vmax.f32 %v680, %v681
  %v683 = vrot.slane %v682, 2
  %v684 = vmax.f32 %v682, %v683
  %v685 = vrot.slane %v684, 1
  %v686 = vmax.f32 %v684, %v685
  %v687 = vsub.f32 %v673, %v686
  %v688 = vsub.f32 %v674, %v686
  %v689 = vsub.f32 %v675, %v686
  %v690 = vmul.f32 %v687, 1.442695
  %v691 = vpow.pop %v690
  %v692 = vmul.f32 %v688, 1.442695
  %v693 = vpow.pop %v692
  %v694 = vmul.f32 %v689, 1.442695
  %v695 = vpow.pop %v694
  %v696 = vsel %vm181, %v691, 0.0
  %v697 = vsel %vm181, %v693, 0.0
  %v698 = vadd.f32 %v696, %v697
  %v699 = vsel %vm463, %v695, 0.0
  %v700 = vadd.f32 %v698, %v699
  %v701 = vrot.slane %v700, 4
  %v702 = vadd.f32 %v700, %v701
  %v703 = vrot.slane %v702, 2
  %v704 = vadd.f32 %v702, %v703
  %v705 = vrot.slane %v704, 1
  %v706 = vadd.f32 %v704, %v705
  %v707 = vrcp.pop %v706
  %v708 = vmul.f32 %v691, %v707
  %v709 = vmul.f32 %v693, %v707
  %v710 = vmul.f32 %v695, %v707
  %712 = vset.pattern.permute.xlu0 0
  %713 = vperm.xlu0 %712, %v708
  %v714 = vpop.permute.xlu0 %713
  %717 = vset.pattern.permute.xlu0 0
  %718 = vperm.xlu0 %717, %v709
  %v719 = vpop.permute.xlu0 %718
  %722 = vset.pattern.permute.xlu0 0
  %723 = vperm.xlu0 %722, %v710
  %v724 = vpop.permute.xlu0 %723
  %v726 = vmul.f32 %v714, %v528
  %v727 = vmul.f32 %v719, %v529
  %v728 = vmul.f32 %v724, %v530
  %v729 = vsel %vm68, %v726, 0.0
  %v730 = vsel %vm68, %v727, 0.0
  %v731 = vadd.f32 %v729, %v730
  %v732 = vsel %vm442, %v728, 0.0
  %v733 = vadd.f32 %v731, %v732
  %v734 = vrot.slane %v733, 4
  %v735 = vadd.f32 %v733, %v734
  %v736 = vrot.slane %v735, 2
  %v737 = vadd.f32 %v735, %v736
  %v738 = vrot.slane %v737, 1
  %v739 = vadd.f32 %v737, %v738
  %740 = vst.msk [vmem:[%s14 + $0x1] sm:$0x1] %vm442, %v739
  // Predicated region
  $region58: #{forward.5} parent=0 // pred_check
    _
  $region59: #{forward.5} parent=0 // pred_check_branch
    %742 = sbr.rel (0) target = $region61
  $region60: #{forward.5} parent=0 // pred_region
    _
  $region61: #{forward.5} parent=0 // pred_fallthru
    _
  // Predicated region
  $region62: #{forward.5} parent=0 // pred_check
    _
  $region63: #{forward.5} parent=0 // pred_check_branch
    %744 = sbr.rel (0) target = $region65
  $region64: #{forward.5} parent=0 // pred_region
    _
  $region65: #{forward.5} parent=0 // pred_fallthru
    _

// kernel: forward.6
$region0: #{forward.6}
  #allocation0 [shape = 'u32[]', space=smem, size = 0x4, offset = 0x4, fixed_abs, tag = 'smem constant byte address 0x4 - core index']
  #allocation1 [shape = 'u32[144,128]{1,0:T(1,128)}', space=vmem, size = 0x12000, scoped, tag = 'internal scratch']
  %s0 = inlined_call_operand.vmem [shape: f32[2,3,32], index: 0, kind: input, shape index: {}]
  %s1 = inlined_call_operand.vmem [shape: f32[2,1], index: 1, kind: input, shape index: {}]
  %s2 = inlined_call_operand.vmem [shape: f32[32,64], index: 2, kind: input, shape index: {}]
  %s3 = inlined_call_operand.vmem [shape: f32[16,64], index: 3, kind: input, shape index: {}]
  %s4 = inlined_call_operand.vmem [shape: f32[1,64], index: 4, kind: input, shape index: {}]
  %s5 = inlined_call_operand.vmem [shape: f32[32,64], index: 5, kind: input, shape index: {}]
  %s6 = inlined_call_operand.vmem [shape: f32[16,64], index: 6, kind: input, shape index: {}]
  %s7 = inlined_call_operand.vmem [shape: f32[1,64], index: 7, kind: input, shape index: {}]
  %s8 = inlined_call_operand.vmem [shape: f32[2,32], index: 8, kind: output, shape index: {}]
  %s9 = sld [smem:[#allocation0]]
  $region42: #{forward.6} parent=0
    _
  %s11 = ssub.s32 1, %s9
  %s12 = scalar_select 0, %s11, %s9
  // Predicated region
  $region2: #{forward.6} parent=0 // pred_check
    _
  $region3: #{forward.6} parent=0 // pred_check_branch
    %14 = sbr.rel (0) target = $region5
  $region4: #{forward.6} parent=0 // pred_region
    _
  $region5: #{forward.6} parent=0 // pred_fallthru
    _
  // Predicated region
  $region6: #{forward.6} parent=0 // pred_check
    _
  $region7: #{forward.6} parent=0 // pred_check_branch
    %16 = sbr.rel (0) target = $region9
  $region8: #{forward.6} parent=0 // pred_region
    _
  $region9: #{forward.6} parent=0 // pred_fallthru
    _
  // Predicated region
  $region10: #{forward.6} parent=0 // pred_check
    _
  $region11: #{forward.6} parent=0 // pred_check_branch
    %18 = sbr.rel (0) target = $region13
  $region12: #{forward.6} parent=0 // pred_region
    _
  $region13: #{forward.6} parent=0 // pred_fallthru
    _
  // Predicated region
  $region14: #{forward.6} parent=0 // pred_check
    _
  $region15: #{forward.6} parent=0 // pred_check_branch
    %20 = sbr.rel (0) target = $region17
  $region16: #{forward.6} parent=0 // pred_region
    _
  $region17: #{forward.6} parent=0 // pred_fallthru
    _
  // Predicated region
  $region18: #{forward.6} parent=0 // pred_check
    _
  $region19: #{forward.6} parent=0 // pred_check_branch
    %22 = sbr.rel (0) target = $region21
  $region20: #{forward.6} parent=0 // pred_region
    _
  $region21: #{forward.6} parent=0 // pred_fallthru
    _
  // Predicated region
  $region22: #{forward.6} parent=0 // pred_check
    _
  $region23: #{forward.6} parent=0 // pred_check_branch
    %24 = sbr.rel (0) target = $region25
  $region24: #{forward.6} parent=0 // pred_region
    _
  $region25: #{forward.6} parent=0 // pred_fallthru
    _
  // Predicated region
  $region26: #{forward.6} parent=0 // pred_check
    _
  $region27: #{forward.6} parent=0 // pred_check_branch
    %26 = sbr.rel (0) target = $region29
  $region28: #{forward.6} parent=0 // pred_region
    _
  $region29: #{forward.6} parent=0 // pred_fallthru
    _
  // Predicated region
  $region30: #{forward.6} parent=0 // pred_check
    _
  $region31: #{forward.6} parent=0 // pred_check_branch
    %28 = sbr.rel (0) target = $region33
  $region32: #{forward.6} parent=0 // pred_region
    _
  $region33: #{forward.6} parent=0 // pred_fallthru
    _
  %v29 = vld [vmem:[%s0] sm:$0x7]
  %v30 = vld [vmem:[%s0 + $0x4] sm:$0x7]
  %v31 = vld [vmem:[%s1] sm:$0x3]
  %v32 = vld [vmem:[%s2] sm:$0xff]
  %v33 = vld [vmem:[%s2 + $0x8] sm:$0xff]
  %v34 = vld [vmem:[%s2 + $0x10] sm:$0xff]
  %v35 = vld [vmem:[%s2 + $0x18] sm:$0xff]
  %v36 = vld [vmem:[%s3] sm:$0xff]
  %v37 = vld [vmem:[%s3 + $0x8] sm:$0xff]
  %v38 = vld [vmem:[%s4] sm:$0x1]
  %v39 = vld [vmem:[%s5] sm:$0xff]
  %v40 = vld [vmem:[%s5 + $0x8] sm:$0xff]
  %v41 = vld [vmem:[%s5 + $0x10] sm:$0xff]
  %v42 = vld [vmem:[%s5 + $0x18] sm:$0xff]
  %v43 = vld [vmem:[%s6] sm:$0xff]
  %v44 = vld [vmem:[%s6 + $0x8] sm:$0xff]
  %v45 = vld [vmem:[%s7] sm:$0x1]
  %vm46 = vcmp.gt.f32.partialorder %v31, 0.0
  %vm47 = vcmp.gt.f32.partialorder %v31, 2.0
  %vm48 = vcmask 130048
  %v50 = vsel %vm48, 0.0, 0
  %52 = vmatprep.subr.mxu0 0.0
  %53 = vmatpush1.msra.mxu0 %v36
  %54 = vmatprep.subr.mxu0 0.0
  %55 = vmatpush1.msra.mxu0 %v37
  %56 = vmatprep.subr.mxu0 0.0
  %57 = vmatpush1.msra.mxu0 0.0
  %58 = vmatprep.subr.mxu0 0.0
  %59 = vmatpush1.msra.mxu0 0.0
  %60 = vmatprep.subr.mxu0 0.0
  %61 = vmatpush1.msra.mxu0 0.0
  %62 = vmatprep.subr.mxu0 0.0
  %63 = vmatpush1.msra.mxu0 0.0
  %64 = vmatprep.subr.mxu0 0.0
  %65 = vmatpush1.msra.mxu0 0.0
  %66 = vmatprep.subr.mxu0 0.0
  %67 = vmatpush1.msra.mxu0 0.0
  %68 = vmatprep.subr.mxu0 0.0
  %69 = vmatpush1.msra.mxu0 0.0
  %70 = vmatprep.subr.mxu0 0.0
  %71 = vmatpush1.msra.mxu0 0.0
  %72 = vmatprep.subr.mxu0 0.0
  %73 = vmatpush1.msra.mxu0 0.0
  %74 = vmatprep.subr.mxu0 0.0
  %75 = vmatpush1.msra.mxu0 0.0
  %76 = vmatprep.subr.mxu0 0.0
  %77 = vmatpush1.msra.mxu0 0.0
  %78 = vmatprep.subr.mxu0 0.0
  %79 = vmatpush1.msra.mxu0 0.0
  %80 = vmatprep.subr.mxu0 0.0
  %81 = vmatpush1.msra.mxu0 0.0
  %82 = vmatprep.subr.mxu0 0.0
  %83 = vmatpush1.msra.mxu0 0.0
  %84 = vmatprep.subr.mxu0 0.0
  %85 = vmatpush1.msra.mxu0 0.0
  %86 = vmatprep.subr.mxu0 0.0
  %87 = vmatpush1.msra.mxu0 0.0
  %88 = vmatprep.subr.mxu0 0.0
  %89 = vmatpush1.msra.mxu0 0.0
  %90 = vmatprep.subr.mxu0 0.0
  %91 = vmatpush1.msra.mxu0 0.0
  %92 = vmatprep.subr.mxu0 0.0
  %93 = vmatpush1.msra.mxu0 0.0
  %94 = vmatprep.subr.mxu0 0.0
  %95 = vmatpush1.msra.mxu0 0.0
  %96 = vmatprep.subr.mxu0 0.0
  %97 = vmatpush1.msra.mxu0 0.0
  %98 = vmatprep.subr.mxu0 0.0
  %99 = vmatpush1.msra.mxu0 0.0
  %100 = vmatprep.subr.mxu0 0.0
  %101 = vmatpush1.msra.mxu0 0.0
  %102 = vmatprep.subr.mxu0 0.0
  %103 = vmatpush1.msra.mxu0 0.0
  %104 = vmatprep.subr.mxu0 0.0
  %105 = vmatpush1.msra.mxu0 0.0
  %106 = vmatprep.subr.mxu0 0.0
  %107 = vmatpush1.msra.mxu0 0.0
  %108 = vmatprep.subr.mxu0 0.0
  %109 = vmatpush1.msra.mxu0 0.0
  %110 = vmatprep.subr.mxu0 0.0
  %111 = vmatpush1.msra.mxu0 0.0
  %112 = vmatprep.subr.mxu0 0.0
  %113 = vmatpush1.msra.mxu0 0.0
  %114 = vmatprep.subr.mxu0 0.0
  %115 = vmatpush1.msra.mxu0 0.0
  %116 = vmatprep.mubr.f32.mxu0 0.0
  %117 = vmatmul.mubr.f32.gmra.mrb[0].mxu0 %v50
  %v118 = vpop.f32.mrb[0].mxu0
  %v119 = vadd.f32 0.0, %v118
  %v120 = vpop.f32.mrb[0].mxu0
  %121 = vdwg.mxu0
  %v124 = vrot.slane %v30, 7
  %vm125 = vcmask 1041409
  %v126 = vsel %vm125, %v124, %v29
  %vm127 = vcmask 261120
  %v128 = vsel %vm127, %v126, 0
  %130 = vmatprep.subr.mxu0 0.0
  %131 = vmatpush1.msra.mxu0 %v32
  %132 = vmatprep.subr.mxu0 0.0
  %133 = vmatpush1.msra.mxu0 %v33
  %134 = vmatprep.subr.mxu0 0.0
  %135 = vmatpush1.msra.mxu0 %v34
  %136 = vmatprep.subr.mxu0 0.0
  %137 = vmatpush1.msra.mxu0 %v35
  %138 = vmatprep.subr.mxu0 0.0
  %139 = vmatpush1.msra.mxu0 0.0
  %140 = vmatprep.subr.mxu0 0.0
  %141 = vmatpush1.msra.mxu0 0.0
  %142 = vmatprep.subr.mxu0 0.0
  %143 = vmatpush1.msra.mxu0 0.0
  %144 = vmatprep.subr.mxu0 0.0
  %145 = vmatpush1.msra.mxu0 0.0
  %146 = vmatprep.subr.mxu0 0.0
  %147 = vmatpush1.msra.mxu0 0.0
  %148 = vmatprep.subr.mxu0 0.0
  %149 = vmatpush1.msra.mxu0 0.0
  %150 = vmatprep.subr.mxu0 0.0
  %151 = vmatpush1.msra.mxu0 0.0
  %152 = vmatprep.subr.mxu0 0.0
  %153 = vmatpush1.msra.mxu0 0.0
  %154 = vmatprep.subr.mxu0 0.0
  %155 = vmatpush1.msra.mxu0 0.0
  %156 = vmatprep.subr.mxu0 0.0
  %157 = vmatpush1.msra.mxu0 0.0
  %158 = vmatprep.subr.mxu0 0.0
  %159 = vmatpush1.msra.mxu0 0.0
  %160 = vmatprep.subr.mxu0 0.0
  %161 = vmatpush1.msra.mxu0 0.0
  %162 = vmatprep.subr.mxu0 0.0
  %163 = vmatpush1.msra.mxu0 0.0
  %164 = vmatprep.subr.mxu0 0.0
  %165 = vmatpush1.msra.mxu0 0.0
  %166 = vmatprep.subr.mxu0 0.0
  %167 = vmatpush1.msra.mxu0 0.0
  %168 = vmatprep.subr.mxu0 0.0
  %169 = vmatpush1.msra.mxu0 0.0
  %170 = vmatprep.subr.mxu0 0.0
  %171 = vmatpush1.msra.mxu0 0.0
  %172 = vmatprep.subr.mxu0 0.0
  %173 = vmatpush1.msra.mxu0 0.0
  %174 = vmatprep.subr.mxu0 0.0
  %175 = vmatpush1.msra.mxu0 0.0
  %176 = vmatprep.subr.mxu0 0.0
  %177 = vmatpush1.msra.mxu0 0.0
  %178 = vmatprep.subr.mxu0 0.0
  %179 = vmatpush1.msra.mxu0 0.0
  %180 = vmatprep.subr.mxu0 0.0
  %181 = vmatpush1.msra.mxu0 0.0
  %182 = vmatprep.subr.mxu0 0.0
  %183 = vmatpush1.msra.mxu0 0.0
  %184 = vmatprep.subr.mxu0 0.0
  %185 = vmatpush1.msra.mxu0 0.0
  %186 = vmatprep.subr.mxu0 0.0
  %187 = vmatpush1.msra.mxu0 0.0
  %188 = vmatprep.subr.mxu0 0.0
  %189 = vmatpush1.msra.mxu0 0.0
  %190 = vmatprep.subr.mxu0 0.0
  %191 = vmatpush1.msra.mxu0 0.0
  %192 = vmatprep.subr.mxu0 0.0
  %193 = vmatpush1.msra.mxu0 0.0
  %194 = vmatprep.mubr.f32.mxu0 0.0
  %195 = vmatmul.mubr.f32.gmra.mrb[0].mxu0 %v128
  %v196 = vpop.f32.mrb[0].mxu0
  %v197 = vadd.f32 %v119, %v196
  %v198 = vpop.f32.mrb[0].mxu0
  %199 = vdwg.mxu0
  %v201 = vlaneseq
  %v202 = vshrl.u32 %v201, 7
  %v203 = vsub.s32 0, %v202
  %v204 = vrot.slane %v38, %v203
  %v206 = vadd.f32 %v197, %v204
  %v207 = vxor.u32 %v206, 2147483648
  %v208 = vmul.f32 %v207, 1.442695
  %v209 = vpow.pop %v208
  %v210 = vadd.f32 %v209, 1.0
  %v211 = vrcp.pop %v210
  %v212 = vmul.f32 1.0, %v211
  %v213 = vtanh.pop %v206
  %v214 = vmul.f32 %v212, 0.0
  %216 = vrot.lane.b32.xlu0 %v213, 96
  %v217 = vpop.permute.xlu0 %216
  %v219 = vmul.f32 %v212, %v217
  %221 = vrot.lane.b32.xlu0 %v219, 16
  %v222 = vpop.permute.xlu0 %221
  %v224 = vadd.f32 %v214, %v222
  %v225 = vtanh.pop %v224
  %227 = vrot.lane.b32.xlu0 %v225, 32
  %v228 = vpop.permute.xlu0 %227
  %v230 = vmul.f32 %v212, %v228
  %v231 = vsel %vm46, 1, 0
  %232 = vset.pattern.permute.xlu0 0
  %233 = vperm.xlu0 %232, %v231
  %v234 = vpop.permute.xlu0 %233
  %vm235 = vcmp.eq.s32.totalorder %v234, 1
  %v236 = vsel %vm235, %v230, 0.0
  %v237 = vsel %vm235, %v224, 0.0
  %238 = vmatprep.subr.mxu0 0.0
  %239 = vmatpush1.msra.mxu0 %v43
  %240 = vmatprep.subr.mxu0 0.0
  %241 = vmatpush1.msra.mxu0 %v44
  %242 = vmatprep.subr.mxu0 0.0
  %243 = vmatpush1.msra.mxu0 0.0
  %244 = vmatprep.subr.mxu0 0.0
  %245 = vmatpush1.msra.mxu0 0.0
  %246 = vmatprep.subr.mxu0 0.0
  %247 = vmatpush1.msra.mxu0 0.0
  %248 = vmatprep.subr.mxu0 0.0
  %249 = vmatpush1.msra.mxu0 0.0
  %250 = vmatprep.subr.mxu0 0.0
  %251 = vmatpush1.msra.mxu0 0.0
  %252 = vmatprep.subr.mxu0 0.0
  %253 = vmatpush1.msra.mxu0 0.0
  %254 = vmatprep.subr.mxu0 0.0
  %255 = vmatpush1.msra.mxu0 0.0
  %256 = vmatprep.subr.mxu0 0.0
  %257 = vmatpush1.msra.mxu0 0.0
  %258 = vmatprep.subr.mxu0 0.0
  %259 = vmatpush1.msra.mxu0 0.0
  %260 = vmatprep.subr.mxu0 0.0
  %261 = vmatpush1.msra.mxu0 0.0
  %262 = vmatprep.subr.mxu0 0.0
  %263 = vmatpush1.msra.mxu0 0.0
  %264 = vmatprep.subr.mxu0 0.0
  %265 = vmatpush1.msra.mxu0 0.0
  %266 = vmatprep.subr.mxu0 0.0
  %267 = vmatpush1.msra.mxu0 0.0
  %268 = vmatprep.subr.mxu0 0.0
  %269 = vmatpush1.msra.mxu0 0.0
  %270 = vmatprep.subr.mxu0 0.0
  %271 = vmatpush1.msra.mxu0 0.0
  %272 = vmatprep.subr.mxu0 0.0
  %273 = vmatpush1.msra.mxu0 0.0
  %274 = vmatprep.subr.mxu0 0.0
  %275 = vmatpush1.msra.mxu0 0.0
  %276 = vmatprep.subr.mxu0 0.0
  %277 = vmatpush1.msra.mxu0 0.0
  %278 = vmatprep.subr.mxu0 0.0
  %279 = vmatpush1.msra.mxu0 0.0
  %280 = vmatprep.subr.mxu0 0.0
  %281 = vmatpush1.msra.mxu0 0.0
  %282 = vmatprep.subr.mxu0 0.0
  %283 = vmatpush1.msra.mxu0 0.0
  %284 = vmatprep.subr.mxu0 0.0
  %285 = vmatpush1.msra.mxu0 0.0
  %286 = vmatprep.subr.mxu0 0.0
  %287 = vmatpush1.msra.mxu0 0.0
  %288 = vmatprep.subr.mxu0 0.0
  %289 = vmatpush1.msra.mxu0 0.0
  %290 = vmatprep.subr.mxu0 0.0
  %291 = vmatpush1.msra.mxu0 0.0
  %292 = vmatprep.subr.mxu0 0.0
  %293 = vmatpush1.msra.mxu0 0.0
  %294 = vmatprep.subr.mxu0 0.0
  %295 = vmatpush1.msra.mxu0 0.0
  %296 = vmatprep.subr.mxu0 0.0
  %297 = vmatpush1.msra.mxu0 0.0
  %298 = vmatprep.subr.mxu0 0.0
  %299 = vmatpush1.msra.mxu0 0.0
  %300 = vmatprep.subr.mxu0 0.0
  %301 = vmatpush1.msra.mxu0 0.0
  %302 = vmatprep.mubr.f32.mxu0 0.0
  %303 = vmatmul.mubr.f32.gmra.mrb[0].mxu0 %v50
  %v304 = vpop.f32.mrb[0].mxu0
  %v305 = vadd.f32 0.0, %v304
  %v306 = vpop.f32.mrb[0].mxu0
  %307 = vdwg.mxu0
  %v308 = vrot.slane %v29, 2
  %v309 = vrot.slane %v30, 1
  %v310 = vsel %vm125, %v309, %v308
  %v311 = vsel %vm127, %v310, 0
  %313 = vmatprep.subr.mxu0 0.0
  %314 = vmatpush1.msra.mxu0 %v39
  %315 = vmatprep.subr.mxu0 0.0
  %316 = vmatpush1.msra.mxu0 %v40
  %317 = vmatprep.subr.mxu0 0.0
  %318 = vmatpush1.msra.mxu0 %v41
  %319 = vmatprep.subr.mxu0 0.0
  %320 = vmatpush1.msra.mxu0 %v42
  %321 = vmatprep.subr.mxu0 0.0
  %322 = vmatpush1.msra.mxu0 0.0
  %323 = vmatprep.subr.mxu0 0.0
  %324 = vmatpush1.msra.mxu0 0.0
  %325 = vmatprep.subr.mxu0 0.0
  %326 = vmatpush1.msra.mxu0 0.0
  %327 = vmatprep.subr.mxu0 0.0
  %328 = vmatpush1.msra.mxu0 0.0
  %329 = vmatprep.subr.mxu0 0.0
  %330 = vmatpush1.msra.mxu0 0.0
  %331 = vmatprep.subr.mxu0 0.0
  %332 = vmatpush1.msra.mxu0 0.0
  %333 = vmatprep.subr.mxu0 0.0
  %334 = vmatpush1.msra.mxu0 0.0
  %335 = vmatprep.subr.mxu0 0.0
  %336 = vmatpush1.msra.mxu0 0.0
  %337 = vmatprep.subr.mxu0 0.0
  %338 = vmatpush1.msra.mxu0 0.0
  %339 = vmatprep.subr.mxu0 0.0
  %340 = vmatpush1.msra.mxu0 0.0
  %341 = vmatprep.subr.mxu0 0.0
  %342 = vmatpush1.msra.mxu0 0.0
  %343 = vmatprep.subr.mxu0 0.0
  %344 = vmatpush1.msra.mxu0 0.0
  %345 = vmatprep.subr.mxu0 0.0
  %346 = vmatpush1.msra.mxu0 0.0
  %347 = vmatprep.subr.mxu0 0.0
  %348 = vmatpush1.msra.mxu0 0.0
  %349 = vmatprep.subr.mxu0 0.0
  %350 = vmatpush1.msra.mxu0 0.0
  %351 = vmatprep.subr.mxu0 0.0
  %352 = vmatpush1.msra.mxu0 0.0
  %353 = vmatprep.subr.mxu0 0.0
  %354 = vmatpush1.msra.mxu0 0.0
  %355 = vmatprep.subr.mxu0 0.0
  %356 = vmatpush1.msra.mxu0 0.0
  %357 = vmatprep.subr.mxu0 0.0
  %358 = vmatpush1.msra.mxu0 0.0
  %359 = vmatprep.subr.mxu0 0.0
  %360 = vmatpush1.msra.mxu0 0.0
  %361 = vmatprep.subr.mxu0 0.0
  %362 = vmatpush1.msra.mxu0 0.0
  %363 = vmatprep.subr.mxu0 0.0
  %364 = vmatpush1.msra.mxu0 0.0
  %365 = vmatprep.subr.mxu0 0.0
  %366 = vmatpush1.msra.mxu0 0.0
  %367 = vmatprep.subr.mxu0 0.0
  %368 = vmatpush1.msra.mxu0 0.0
  %369 = vmatprep.subr.mxu0 0.0
  %370 = vmatpush1.msra.mxu0 0.0
  %371 = vmatprep.subr.mxu0 0.0
  %372 = vmatpush1.msra.mxu0 0.0
  %373 = vmatprep.subr.mxu0 0.0
  %374 = vmatpush1.msra.mxu0 0.0
  %375 = vmatprep.subr.mxu0 0.0
  %376 = vmatpush1.msra.mxu0 0.0
  %377 = vmatprep.mubr.f32.mxu0 0.0
  %378 = vmatmul.mubr.f32.gmra.mrb[0].mxu0 %v311
  %v379 = vpop.f32.mrb[0].mxu0
  %v380 = vadd.f32 %v305, %v379
  %v381 = vpop.f32.mrb[0].mxu0
  %382 = vdwg.mxu0
  %v384 = vlaneseq
  %v385 = vshrl.u32 %v384, 7
  %v386 = vsub.s32 0, %v385
  %v387 = vrot.slane %v45, %v386
  %v389 = vadd.f32 %v380, %v387
  %v390 = vxor.u32 %v389, 2147483648
  %v391 = vmul.f32 %v390, 1.442695
  %v392 = vpow.pop %v391
  %v393 = vadd.f32 %v392, 1.0
  %v394 = vrcp.pop %v393
  %v395 = vmul.f32 1.0, %v394
  %v396 = vtanh.pop %v389
  %v397 = vmul.f32 %v395, 0.0
  %399 = vrot.lane.b32.xlu0 %v396, 96
  %v400 = vpop.permute.xlu0 %399
  %v402 = vmul.f32 %v395, %v400
  %404 = vrot.lane.b32.xlu0 %v402, 16
  %v405 = vpop.permute.xlu0 %404
  %v407 = vadd.f32 %v397, %v405
  %v408 = vtanh.pop %v407
  %410 = vrot.lane.b32.xlu0 %v408, 32
  %v411 = vpop.permute.xlu0 %410
  %v413 = vmul.f32 %v395, %v411
  %v414 = vsel %vm47, 1, 0
  %415 = vset.pattern.permute.xlu0 0
  %416 = vperm.xlu0 %415, %v414
  %v417 = vpop.permute.xlu0 %416
  %vm418 = vcmp.eq.s32.totalorder %v417, 1
  %v419 = vsel %vm418, %v413, 0.0
  %v420 = vsel %vm418, %v407, 0.0
  %vm421 = vcmp.gt.f32.partialorder %v31, 1.0
  %423 = vrot.lane.b32.xlu0 %v236, 80
  %v424 = vpop.permute.xlu0 %423
  %v425 = vsel %vm48, %v424, 0
  %427 = vmatprep.subr.mxu0 0.0
  %428 = vmatpush1.msra.mxu0 %v36
  %429 = vmatprep.subr.mxu0 0.0
  %430 = vmatpush1.msra.mxu0 %v37
  %431 = vmatprep.subr.mxu0 0.0
  %432 = vmatpush1.msra.mxu0 0.0
  %433 = vmatprep.subr.mxu0 0.0
  %434 = vmatpush1.msra.mxu0 0.0
  %435 = vmatprep.subr.mxu0 0.0
  %436 = vmatpush1.msra.mxu0 0.0
  %437 = vmatprep.subr.mxu0 0.0
  %438 = vmatpush1.msra.mxu0 0.0
  %439 = vmatprep.subr.mxu0 0.0
  %440 = vmatpush1.msra.mxu0 0.0
  %441 = vmatprep.subr.mxu0 0.0
  %442 = vmatpush1.msra.mxu0 0.0
  %443 = vmatprep.subr.mxu0 0.0
  %444 = vmatpush1.msra.mxu0 0.0
  %445 = vmatprep.subr.mxu0 0.0
  %446 = vmatpush1.msra.mxu0 0.0
  %447 = vmatprep.subr.mxu0 0.0
  %448 = vmatpush1.msra.mxu0 0.0
  %449 = vmatprep.subr.mxu0 0.0
  %450 = vmatpush1.msra.mxu0 0.0
  %451 = vmatprep.subr.mxu0 0.0
  %452 = vmatpush1.msra.mxu0 0.0
  %453 = vmatprep.subr.mxu0 0.0
  %454 = vmatpush1.msra.mxu0 0.0
  %455 = vmatprep.subr.mxu0 0.0
  %456 = vmatpush1.msra.mxu0 0.0
  %457 = vmatprep.subr.mxu0 0.0
  %458 = vmatpush1.msra.mxu0 0.0
  %459 = vmatprep.subr.mxu0 0.0
  %460 = vmatpush1.msra.mxu0 0.0
  %461 = vmatprep.subr.mxu0 0.0
  %462 = vmatpush1.msra.mxu0 0.0
  %463 = vmatprep.subr.mxu0 0.0
  %464 = vmatpush1.msra.mxu0 0.0
  %465 = vmatprep.subr.mxu0 0.0
  %466 = vmatpush1.msra.mxu0 0.0
  %467 = vmatprep.subr.mxu0 0.0
  %468 = vmatpush1.msra.mxu0 0.0
  %469 = vmatprep.subr.mxu0 0.0
  %470 = vmatpush1.msra.mxu0 0.0
  %471 = vmatprep.subr.mxu0 0.0
  %472 = vmatpush1.msra.mxu0 0.0
  %473 = vmatprep.subr.mxu0 0.0
  %474 = vmatpush1.msra.mxu0 0.0
  %475 = vmatprep.subr.mxu0 0.0
  %476 = vmatpush1.msra.mxu0 0.0
  %477 = vmatprep.subr.mxu0 0.0
  %478 = vmatpush1.msra.mxu0 0.0
  %479 = vmatprep.subr.mxu0 0.0
  %480 = vmatpush1.msra.mxu0 0.0
  %481 = vmatprep.subr.mxu0 0.0
  %482 = vmatpush1.msra.mxu0 0.0
  %483 = vmatprep.subr.mxu0 0.0
  %484 = vmatpush1.msra.mxu0 0.0
  %485 = vmatprep.subr.mxu0 0.0
  %486 = vmatpush1.msra.mxu0 0.0
  %487 = vmatprep.subr.mxu0 0.0
  %488 = vmatpush1.msra.mxu0 0.0
  %489 = vmatprep.subr.mxu0 0.0
  %490 = vmatpush1.msra.mxu0 0.0
  %491 = vmatprep.mubr.f32.mxu0 0.0
  %492 = vmatmul.mubr.f32.gmra.mrb[0].mxu0 %v425
  %v493 = vpop.f32.mrb[0].mxu0
  %v494 = vadd.f32 0.0, %v493
  %v495 = vpop.f32.mrb[0].mxu0
  %496 = vdwg.mxu0
  %v497 = vrot.slane %v29, 1
  %v498 = vsel %vm125, %v30, %v497
  %v499 = vsel %vm127, %v498, 0
  %501 = vmatprep.subr.mxu0 0.0
  %502 = vmatpush1.msra.mxu0 %v32
  %503 = vmatprep.subr.mxu0 0.0
  %504 = vmatpush1.msra.mxu0 %v33
  %505 = vmatprep.subr.mxu0 0.0
  %506 = vmatpush1.msra.mxu0 %v34
  %507 = vmatprep.subr.mxu0 0.0
  %508 = vmatpush1.msra.mxu0 %v35
  %509 = vmatprep.subr.mxu0 0.0
  %510 = vmatpush1.msra.mxu0 0.0
  %511 = vmatprep.subr.mxu0 0.0
  %512 = vmatpush1.msra.mxu0 0.0
  %513 = vmatprep.subr.mxu0 0.0
  %514 = vmatpush1.msra.mxu0 0.0
  %515 = vmatprep.subr.mxu0 0.0
  %516 = vmatpush1.msra.mxu0 0.0
  %517 = vmatprep.subr.mxu0 0.0
  %518 = vmatpush1.msra.mxu0 0.0
  %519 = vmatprep.subr.mxu0 0.0
  %520 = vmatpush1.msra.mxu0 0.0
  %521 = vmatprep.subr.mxu0 0.0
  %522 = vmatpush1.msra.mxu0 0.0
  %523 = vmatprep.subr.mxu0 0.0
  %524 = vmatpush1.msra.mxu0 0.0
  %525 = vmatprep.subr.mxu0 0.0
  %526 = vmatpush1.msra.mxu0 0.0
  %527 = vmatprep.subr.mxu0 0.0
  %528 = vmatpush1.msra.mxu0 0.0
  %529 = vmatprep.subr.mxu0 0.0
  %530 = vmatpush1.msra.mxu0 0.0
  %531 = vmatprep.subr.mxu0 0.0
  %532 = vmatpush1.msra.mxu0 0.0
  %533 = vmatprep.subr.mxu0 0.0
  %534 = vmatpush1.msra.mxu0 0.0
  %535 = vmatprep.subr.mxu0 0.0
  %536 = vmatpush1.msra.mxu0 0.0
  %537 = vmatprep.subr.mxu0 0.0
  %538 = vmatpush1.msra.mxu0 0.0
  %539 = vmatprep.subr.mxu0 0.0
  %540 = vmatpush1.msra.mxu0 0.0
  %541 = vmatprep.subr.mxu0 0.0
  %542 = vmatpush1.msra.mxu0 0.0
  %543 = vmatprep.subr.mxu0 0.0
  %544 = vmatpush1.msra.mxu0 0.0
  %545 = vmatprep.subr.mxu0 0.0
  %546 = vmatpush1.msra.mxu0 0.0
  %547 = vmatprep.subr.mxu0 0.0
  %548 = vmatpush1.msra.mxu0 0.0
  %549 = vmatprep.subr.mxu0 0.0
  %550 = vmatpush1.msra.mxu0 0.0
  %551 = vmatprep.subr.mxu0 0.0
  %552 = vmatpush1.msra.mxu0 0.0
  %553 = vmatprep.subr.mxu0 0.0
  %554 = vmatpush1.msra.mxu0 0.0
  %555 = vmatprep.subr.mxu0 0.0
  %556 = vmatpush1.msra.mxu0 0.0
  %557 = vmatprep.subr.mxu0 0.0
  %558 = vmatpush1.msra.mxu0 0.0
  %559 = vmatprep.subr.mxu0 0.0
  %560 = vmatpush1.msra.mxu0 0.0
  %561 = vmatprep.subr.mxu0 0.0
  %562 = vmatpush1.msra.mxu0 0.0
  %563 = vmatprep.subr.mxu0 0.0
  %564 = vmatpush1.msra.mxu0 0.0
  %565 = vmatprep.mubr.f32.mxu0 0.0
  %566 = vmatmul.mubr.f32.gmra.mrb[0].mxu0 %v499
  %v567 = vpop.f32.mrb[0].mxu0
  %v568 = vadd.f32 %v494, %v567
  %v569 = vpop.f32.mrb[0].mxu0
  %570 = vdwg.mxu0
  %v571 = vadd.f32 %v568, %v204
  %v572 = vxor.u32 %v571, 2147483648
  %v573 = vmul.f32 %v572, 1.442695
  %v574 = vpow.pop %v573
  %v575 = vadd.f32 %v574, 1.0
  %v576 = vrcp.pop %v575
  %v577 = vmul.f32 1.0, %v576
  %v578 = vtanh.pop %v571
  %v579 = vmul.f32 %v577, %v237
  %581 = vrot.lane.b32.xlu0 %v578, 96
  %v582 = vpop.permute.xlu0 %581
  %v584 = vmul.f32 %v577, %v582
  %586 = vrot.lane.b32.xlu0 %v584, 16
  %v587 = vpop.permute.xlu0 %586
  %v589 = vadd.f32 %v579, %v587
  %v590 = vtanh.pop %v589
  %592 = vrot.lane.b32.xlu0 %v590, 32
  %v593 = vpop.permute.xlu0 %592
  %v595 = vmul.f32 %v577, %v593
  %v596 = vsel %vm421, 1, 0
  %597 = vset.pattern.permute.xlu0 0
  %598 = vperm.xlu0 %597, %v596
  %v599 = vpop.permute.xlu0 %598
  %vm600 = vcmp.eq.s32.totalorder %v599, 1
  %v601 = vsel %vm600, %v595, %v236
  %v602 = vsel %vm600, %v589, %v237
  %604 = vrot.lane.b32.xlu0 %v419, 80
  %v605 = vpop.permute.xlu0 %604
  %v606 = vsel %vm48, %v605, 0
  %608 = vmatprep.subr.mxu0 0.0
  %609 = vmatpush1.msra.mxu0 %v43
  %610 = vmatprep.subr.mxu0 0.0
  %611 = vmatpush1.msra.mxu0 %v44
  %612 = vmatprep.subr.mxu0 0.0
  %613 = vmatpush1.msra.mxu0 0.0
  %614 = vmatprep.subr.mxu0 0.0
  %615 = vmatpush1.msra.mxu0 0.0
  %616 = vmatprep.subr.mxu0 0.0
  %617 = vmatpush1.msra.mxu0 0.0
  %618 = vmatprep.subr.mxu0 0.0
  %619 = vmatpush1.msra.mxu0 0.0
  %620 = vmatprep.subr.mxu0 0.0
  %621 = vmatpush1.msra.mxu0 0.0
  %622 = vmatprep.subr.mxu0 0.0
  %623 = vmatpush1.msra.mxu0 0.0
  %624 = vmatprep.subr.mxu0 0.0
  %625 = vmatpush1.msra.mxu0 0.0
  %626 = vmatprep.subr.mxu0 0.0
  %627 = vmatpush1.msra.mxu0 0.0
  %628 = vmatprep.subr.mxu0 0.0
  %629 = vmatpush1.msra.mxu0 0.0
  %630 = vmatprep.subr.mxu0 0.0
  %631 = vmatpush1.msra.mxu0 0.0
  %632 = vmatprep.subr.mxu0 0.0
  %633 = vmatpush1.msra.mxu0 0.0
  %634 = vmatprep.subr.mxu0 0.0
  %635 = vmatpush1.msra.mxu0 0.0
  %636 = vmatprep.subr.mxu0 0.0
  %637 = vmatpush1.msra.mxu0 0.0
  %638 = vmatprep.subr.mxu0 0.0
  %639 = vmatpush1.msra.mxu0 0.0
  %640 = vmatprep.subr.mxu0 0.0
  %641 = vmatpush1.msra.mxu0 0.0
  %642 = vmatprep.subr.mxu0 0.0
  %643 = vmatpush1.msra.mxu0 0.0
  %644 = vmatprep.subr.mxu0 0.0
  %645 = vmatpush1.msra.mxu0 0.0
  %646 = vmatprep.subr.mxu0 0.0
  %647 = vmatpush1.msra.mxu0 0.0
  %648 = vmatprep.subr.mxu0 0.0
  %649 = vmatpush1.msra.mxu0 0.0
  %650 = vmatprep.subr.mxu0 0.0
  %651 = vmatpush1.msra.mxu0 0.0
  %652 = vmatprep.subr.mxu0 0.0
  %653 = vmatpush1.msra.mxu0 0.0
  %654 = vmatprep.subr.mxu0 0.0
  %655 = vmatpush1.msra.mxu0 0.0
  %656 = vmatprep.subr.mxu0 0.0
  %657 = vmatpush1.msra.mxu0 0.0
  %658 = vmatprep.subr.mxu0 0.0
  %659 = vmatpush1.msra.mxu0 0.0
  %660 = vmatprep.subr.mxu0 0.0
  %661 = vmatpush1.msra.mxu0 0.0
  %662 = vmatprep.subr.mxu0 0.0
  %663 = vmatpush1.msra.mxu0 0.0
  %664 = vmatprep.subr.mxu0 0.0
  %665 = vmatpush1.msra.mxu0 0.0
  %666 = vmatprep.subr.mxu0 0.0
  %667 = vmatpush1.msra.mxu0 0.0
  %668 = vmatprep.subr.mxu0 0.0
  %669 = vmatpush1.msra.mxu0 0.0
  %670 = vmatprep.subr.mxu0 0.0
  %671 = vmatpush1.msra.mxu0 0.0
  %672 = vmatprep.mubr.f32.mxu0 0.0
  %673 = vmatmul.mubr.f32.gmra.mrb[0].mxu0 %v606
  %v674 = vpop.f32.mrb[0].mxu0
  %v675 = vadd.f32 0.0, %v674
  %v676 = vpop.f32.mrb[0].mxu0
  %677 = vdwg.mxu0
  %678 = vmatprep.subr.mxu0 0.0
  %679 = vmatpush1.msra.mxu0 %v39
  %680 = vmatprep.subr.mxu0 0.0
  %681 = vmatpush1.msra.mxu0 %v40
  %682 = vmatprep.subr.mxu0 0.0
  %683 = vmatpush1.msra.mxu0 %v41
  %684 = vmatprep.subr.mxu0 0.0
  %685 = vmatpush1.msra.mxu0 %v42
  %686 = vmatprep.subr.mxu0 0.0
  %687 = vmatpush1.msra.mxu0 0.0
  %688 = vmatprep.subr.mxu0 0.0
  %689 = vmatpush1.msra.mxu0 0.0
  %690 = vmatprep.subr.mxu0 0.0
  %691 = vmatpush1.msra.mxu0 0.0
  %692 = vmatprep.subr.mxu0 0.0
  %693 = vmatpush1.msra.mxu0 0.0
  %694 = vmatprep.subr.mxu0 0.0
  %695 = vmatpush1.msra.mxu0 0.0
  %696 = vmatprep.subr.mxu0 0.0
  %697 = vmatpush1.msra.mxu0 0.0
  %698 = vmatprep.subr.mxu0 0.0
  %699 = vmatpush1.msra.mxu0 0.0
  %700 = vmatprep.subr.mxu0 0.0
  %701 = vmatpush1.msra.mxu0 0.0
  %702 = vmatprep.subr.mxu0 0.0
  %703 = vmatpush1.msra.mxu0 0.0
  %704 = vmatprep.subr.mxu0 0.0
  %705 = vmatpush1.msra.mxu0 0.0
  %706 = vmatprep.subr.mxu0 0.0
  %707 = vmatpush1.msra.mxu0 0.0
  %708 = vmatprep.subr.mxu0 0.0
  %709 = vmatpush1.msra.mxu0 0.0
  %710 = vmatprep.subr.mxu0 0.0
  %711 = vmatpush1.msra.mxu0 0.0
  %712 = vmatprep.subr.mxu0 0.0
  %713 = vmatpush1.msra.mxu0 0.0
  %714 = vmatprep.subr.mxu0 0.0
  %715 = vmatpush1.msra.mxu0 0.0
  %716 = vmatprep.subr.mxu0 0.0
  %717 = vmatpush1.msra.mxu0 0.0
  %718 = vmatprep.subr.mxu0 0.0
  %719 = vmatpush1.msra.mxu0 0.0
  %720 = vmatprep.subr.mxu0 0.0
  %721 = vmatpush1.msra.mxu0 0.0
  %722 = vmatprep.subr.mxu0 0.0
  %723 = vmatpush1.msra.mxu0 0.0
  %724 = vmatprep.subr.mxu0 0.0
  %725 = vmatpush1.msra.mxu0 0.0
  %726 = vmatprep.subr.mxu0 0.0
  %727 = vmatpush1.msra.mxu0 0.0
  %728 = vmatprep.subr.mxu0 0.0
  %729 = vmatpush1.msra.mxu0 0.0
  %730 = vmatprep.subr.mxu0 0.0
  %731 = vmatpush1.msra.mxu0 0.0
  %732 = vmatprep.subr.mxu0 0.0
  %733 = vmatpush1.msra.mxu0 0.0
  %734 = vmatprep.subr.mxu0 0.0
  %735 = vmatpush1.msra.mxu0 0.0
  %736 = vmatprep.subr.mxu0 0.0
  %737 = vmatpush1.msra.mxu0 0.0
  %738 = vmatprep.subr.mxu0 0.0
  %739 = vmatpush1.msra.mxu0 0.0
  %740 = vmatprep.subr.mxu0 0.0
  %741 = vmatpush1.msra.mxu0 0.0
  %742 = vmatprep.mubr.f32.mxu0 0.0
  %743 = vmatmul.mubr.f32.gmra.mrb[0].mxu0 %v499
  %v744 = vpop.f32.mrb[0].mxu0
  %v745 = vadd.f32 %v675, %v744
  %v746 = vpop.f32.mrb[0].mxu0
  %747 = vdwg.mxu0
  %v748 = vadd.f32 %v745, %v387
  %v749 = vxor.u32 %v748, 2147483648
  %v750 = vmul.f32 %v749, 1.442695
  %v751 = vpow.pop %v750
  %v752 = vadd.f32 %v751, 1.0
  %v753 = vrcp.pop %v752
  %v754 = vmul.f32 1.0, %v753
  %v755 = vtanh.pop %v748
  %v756 = vmul.f32 %v754, %v420
  %758 = vrot.lane.b32.xlu0 %v755, 96
  %v759 = vpop.permute.xlu0 %758
  %v761 = vmul.f32 %v754, %v759
  %763 = vrot.lane.b32.xlu0 %v761, 16
  %v764 = vpop.permute.xlu0 %763
  %v766 = vadd.f32 %v756, %v764
  %v767 = vtanh.pop %v766
  %769 = vrot.lane.b32.xlu0 %v767, 32
  %v770 = vpop.permute.xlu0 %769
  %v772 = vmul.f32 %v754, %v770
  %v773 = vsel %vm600, %v772, %v419
  %v774 = vsel %vm600, %v766, %v420
  %776 = vrot.lane.b32.xlu0 %v601, 80
  %v777 = vpop.permute.xlu0 %776
  %v778 = vsel %vm48, %v777, 0
  %780 = vmatprep.subr.mxu0 0.0
  %781 = vmatpush1.msra.mxu0 %v36
  %782 = vmatprep.subr.mxu0 0.0
  %783 = vmatpush1.msra.mxu0 %v37
  %784 = vmatprep.subr.mxu0 0.0
  %785 = vmatpush1.msra.mxu0 0.0
  %786 = vmatprep.subr.mxu0 0.0
  %787 = vmatpush1.msra.mxu0 0.0
  %788 = vmatprep.subr.mxu0 0.0
  %789 = vmatpush1.msra.mxu0 0.0
  %790 = vmatprep.subr.mxu0 0.0
  %791 = vmatpush1.msra.mxu0 0.0
  %792 = vmatprep.subr.mxu0 0.0
  %793 = vmatpush1.msra.mxu0 0.0
  %794 = vmatprep.subr.mxu0 0.0
  %795 = vmatpush1.msra.mxu0 0.0
  %796 = vmatprep.subr.mxu0 0.0
  %797 = vmatpush1.msra.mxu0 0.0
  %798 = vmatprep.subr.mxu0 0.0
  %799 = vmatpush1.msra.mxu0 0.0
  %800 = vmatprep.subr.mxu0 0.0
  %801 = vmatpush1.msra.mxu0 0.0
  %802 = vmatprep.subr.mxu0 0.0
  %803 = vmatpush1.msra.mxu0 0.0
  %804 = vmatprep.subr.mxu0 0.0
  %805 = vmatpush1.msra.mxu0 0.0
  %806 = vmatprep.subr.mxu0 0.0
  %807 = vmatpush1.msra.mxu0 0.0
  %808 = vmatprep.subr.mxu0 0.0
  %809 = vmatpush1.msra.mxu0 0.0
  %810 = vmatprep.subr.mxu0 0.0
  %811 = vmatpush1.msra.mxu0 0.0
  %812 = vmatprep.subr.mxu0 0.0
  %813 = vmatpush1.msra.mxu0 0.0
  %814 = vmatprep.subr.mxu0 0.0
  %815 = vmatpush1.msra.mxu0 0.0
  %816 = vmatprep.subr.mxu0 0.0
  %817 = vmatpush1.msra.mxu0 0.0
  %818 = vmatprep.subr.mxu0 0.0
  %819 = vmatpush1.msra.mxu0 0.0
  %820 = vmatprep.subr.mxu0 0.0
  %821 = vmatpush1.msra.mxu0 0.0
  %822 = vmatprep.subr.mxu0 0.0
  %823 = vmatpush1.msra.mxu0 0.0
  %824 = vmatprep.subr.mxu0 0.0
  %825 = vmatpush1.msra.mxu0 0.0
  %826 = vmatprep.subr.mxu0 0.0
  %827 = vmatpush1.msra.mxu0 0.0
  %828 = vmatprep.subr.mxu0 0.0
  %829 = vmatpush1.msra.mxu0 0.0
  %830 = vmatprep.subr.mxu0 0.0
  %831 = vmatpush1.msra.mxu0 0.0
  %832 = vmatprep.subr.mxu0 0.0
  %833 = vmatpush1.msra.mxu0 0.0
  %834 = vmatprep.subr.mxu0 0.0
  %835 = vmatpush1.msra.mxu0 0.0
  %836 = vmatprep.subr.mxu0 0.0
  %837 = vmatpush1.msra.mxu0 0.0
  %838 = vmatprep.subr.mxu0 0.0
  %839 = vmatpush1.msra.mxu0 0.0
  %840 = vmatprep.subr.mxu0 0.0
  %841 = vmatpush1.msra.mxu0 0.0
  %842 = vmatprep.subr.mxu0 0.0
  %843 = vmatpush1.msra.mxu0 0.0
  %844 = vmatprep.mubr.f32.mxu0 0.0
  %845 = vmatmul.mubr.f32.gmra.mrb[0].mxu0 %v778
  %v846 = vpop.f32.mrb[0].mxu0
  %v847 = vadd.f32 0.0, %v846
  %v848 = vpop.f32.mrb[0].mxu0
  %849 = vdwg.mxu0
  %850 = vmatprep.subr.mxu0 0.0
  %851 = vmatpush1.msra.mxu0 %v32
  %852 = vmatprep.subr.mxu0 0.0
  %853 = vmatpush1.msra.mxu0 %v33
  %854 = vmatprep.subr.mxu0 0.0
  %855 = vmatpush1.msra.mxu0 %v34
  %856 = vmatprep.subr.mxu0 0.0
  %857 = vmatpush1.msra.mxu0 %v35
  %858 = vmatprep.subr.mxu0 0.0
  %859 = vmatpush1.msra.mxu0 0.0
  %860 = vmatprep.subr.mxu0 0.0
  %861 = vmatpush1.msra.mxu0 0.0
  %862 = vmatprep.subr.mxu0 0.0
  %863 = vmatpush1.msra.mxu0 0.0
  %864 = vmatprep.subr.mxu0 0.0
  %865 = vmatpush1.msra.mxu0 0.0
  %866 = vmatprep.subr.mxu0 0.0
  %867 = vmatpush1.msra.mxu0 0.0
  %868 = vmatprep.subr.mxu0 0.0
  %869 = vmatpush1.msra.mxu0 0.0
  %870 = vmatprep.subr.mxu0 0.0
  %871 = vmatpush1.msra.mxu0 0.0
  %872 = vmatprep.subr.mxu0 0.0
  %873 = vmatpush1.msra.mxu0 0.0
  %874 = vmatprep.subr.mxu0 0.0
  %875 = vmatpush1.msra.mxu0 0.0
  %876 = vmatprep.subr.mxu0 0.0
  %877 = vmatpush1.msra.mxu0 0.0
  %878 = vmatprep.subr.mxu0 0.0
  %879 = vmatpush1.msra.mxu0 0.0
  %880 = vmatprep.subr.mxu0 0.0
  %881 = vmatpush1.msra.mxu0 0.0
  %882 = vmatprep.subr.mxu0 0.0
  %883 = vmatpush1.msra.mxu0 0.0
  %884 = vmatprep.subr.mxu0 0.0
  %885 = vmatpush1.msra.mxu0 0.0
  %886 = vmatprep.subr.mxu0 0.0
  %887 = vmatpush1.msra.mxu0 0.0
  %888 = vmatprep.subr.mxu0 0.0
  %889 = vmatpush1.msra.mxu0 0.0
  %890 = vmatprep.subr.mxu0 0.0
  %891 = vmatpush1.msra.mxu0 0.0
  %892 = vmatprep.subr.mxu0 0.0
  %893 = vmatpush1.msra.mxu0 0.0
  %894 = vmatprep.subr.mxu0 0.0
  %895 = vmatpush1.msra.mxu0 0.0
  %896 = vmatprep.subr.mxu0 0.0
  %897 = vmatpush1.msra.mxu0 0.0
  %898 = vmatprep.subr.mxu0 0.0
  %899 = vmatpush1.msra.mxu0 0.0
  %900 = vmatprep.subr.mxu0 0.0
  %901 = vmatpush1.msra.mxu0 0.0
  %902 = vmatprep.subr.mxu0 0.0
  %903 = vmatpush1.msra.mxu0 0.0
  %904 = vmatprep.subr.mxu0 0.0
  %905 = vmatpush1.msra.mxu0 0.0
  %906 = vmatprep.subr.mxu0 0.0
  %907 = vmatpush1.msra.mxu0 0.0
  %908 = vmatprep.subr.mxu0 0.0
  %909 = vmatpush1.msra.mxu0 0.0
  %910 = vmatprep.subr.mxu0 0.0
  %911 = vmatpush1.msra.mxu0 0.0
  %912 = vmatprep.subr.mxu0 0.0
  %913 = vmatpush1.msra.mxu0 0.0
  %914 = vmatprep.mubr.f32.mxu0 0.0
  %915 = vmatmul.mubr.f32.gmra.mrb[0].mxu0 %v311
  %v916 = vpop.f32.mrb[0].mxu0
  %v917 = vadd.f32 %v847, %v916
  %v918 = vpop.f32.mrb[0].mxu0
  %919 = vdwg.mxu0
  %v920 = vadd.f32 %v917, %v204
  %v921 = vxor.u32 %v920, 2147483648
  %v922 = vmul.f32 %v921, 1.442695
  %v923 = vpow.pop %v922
  %v924 = vadd.f32 %v923, 1.0
  %v925 = vrcp.pop %v924
  %v926 = vmul.f32 1.0, %v925
  %v927 = vtanh.pop %v920
  %v928 = vmul.f32 %v926, %v602
  %930 = vrot.lane.b32.xlu0 %v927, 96
  %v931 = vpop.permute.xlu0 %930
  %v933 = vmul.f32 %v926, %v931
  %935 = vrot.lane.b32.xlu0 %v933, 16
  %v936 = vpop.permute.xlu0 %935
  %v938 = vadd.f32 %v928, %v936
  %v939 = vtanh.pop %v938
  %941 = vrot.lane.b32.xlu0 %v939, 32
  %v942 = vpop.permute.xlu0 %941
  %v944 = vmul.f32 %v926, %v942
  %v945 = vsel %vm418, %v944, %v601
  %947 = vrot.lane.b32.xlu0 %v773, 80
  %v948 = vpop.permute.xlu0 %947
  %v949 = vsel %vm48, %v948, 0
  %951 = vmatprep.subr.mxu0 0.0
  %952 = vmatpush1.msra.mxu0 %v43
  %953 = vmatprep.subr.mxu0 0.0
  %954 = vmatpush1.msra.mxu0 %v44
  %955 = vmatprep.subr.mxu0 0.0
  %956 = vmatpush1.msra.mxu0 0.0
  %957 = vmatprep.subr.mxu0 0.0
  %958 = vmatpush1.msra.mxu0 0.0
  %959 = vmatprep.subr.mxu0 0.0
  %960 = vmatpush1.msra.mxu0 0.0
  %961 = vmatprep.subr.mxu0 0.0
  %962 = vmatpush1.msra.mxu0 0.0
  %963 = vmatprep.subr.mxu0 0.0
  %964 = vmatpush1.msra.mxu0 0.0
  %965 = vmatprep.subr.mxu0 0.0
  %966 = vmatpush1.msra.mxu0 0.0
  %967 = vmatprep.subr.mxu0 0.0
  %968 = vmatpush1.msra.mxu0 0.0
  %969 = vmatprep.subr.mxu0 0.0
  %970 = vmatpush1.msra.mxu0 0.0
  %971 = vmatprep.subr.mxu0 0.0
  %972 = vmatpush1.msra.mxu0 0.0
  %973 = vmatprep.subr.mxu0 0.0
  %974 = vmatpush1.msra.mxu0 0.0
  %975 = vmatprep.subr.mxu0 0.0
  %976 = vmatpush1.msra.mxu0 0.0
  %977 = vmatprep.subr.mxu0 0.0
  %978 = vmatpush1.msra.mxu0 0.0
  %979 = vmatprep.subr.mxu0 0.0
  %980 = vmatpush1.msra.mxu0 0.0
  %981 = vmatprep.subr.mxu0 0.0
  %982 = vmatpush1.msra.mxu0 0.0
  %983 = vmatprep.subr.mxu0 0.0
  %984 = vmatpush1.msra.mxu0 0.0
  %985 = vmatprep.subr.mxu0 0.0
  %986 = vmatpush1.msra.mxu0 0.0
  %987 = vmatprep.subr.mxu0 0.0
  %988 = vmatpush1.msra.mxu0 0.0
  %989 = vmatprep.subr.mxu0 0.0
  %990 = vmatpush1.msra.mxu0 0.0
  %991 = vmatprep.subr.mxu0 0.0
  %992 = vmatpush1.msra.mxu0 0.0
  %993 = vmatprep.subr.mxu0 0.0
  %994 = vmatpush1.msra.mxu0 0.0
  %995 = vmatprep.subr.mxu0 0.0
  %996 = vmatpush1.msra.mxu0 0.0
  %997 = vmatprep.subr.mxu0 0.0
  %998 = vmatpush1.msra.mxu0 0.0
  %999 = vmatprep.subr.mxu0 0.0
  %1000 = vmatpush1.msra.mxu0 0.0
  %1001 = vmatprep.subr.mxu0 0.0
  %1002 = vmatpush1.msra.mxu0 0.0
  %1003 = vmatprep.subr.mxu0 0.0
  %1004 = vmatpush1.msra.mxu0 0.0
  %1005 = vmatprep.subr.mxu0 0.0
  %1006 = vmatpush1.msra.mxu0 0.0
  %1007 = vmatprep.subr.mxu0 0.0
  %1008 = vmatpush1.msra.mxu0 0.0
  %1009 = vmatprep.subr.mxu0 0.0
  %1010 = vmatpush1.msra.mxu0 0.0
  %1011 = vmatprep.subr.mxu0 0.0
  %1012 = vmatpush1.msra.mxu0 0.0
  %1013 = vmatprep.subr.mxu0 0.0
  %1014 = vmatpush1.msra.mxu0 0.0
  %1015 = vmatprep.mubr.f32.mxu0 0.0
  %1016 = vmatmul.mubr.f32.gmra.mrb[0].mxu0 %v949
  %v1017 = vpop.f32.mrb[0].mxu0
  %v1018 = vadd.f32 0.0, %v1017
  %v1019 = vpop.f32.mrb[0].mxu0
  %1020 = vdwg.mxu0
  %1021 = vmatprep.subr.mxu0 0.0
  %1022 = vmatpush1.msra.mxu0 %v39
  %1023 = vmatprep.subr.mxu0 0.0
  %1024 = vmatpush1.msra.mxu0 %v40
  %1025 = vmatprep.subr.mxu0 0.0
  %1026 = vmatpush1.msra.mxu0 %v41
  %1027 = vmatprep.subr.mxu0 0.0
  %1028 = vmatpush1.msra.mxu0 %v42
  %1029 = vmatprep.subr.mxu0 0.0
  %1030 = vmatpush1.msra.mxu0 0.0
  %1031 = vmatprep.subr.mxu0 0.0
  %1032 = vmatpush1.msra.mxu0 0.0
  %1033 = vmatprep.subr.mxu0 0.0
  %1034 = vmatpush1.msra.mxu0 0.0
  %1035 = vmatprep.subr.mxu0 0.0
  %1036 = vmatpush1.msra.mxu0 0.0
  %1037 = vmatprep.subr.mxu0 0.0
  %1038 = vmatpush1.msra.mxu0 0.0
  %1039 = vmatprep.subr.mxu0 0.0
  %1040 = vmatpush1.msra.mxu0 0.0
  %1041 = vmatprep.subr.mxu0 0.0
  %1042 = vmatpush1.msra.mxu0 0.0
  %1043 = vmatprep.subr.mxu0 0.0
  %1044 = vmatpush1.msra.mxu0 0.0
  %1045 = vmatprep.subr.mxu0 0.0
  %1046 = vmatpush1.msra.mxu0 0.0
  %1047 = vmatprep.subr.mxu0 0.0
  %1048 = vmatpush1.msra.mxu0 0.0
  %1049 = vmatprep.subr.mxu0 0.0
  %1050 = vmatpush1.msra.mxu0 0.0
  %1051 = vmatprep.subr.mxu0 0.0
  %1052 = vmatpush1.msra.mxu0 0.0
  %1053 = vmatprep.subr.mxu0 0.0
  %1054 = vmatpush1.msra.mxu0 0.0
  %1055 = vmatprep.subr.mxu0 0.0
  %1056 = vmatpush1.msra.mxu0 0.0
  %1057 = vmatprep.subr.mxu0 0.0
  %1058 = vmatpush1.msra.mxu0 0.0
  %1059 = vmatprep.subr.mxu0 0.0
  %1060 = vmatpush1.msra.mxu0 0.0
  %1061 = vmatprep.subr.mxu0 0.0
  %1062 = vmatpush1.msra.mxu0 0.0
  %1063 = vmatprep.subr.mxu0 0.0
  %1064 = vmatpush1.msra.mxu0 0.0
  %1065 = vmatprep.subr.mxu0 0.0
  %1066 = vmatpush1.msra.mxu0 0.0
  %1067 = vmatprep.subr.mxu0 0.0
  %1068 = vmatpush1.msra.mxu0 0.0
  %1069 = vmatprep.subr.mxu0 0.0
  %1070 = vmatpush1.msra.mxu0 0.0
  %1071 = vmatprep.subr.mxu0 0.0
  %1072 = vmatpush1.msra.mxu0 0.0
  %1073 = vmatprep.subr.mxu0 0.0
  %1074 = vmatpush1.msra.mxu0 0.0
  %1075 = vmatprep.subr.mxu0 0.0
  %1076 = vmatpush1.msra.mxu0 0.0
  %1077 = vmatprep.subr.mxu0 0.0
  %1078 = vmatpush1.msra.mxu0 0.0
  %1079 = vmatprep.subr.mxu0 0.0
  %1080 = vmatpush1.msra.mxu0 0.0
  %1081 = vmatprep.subr.mxu0 0.0
  %1082 = vmatpush1.msra.mxu0 0.0
  %1083 = vmatprep.subr.mxu0 0.0
  %1084 = vmatpush1.msra.mxu0 0.0
  %1085 = vmatprep.mubr.f32.mxu0 0.0
  %1086 = vmatmul.mubr.f32.gmra.mrb[0].mxu0 %v128
  %v1087 = vpop.f32.mrb[0].mxu0
  %v1088 = vadd.f32 %v1018, %v1087
  %v1089 = vpop.f32.mrb[0].mxu0
  %1090 = vdwg.mxu0
  %v1091 = vadd.f32 %v1088, %v387
  %v1092 = vxor.u32 %v1091, 2147483648
  %v1093 = vmul.f32 %v1092, 1.442695
  %v1094 = vpow.pop %v1093
  %v1095 = vadd.f32 %v1094, 1.0
  %v1096 = vrcp.pop %v1095
  %v1097 = vmul.f32 1.0, %v1096
  %v1098 = vtanh.pop %v1091
  %v1099 = vmul.f32 %v1097, %v774
  %1101 = vrot.lane.b32.xlu0 %v1098, 96
  %v1102 = vpop.permute.xlu0 %1101
  %v1104 = vmul.f32 %v1097, %v1102
  %1106 = vrot.lane.b32.xlu0 %v1104, 16
  %v1107 = vpop.permute.xlu0 %1106
  %v1109 = vadd.f32 %v1099, %v1107
  %v1110 = vtanh.pop %v1109
  %1112 = vrot.lane.b32.xlu0 %v1110, 32
  %v1113 = vpop.permute.xlu0 %1112
  %v1115 = vmul.f32 %v1097, %v1113
  %v1116 = vsel %vm235, %v1115, %v773
  %1118 = vrot.lane.b32.xlu0 %v945, 80
  %v1119 = vpop.permute.xlu0 %1118
  %1122 = vrot.lane.b32.xlu0 %v1116, 96
  %v1123 = vpop.permute.xlu0 %1122
  %v1125 = vsel %vm48, %v1119, %v1123
  %vm1126 = vcmask 254976
  %1127 = vst.msk [vmem:[%s8] sm:$0x3] %vm1126, %v1125
  // Predicated region
  $region34: #{forward.6} parent=0 // pred_check
    _
  $region35: #{forward.6} parent=0 // pred_check_branch
    %1129 = sbr.rel (0) target = $region37
  $region36: #{forward.6} parent=0 // pred_region
    _
  $region37: #{forward.6} parent=0 // pred_fallthru
    _
  // Predicated region
  $region38: #{forward.6} parent=0 // pred_check
    _
  $region39: #{forward.6} parent=0 // pred_check_branch
    %1131 = sbr.rel (0) target = $region41
  $region40: #{forward.6} parent=0 // pred_region
    _
  $region41: #{forward.6} parent=0 // pred_fallthru
    _

// kernel: forward.4
$region0: #{forward.4}
  #allocation0 [shape = 'u32[]', space=smem, size = 0x4, offset = 0x4, fixed_abs, tag = 'smem constant byte address 0x4 - core index']
  #allocation1 [shape = 'u32[144,128]{1,0:T(1,128)}', space=vmem, size = 0x12000, scoped, tag = 'internal scratch']
  %s0 = inlined_call_operand.vmem [shape: f32[8,8,32], index: 0, kind: input, shape index: {}]
  %s1 = inlined_call_operand.vmem [shape: f32[8,1,8], index: 1, kind: input, shape index: {}]
  %s2 = inlined_call_operand.vmem [shape: f32[8,8,1], index: 2, kind: input, shape index: {}]
  %s3 = inlined_call_operand.vmem [shape: f32[32,96], index: 3, kind: input, shape index: {}]
  %s4 = inlined_call_operand.vmem [shape: f32[1,96], index: 4, kind: input, shape index: {}]
  %s5 = inlined_call_operand.vmem [shape: f32[32,32], index: 5, kind: input, shape index: {}]
  %s6 = inlined_call_operand.vmem [shape: f32[1,32], index: 6, kind: input, shape index: {}]
  %s7 = inlined_call_operand.vmem [shape: f32[1,32], index: 7, kind: input, shape index: {}]
  %s8 = inlined_call_operand.vmem [shape: f32[1,32], index: 8, kind: input, shape index: {}]
  %s9 = inlined_call_operand.vmem [shape: f32[1,32], index: 9, kind: input, shape index: {}]
  %s10 = inlined_call_operand.vmem [shape: f32[1,32], index: 10, kind: input, shape index: {}]
  %s11 = inlined_call_operand.vmem [shape: f32[32,64], index: 11, kind: input, shape index: {}]
  %s12 = inlined_call_operand.vmem [shape: f32[1,64], index: 12, kind: input, shape index: {}]
  %s13 = inlined_call_operand.vmem [shape: f32[64,32], index: 13, kind: input, shape index: {}]
  %s14 = inlined_call_operand.vmem [shape: f32[1,32], index: 14, kind: input, shape index: {}]
  %s15 = inlined_call_operand.vmem [shape: f32[1,32], index: 15, kind: input, shape index: {}]
  %s16 = inlined_call_operand.vmem [shape: f32[1,32], index: 16, kind: input, shape index: {}]
  %s17 = inlined_call_operand.vmem [shape: f32[8,8,32], index: 17, kind: output, shape index: {0}]
  %s18 = inlined_call_operand.vmem [shape: f32[8,32], index: 18, kind: output, shape index: {1}]
  %19 = xla_tuple %s17, %s18
  %s20 = sld [smem:[#allocation0]]
  $region86: #{forward.4} parent=0
    _
  %s22 = ssub.s32 1, %s20
  %s23 = scalar_select 0, %s22, %s20
  // Predicated region
  $region2: #{forward.4} parent=0 // pred_check
    _
  $region3: #{forward.4} parent=0 // pred_check_branch
    %25 = sbr.rel (0) target = $region5
  $region4: #{forward.4} parent=0 // pred_region
    _
  $region5: #{forward.4} parent=0 // pred_fallthru
    _
  // Predicated region
  $region6: #{forward.4} parent=0 // pred_check
    _
  $region7: #{forward.4} parent=0 // pred_check_branch
    %27 = sbr.rel (0) target = $region9
  $region8: #{forward.4} parent=0 // pred_region
    _
  $region9: #{forward.4} parent=0 // pred_fallthru
    _
  // Predicated region
  $region10: #{forward.4} parent=0 // pred_check
    _
  $region11: #{forward.4} parent=0 // pred_check_branch
    %29 = sbr.rel (0) target = $region13
  $region12: #{forward.4} parent=0 // pred_region
    _
  $region13: #{forward.4} parent=0 // pred_fallthru
    _
  // Predicated region
  $region14: #{forward.4} parent=0 // pred_check
    _
  $region15: #{forward.4} parent=0 // pred_check_branch
    %31 = sbr.rel (0) target = $region17
  $region16: #{forward.4} parent=0 // pred_region
    _
  $region17: #{forward.4} parent=0 // pred_fallthru
    _
  // Predicated region
  $region18: #{forward.4} parent=0 // pred_check
    _
  $region19: #{forward.4} parent=0 // pred_check_branch
    %33 = sbr.rel (0) target = $region21
  $region20: #{forward.4} parent=0 // pred_region
    _
  $region21: #{forward.4} parent=0 // pred_fallthru
    _
  // Predicated region
  $region22: #{forward.4} parent=0 // pred_check
    _
  $region23: #{forward.4} parent=0 // pred_check_branch
    %35 = sbr.rel (0) target = $region25
  $region24: #{forward.4} parent=0 // pred_region
    _
  $region25: #{forward.4} parent=0 // pred_fallthru
    _
  // Predicated region
  $region26: #{forward.4} parent=0 // pred_check
    _
  $region27: #{forward.4} parent=0 // pred_check_branch
    %37 = sbr.rel (0) target = $region29
  $region28: #{forward.4} parent=0 // pred_region
    _
  $region29: #{forward.4} parent=0 // pred_fallthru
    _
  // Predicated region
  $region30: #{forward.4} parent=0 // pred_check
    _
  $region31: #{forward.4} parent=0 // pred_check_branch
    %39 = sbr.rel (0) target = $region33
  $region32: #{forward.4} parent=0 // pred_region
    _
  $region33: #{forward.4} parent=0 // pred_fallthru
    _
  // Predicated region
  $region34: #{forward.4} parent=0 // pred_check
    _
  $region35: #{forward.4} parent=0 // pred_check_branch
    %41 = sbr.rel (0) target = $region37
  $region36: #{forward.4} parent=0 // pred_region
    _
  $region37: #{forward.4} parent=0 // pred_fallthru
    _
  // Predicated region
  $region38: #{forward.4} parent=0 // pred_check
    _
  $region39: #{forward.4} parent=0 // pred_check_branch
    %43 = sbr.rel (0) target = $region41
  $region40: #{forward.4} parent=0 // pred_region
    _
  $region41: #{forward.4} parent=0 // pred_fallthru
    _
  // Predicated region
  $region42: #{forward.4} parent=0 // pred_check
    _
  $region43: #{forward.4} parent=0 // pred_check_branch
    %45 = sbr.rel (0) target = $region45
  $region44: #{forward.4} parent=0 // pred_region
    _
  $region45: #{forward.4} parent=0 // pred_fallthru
    _
  // Predicated region
  $region46: #{forward.4} parent=0 // pred_check
    _
  $region47: #{forward.4} parent=0 // pred_check_branch
    %47 = sbr.rel (0) target = $region49
  $region48: #{forward.4} parent=0 // pred_region
    _
  $region49: #{forward.4} parent=0 // pred_fallthru
    _
  // Predicated region
  $region50: #{forward.4} parent=0 // pred_check
    _
  $region51: #{forward.4} parent=0 // pred_check_branch
    %49 = sbr.rel (0) target = $region53
  $region52: #{forward.4} parent=0 // pred_region
    _
  $region53: #{forward.4} parent=0 // pred_fallthru
    _
  // Predicated region
  $region54: #{forward.4} parent=0 // pred_check
    _
  $region55: #{forward.4} parent=0 // pred_check_branch
    %51 = sbr.rel (0) target = $region57
  $region56: #{forward.4} parent=0 // pred_region
    _
  $region57: #{forward.4} parent=0 // pred_fallthru
    _
  // Predicated region
  $region58: #{forward.4} parent=0 // pred_check
    _
  $region59: #{forward.4} parent=0 // pred_check_branch
    %53 = sbr.rel (0) target = $region61
  $region60: #{forward.4} parent=0 // pred_region
    _
  $region61: #{forward.4} parent=0 // pred_fallthru
    _
  // Predicated region
  $region62: #{forward.4} parent=0 // pred_check
    _
  $region63: #{forward.4} parent=0 // pred_check_branch
    %55 = sbr.rel (0) target = $region65
  $region64: #{forward.4} parent=0 // pred_region
    _
  $region65: #{forward.4} parent=0 // pred_fallthru
    _
  // Predicated region
  $region66: #{forward.4} parent=0 // pred_check
    _
  $region67: #{forward.4} parent=0 // pred_check_branch
    %57 = sbr.rel (0) target = $region69
  $region68: #{forward.4} parent=0 // pred_region
    _
  $region69: #{forward.4} parent=0 // pred_fallthru
    _
  %v58 = vld [vmem:[%s0] sm:$0xff]
  %v59 = vld [vmem:[%s0 + $0x8] sm:$0xff]
  %v60 = vld [vmem:[%s0 + $0x10] sm:$0xff]
  %v61 = vld [vmem:[%s0 + $0x18] sm:$0xff]
  %v62 = vld [vmem:[%s0 + $0x20] sm:$0xff]
  %v63 = vld [vmem:[%s0 + $0x28] sm:$0xff]
  %v64 = vld [vmem:[%s0 + $0x30] sm:$0xff]
  %v65 = vld [vmem:[%s0 + $0x38] sm:$0xff]
  %v66 = vld [vmem:[%s7] sm:$0x1]
  %v67 = vld [vmem:[%s8] sm:$0x1]
  %vm68 = vcmask 261120
  %v69 = vsel %vm68, %v58, 0.0
  %70 = vadd.xlane.f32.xlu0 %v69
  %v71 = vpop.xlane.xlu0 %70
  %v72 = vsel %vm68, %v59, 0.0
  %73 = vadd.xlane.f32.xlu0 %v72
  %v74 = vpop.xlane.xlu0 %73
  %v75 = vsel %vm68, %v60, 0.0
  %76 = vadd.xlane.f32.xlu0 %v75
  %v77 = vpop.xlane.xlu0 %76
  %v78 = vsel %vm68, %v61, 0.0
  %79 = vadd.xlane.f32.xlu0 %v78
  %v80 = vpop.xlane.xlu0 %79
  %v81 = vsel %vm68, %v62, 0.0
  %82 = vadd.xlane.f32.xlu0 %v81
  %v83 = vpop.xlane.xlu0 %82
  %v84 = vsel %vm68, %v63, 0.0
  %85 = vadd.xlane.f32.xlu0 %v84
  %v86 = vpop.xlane.xlu0 %85
  %v87 = vsel %vm68, %v64, 0.0
  %88 = vadd.xlane.f32.xlu0 %v87
  %v89 = vpop.xlane.xlu0 %88
  %v90 = vsel %vm68, %v65, 0.0
  %91 = vadd.xlane.f32.xlu0 %v90
  %v92 = vpop.xlane.xlu0 %91
  %v93 = vrcp.pop 32.0
  %v94 = vmul.f32 %v71, %v93
  %v95 = vmul.f32 %v74, %v93
  %v96 = vmul.f32 %v77, %v93
  %v97 = vmul.f32 %v80, %v93
  %v98 = vmul.f32 %v83, %v93
  %v99 = vmul.f32 %v86, %v93
  %v100 = vmul.f32 %v89, %v93
  %v101 = vmul.f32 %v92, %v93
  %v102 = vsub.f32 %v58, %v94
  %v103 = vsub.f32 %v59, %v95
  %v104 = vsub.f32 %v60, %v96
  %v105 = vsub.f32 %v61, %v97
  %v106 = vsub.f32 %v62, %v98
  %v107 = vsub.f32 %v63, %v99
  %v108 = vsub.f32 %v64, %v100
  %v109 = vsub.f32 %v65, %v101
  %v110 = vmul.f32 %v102, %v102
  %v111 = vmul.f32 %v103, %v103
  %v112 = vmul.f32 %v104, %v104
  %v113 = vmul.f32 %v105, %v105
  %v114 = vmul.f32 %v106, %v106
  %v115 = vmul.f32 %v107, %v107
  %v116 = vmul.f32 %v108, %v108
  %v117 = vmul.f32 %v109, %v109
  %v118 = vsel %vm68, %v110, 0.0
  %119 = vadd.xlane.f32.xlu0 %v118
  %v120 = vpop.xlane.xlu0 %119
  %v121 = vsel %vm68, %v111, 0.0
  %122 = vadd.xlane.f32.xlu0 %v121
  %v123 = vpop.xlane.xlu0 %122
  %v124 = vsel %vm68, %v112, 0.0
  %125 = vadd.xlane.f32.xlu0 %v124
  %v126 = vpop.xlane.xlu0 %125
  %v127 = vsel %vm68, %v113, 0.0
  %128 = vadd.xlane.f32.xlu0 %v127
  %v129 = vpop.xlane.xlu0 %128
  %v130 = vsel %vm68, %v114, 0.0
  %131 = vadd.xlane.f32.xlu0 %v130
  %v132 = vpop.xlane.xlu0 %131
  %v133 = vsel %vm68, %v115, 0.0
  %134 = vadd.xlane.f32.xlu0 %v133
  %v135 = vpop.xlane.xlu0 %134
  %v136 = vsel %vm68, %v116, 0.0
  %137 = vadd.xlane.f32.xlu0 %v136
  %v138 = vpop.xlane.xlu0 %137
  %v139 = vsel %vm68, %v117, 0.0
  %140 = vadd.xlane.f32.xlu0 %v139
  %v141 = vpop.xlane.xlu0 %140
  %v142 = vmul.f32 %v120, %v93
  %v143 = vmul.f32 %v123, %v93
  %v144 = vmul.f32 %v126, %v93
  %v145 = vmul.f32 %v129, %v93
  %v146 = vmul.f32 %v132, %v93
  %v147 = vmul.f32 %v135, %v93
  %v148 = vmul.f32 %v138, %v93
  %v149 = vmul.f32 %v141, %v93
  %v150 = vadd.f32 %v142, 1e-12
  %v151 = vadd.f32 %v143, 1e-12
  %v152 = vadd.f32 %v144, 1e-12
  %v153 = vadd.f32 %v145, 1e-12
  %v154 = vadd.f32 %v146, 1e-12
  %v155 = vadd.f32 %v147, 1e-12
  %v156 = vadd.f32 %v148, 1e-12
  %v157 = vadd.f32 %v149, 1e-12
  %v158 = vrsqrt.pop %v150
  %v159 = vrsqrt.pop %v151
  %v160 = vrsqrt.pop %v152
  %v161 = vrsqrt.pop %v153
  %v162 = vrsqrt.pop %v154
  %v163 = vrsqrt.pop %v155
  %v164 = vrsqrt.pop %v156
  %v165 = vrsqrt.pop %v157
  %v166 = vmul.f32 %v102, %v158
  %v167 = vmul.f32 %v103, %v159
  %v168 = vmul.f32 %v104, %v160
  %v169 = vmul.f32 %v105, %v161
  %v170 = vmul.f32 %v106, %v162
  %v171 = vmul.f32 %v107, %v163
  %v172 = vmul.f32 %v108, %v164
  %v173 = vmul.f32 %v109, %v165
  %v175 = vlaneseq
  %v176 = vshrl.u32 %v175, 7
  %v177 = vsub.s32 0, %v176
  %v178 = vrot.slane %v66, %v177
  %v180 = vmul.f32 %v166, %v178
  %v181 = vmul.f32 %v167, %v178
  %v182 = vmul.f32 %v168, %v178
  %v183 = vmul.f32 %v169, %v178
  %v184 = vmul.f32 %v170, %v178
  %v185 = vmul.f32 %v171, %v178
  %v186 = vmul.f32 %v172, %v178
  %v187 = vmul.f32 %v173, %v178
  %v189 = vlaneseq
  %v190 = vshrl.u32 %v189, 7
  %v191 = vsub.s32 0, %v190
  %v192 = vrot.slane %v67, %v191
  %v194 = vadd.f32 %v180, %v192
  %v195 = vadd.f32 %v181, %v192
  %v196 = vadd.f32 %v182, %v192
  %v197 = vadd.f32 %v183, %v192
  %v198 = vadd.f32 %v184, %v192
  %v199 = vadd.f32 %v185, %v192
  %v200 = vadd.f32 %v186, %v192
  %v201 = vadd.f32 %v187, %v192
  %v202 = vld [vmem:[%s3] sm:$0xff]
  %v203 = vld [vmem:[%s3 + $0x8] sm:$0xff]
  %v204 = vld [vmem:[%s3 + $0x10] sm:$0xff]
  %v205 = vld [vmem:[%s3 + $0x18] sm:$0xff]
  %v206 = vld [vmem:[%s4] sm:$0x1]
  %v208 = vlaneseq
  %v209 = vshrl.u32 %v208, 7
  %v210 = vsub.s32 0, %v209
  %v211 = vrot.slane %v206, %v210
  %v214 = vsel %vm68, %v194, 0
  %v217 = vsel %vm68, %v195, 0
  %v220 = vsel %vm68, %v196, 0
  %v223 = vsel %vm68, %v197, 0
  %v226 = vsel %vm68, %v198, 0
  %v229 = vsel %vm68, %v199, 0
  %v232 = vsel %vm68, %v200, 0
  %v235 = vsel %vm68, %v201, 0
  %237 = vmatprep.subr.mxu0 0.0
  %238 = vmatpush1.msra.mxu0 %v202
  %239 = vmatprep.subr.mxu0 0.0
  %240 = vmatpush1.msra.mxu0 %v203
  %241 = vmatprep.subr.mxu0 0.0
  %242 = vmatpush1.msra.mxu0 %v204
  %243 = vmatprep.subr.mxu0 0.0
  %244 = vmatpush1.msra.mxu0 %v205
  %245 = vmatprep.subr.mxu0 0.0
  %246 = vmatpush1.msra.mxu0 0.0
  %247 = vmatprep.subr.mxu0 0.0
  %248 = vmatpush1.msra.mxu0 0.0
  %249 = vmatprep.subr.mxu0 0.0
  %250 = vmatpush1.msra.mxu0 0.0
  %251 = vmatprep.subr.mxu0 0.0
  %252 = vmatpush1.msra.mxu0 0.0
  %253 = vmatprep.subr.mxu0 0.0
  %254 = vmatpush1.msra.mxu0 0.0
  %255 = vmatprep.subr.mxu0 0.0
  %256 = vmatpush1.msra.mxu0 0.0
  %257 = vmatprep.subr.mxu0 0.0
  %258 = vmatpush1.msra.mxu0 0.0
  %259 = vmatprep.subr.mxu0 0.0
  %260 = vmatpush1.msra.mxu0 0.0
  %261 = vmatprep.subr.mxu0 0.0
  %262 = vmatpush1.msra.mxu0 0.0
  %263 = vmatprep.subr.mxu0 0.0
  %264 = vmatpush1.msra.mxu0 0.0
  %265 = vmatprep.subr.mxu0 0.0
  %266 = vmatpush1.msra.mxu0 0.0
  %267 = vmatprep.subr.mxu0 0.0
  %268 = vmatpush1.msra.mxu0 0.0
  %269 = vmatprep.subr.mxu0 0.0
  %270 = vmatpush1.msra.mxu0 0.0
  %271 = vmatprep.subr.mxu0 0.0
  %272 = vmatpush1.msra.mxu0 0.0
  %273 = vmatprep.subr.mxu0 0.0
  %274 = vmatpush1.msra.mxu0 0.0
  %275 = vmatprep.subr.mxu0 0.0
  %276 = vmatpush1.msra.mxu0 0.0
  %277 = vmatprep.subr.mxu0 0.0
  %278 = vmatpush1.msra.mxu0 0.0
  %279 = vmatprep.subr.mxu0 0.0
  %280 = vmatpush1.msra.mxu0 0.0
  %281 = vmatprep.subr.mxu0 0.0
  %282 = vmatpush1.msra.mxu0 0.0
  %283 = vmatprep.subr.mxu0 0.0
  %284 = vmatpush1.msra.mxu0 0.0
  %285 = vmatprep.subr.mxu0 0.0
  %286 = vmatpush1.msra.mxu0 0.0
  %287 = vmatprep.subr.mxu0 0.0
  %288 = vmatpush1.msra.mxu0 0.0
  %289 = vmatprep.subr.mxu0 0.0
  %290 = vmatpush1.msra.mxu0 0.0
  %291 = vmatprep.subr.mxu0 0.0
  %292 = vmatpush1.msra.mxu0 0.0
  %293 = vmatprep.subr.mxu0 0.0
  %294 = vmatpush1.msra.mxu0 0.0
  %295 = vmatprep.subr.mxu0 0.0
  %296 = vmatpush1.msra.mxu0 0.0
  %297 = vmatprep.subr.mxu0 0.0
  %298 = vmatpush1.msra.mxu0 0.0
  %299 = vmatprep.subr.mxu0 0.0
  %300 = vmatpush1.msra.mxu0 0.0
  %301 = vmatprep.mubr.f32.mxu0 0.0
  %302 = vmatmul.mubr.f32.gmra.mrb[0].mxu0 %v214
  %v303 = vpop.f32.mrb[0].mxu0
  %v304 = vadd.f32 %v211, %v303
  %v305 = vpop.f32.mrb[0].mxu0
  %306 = vmatprep.mubr.f32.mxu0 0.0
  %307 = vmatmul.mubr.f32.gmra.mrb[0].mxu0 %v217
  %v308 = vpop.f32.mrb[0].mxu0
  %v309 = vadd.f32 %v211, %v308
  %v310 = vpop.f32.mrb[0].mxu0
  %311 = vmatprep.mubr.f32.mxu0 0.0
  %312 = vmatmul.mubr.f32.gmra.mrb[0].mxu0 %v220
  %v313 = vpop.f32.mrb[0].mxu0
  %v314 = vadd.f32 %v211, %v313
  %v315 = vpop.f32.mrb[0].mxu0
  %316 = vmatprep.mubr.f32.mxu0 0.0
  %317 = vmatmul.mubr.f32.gmra.mrb[0].mxu0 %v223
  %v318 = vpop.f32.mrb[0].mxu0
  %v319 = vadd.f32 %v211, %v318
  %v320 = vpop.f32.mrb[0].mxu0
  %321 = vmatprep.mubr.f32.mxu0 0.0
  %322 = vmatmul.mubr.f32.gmra.mrb[0].mxu0 %v226
  %v323 = vpop.f32.mrb[0].mxu0
  %v324 = vadd.f32 %v211, %v323
  %v325 = vpop.f32.mrb[0].mxu0
  %326 = vmatprep.mubr.f32.mxu0 0.0
  %327 = vmatmul.mubr.f32.gmra.mrb[0].mxu0 %v229
  %v328 = vpop.f32.mrb[0].mxu0
  %v329 = vadd.f32 %v211, %v328
  %v330 = vpop.f32.mrb[0].mxu0
  %331 = vmatprep.mubr.f32.mxu0 0.0
  %332 = vmatmul.mubr.f32.gmra.mrb[0].mxu0 %v232
  %v333 = vpop.f32.mrb[0].mxu0
  %v334 = vadd.f32 %v211, %v333
  %v335 = vpop.f32.mrb[0].mxu0
  %336 = vmatprep.mubr.f32.mxu0 0.0
  %337 = vmatmul.mubr.f32.gmra.mrb[0].mxu0 %v235
  %v338 = vpop.f32.mrb[0].mxu0
  %v339 = vadd.f32 %v211, %v338
  %v340 = vpop.f32.mrb[0].mxu0
  %341 = vdwg.mxu0
  %343 = vrot.lane.b32.xlu0 %v304, 96
  %v344 = vpop.permute.xlu0 %343
  %v345 = vsel %vm68, %v304, 0
  %v347 = vsel %vm68, %v344, 0
  %349 = vmatprep.subr.mxu0 0.0
  %350 = vmatpush1.xpose.msra.mxu0 %v347
  %351 = vmatprep.subr.mxu0 0.0
  %352 = vmatpush1.xpose.msra.mxu0 0.0
  %353 = vmatprep.subr.mxu0 0.0
  %354 = vmatpush1.xpose.msra.mxu0 0.0
  %355 = vmatprep.subr.mxu0 0.0
  %356 = vmatpush1.xpose.msra.mxu0 0.0
  %357 = vmatprep.subr.mxu0 0.0
  %358 = vmatpush1.xpose.msra.mxu0 0.0
  %359 = vmatprep.subr.mxu0 0.0
  %360 = vmatpush1.xpose.msra.mxu0 0.0
  %361 = vmatprep.subr.mxu0 0.0
  %362 = vmatpush1.xpose.msra.mxu0 0.0
  %363 = vmatprep.subr.mxu0 0.0
  %364 = vmatpush1.xpose.msra.mxu0 0.0
  %365 = vmatprep.subr.mxu0 0.0
  %366 = vmatpush1.xpose.msra.mxu0 0.0
  %367 = vmatprep.subr.mxu0 0.0
  %368 = vmatpush1.xpose.msra.mxu0 0.0
  %369 = vmatprep.subr.mxu0 0.0
  %370 = vmatpush1.xpose.msra.mxu0 0.0
  %371 = vmatprep.subr.mxu0 0.0
  %372 = vmatpush1.xpose.msra.mxu0 0.0
  %373 = vmatprep.subr.mxu0 0.0
  %374 = vmatpush1.xpose.msra.mxu0 0.0
  %375 = vmatprep.subr.mxu0 0.0
  %376 = vmatpush1.xpose.msra.mxu0 0.0
  %377 = vmatprep.subr.mxu0 0.0
  %378 = vmatpush1.xpose.msra.mxu0 0.0
  %379 = vmatprep.subr.mxu0 0.0
  %380 = vmatpush1.xpose.msra.mxu0 0.0
  %381 = vmatprep.subr.mxu0 0.0
  %382 = vmatpush1.xpose.msra.mxu0 0.0
  %383 = vmatprep.subr.mxu0 0.0
  %384 = vmatpush1.xpose.msra.mxu0 0.0
  %385 = vmatprep.subr.mxu0 0.0
  %386 = vmatpush1.xpose.msra.mxu0 0.0
  %387 = vmatprep.subr.mxu0 0.0
  %388 = vmatpush1.xpose.msra.mxu0 0.0
  %389 = vmatprep.subr.mxu0 0.0
  %390 = vmatpush1.xpose.msra.mxu0 0.0
  %391 = vmatprep.subr.mxu0 0.0
  %392 = vmatpush1.xpose.msra.mxu0 0.0
  %393 = vmatprep.subr.mxu0 0.0
  %394 = vmatpush1.xpose.msra.mxu0 0.0
  %395 = vmatprep.subr.mxu0 0.0
  %396 = vmatpush1.xpose.msra.mxu0 0.0
  %397 = vmatprep.subr.mxu0 0.0
  %398 = vmatpush1.xpose.msra.mxu0 0.0
  %399 = vmatprep.subr.mxu0 0.0
  %400 = vmatpush1.xpose.msra.mxu0 0.0
  %401 = vmatprep.subr.mxu0 0.0
  %402 = vmatpush1.xpose.msra.mxu0 0.0
  %403 = vmatprep.subr.mxu0 0.0
  %404 = vmatpush1.xpose.msra.mxu0 0.0
  %405 = vmatprep.subr.mxu0 0.0
  %406 = vmatpush1.xpose.msra.mxu0 0.0
  %407 = vmatprep.subr.mxu0 0.0
  %408 = vmatpush1.xpose.msra.mxu0 0.0
  %409 = vmatprep.subr.mxu0 0.0
  %410 = vmatpush1.xpose.msra.mxu0 0.0
  %411 = vmatprep.subr.mxu0 0.0
  %412 = vmatpush1.xpose.msra.mxu0 0.0
  %413 = vmatprep.mubr.f32.mxu0 0.0
  %414 = vmatmul.mubr.f32.gmra.mrb[0].mxu0 %v345
  %v415 = vpop.f32.mrb[0].mxu0
  %v416 = vadd.f32 0.0, %v415
  %v417 = vpop.f32.mrb[0].mxu0
  %418 = vdwg.mxu0
  %420 = vrot.lane.b32.xlu0 %v309, 96
  %v421 = vpop.permute.xlu0 %420
  %v422 = vsel %vm68, %v309, 0
  %v424 = vsel %vm68, %v421, 0
  %426 = vmatprep.subr.mxu0 0.0
  %427 = vmatpush1.xpose.msra.mxu0 %v424
  %428 = vmatprep.subr.mxu0 0.0
  %429 = vmatpush1.xpose.msra.mxu0 0.0
  %430 = vmatprep.subr.mxu0 0.0
  %431 = vmatpush1.xpose.msra.mxu0 0.0
  %432 = vmatprep.subr.mxu0 0.0
  %433 = vmatpush1.xpose.msra.mxu0 0.0
  %434 = vmatprep.subr.mxu0 0.0
  %435 = vmatpush1.xpose.msra.mxu0 0.0
  %436 = vmatprep.subr.mxu0 0.0
  %437 = vmatpush1.xpose.msra.mxu0 0.0
  %438 = vmatprep.subr.mxu0 0.0
  %439 = vmatpush1.xpose.msra.mxu0 0.0
  %440 = vmatprep.subr.mxu0 0.0
  %441 = vmatpush1.xpose.msra.mxu0 0.0
  %442 = vmatprep.subr.mxu0 0.0
  %443 = vmatpush1.xpose.msra.mxu0 0.0
  %444 = vmatprep.subr.mxu0 0.0
  %445 = vmatpush1.xpose.msra.mxu0 0.0
  %446 = vmatprep.subr.mxu0 0.0
  %447 = vmatpush1.xpose.msra.mxu0 0.0
  %448 = vmatprep.subr.mxu0 0.0
  %449 = vmatpush1.xpose.msra.mxu0 0.0
  %450 = vmatprep.subr.mxu0 0.0
  %451 = vmatpush1.xpose.msra.mxu0 0.0
  %452 = vmatprep.subr.mxu0 0.0
  %453 = vmatpush1.xpose.msra.mxu0 0.0
  %454 = vmatprep.subr.mxu0 0.0
  %455 = vmatpush1.xpose.msra.mxu0 0.0
  %456 = vmatprep.subr.mxu0 0.0
  %457 = vmatpush1.xpose.msra.mxu0 0.0
  %458 = vmatprep.subr.mxu0 0.0
  %459 = vmatpush1.xpose.msra.mxu0 0.0
  %460 = vmatprep.subr.mxu0 0.0
  %461 = vmatpush1.xpose.msra.mxu0 0.0
  %462 = vmatprep.subr.mxu0 0.0
  %463 = vmatpush1.xpose.msra.mxu0 0.0
  %464 = vmatprep.subr.mxu0 0.0
  %465 = vmatpush1.xpose.msra.mxu0 0.0
  %466 = vmatprep.subr.mxu0 0.0
  %467 = vmatpush1.xpose.msra.mxu0 0.0
  %468 = vmatprep.subr.mxu0 0.0
  %469 = vmatpush1.xpose.msra.mxu0 0.0
  %470 = vmatprep.subr.mxu0 0.0
  %471 = vmatpush1.xpose.msra.mxu0 0.0
  %472 = vmatprep.subr.mxu0 0.0
  %473 = vmatpush1.xpose.msra.mxu0 0.0
  %474 = vmatprep.subr.mxu0 0.0
  %475 = vmatpush1.xpose.msra.mxu0 0.0
  %476 = vmatprep.subr.mxu0 0.0
  %477 = vmatpush1.xpose.msra.mxu0 0.0
  %478 = vmatprep.subr.mxu0 0.0
  %479 = vmatpush1.xpose.msra.mxu0 0.0
  %480 = vmatprep.subr.mxu0 0.0
  %481 = vmatpush1.xpose.msra.mxu0 0.0
  %482 = vmatprep.subr.mxu0 0.0
  %483 = vmatpush1.xpose.msra.mxu0 0.0
  %484 = vmatprep.subr.mxu0 0.0
  %485 = vmatpush1.xpose.msra.mxu0 0.0
  %486 = vmatprep.subr.mxu0 0.0
  %487 = vmatpush1.xpose.msra.mxu0 0.0
  %488 = vmatprep.subr.mxu0 0.0
  %489 = vmatpush1.xpose.msra.mxu0 0.0
  %490 = vmatprep.mubr.f32.mxu0 0.0
  %491 = vmatmul.mubr.f32.gmra.mrb[0].mxu0 %v422
  %v492 = vpop.f32.mrb[0].mxu0
  %v493 = vadd.f32 0.0, %v492
  %v494 = vpop.f32.mrb[0].mxu0
  %495 = vdwg.mxu0
  %497 = vrot.lane.b32.xlu0 %v314, 96
  %v498 = vpop.permute.xlu0 %497
  %v499 = vsel %vm68, %v314, 0
  %v501 = vsel %vm68, %v498, 0
  %503 = vmatprep.subr.mxu0 0.0
  %504 = vmatpush1.xpose.msra.mxu0 %v501
  %505 = vmatprep.subr.mxu0 0.0
  %506 = vmatpush1.xpose.msra.mxu0 0.0
  %507 = vmatprep.subr.mxu0 0.0
  %508 = vmatpush1.xpose.msra.mxu0 0.0
  %509 = vmatprep.subr.mxu0 0.0
  %510 = vmatpush1.xpose.msra.mxu0 0.0
  %511 = vmatprep.subr.mxu0 0.0
  %512 = vmatpush1.xpose.msra.mxu0 0.0
  %513 = vmatprep.subr.mxu0 0.0
  %514 = vmatpush1.xpose.msra.mxu0 0.0
  %515 = vmatprep.subr.mxu0 0.0
  %516 = vmatpush1.xpose.msra.mxu0 0.0
  %517 = vmatprep.subr.mxu0 0.0
  %518 = vmatpush1.xpose.msra.mxu0 0.0
  %519 = vmatprep.subr.mxu0 0.0
  %520 = vmatpush1.xpose.msra.mxu0 0.0
  %521 = vmatprep.subr.mxu0 0.0
  %522 = vmatpush1.xpose.msra.mxu0 0.0
  %523 = vmatprep.subr.mxu0 0.0
  %524 = vmatpush1.xpose.msra.mxu0 0.0
  %525 = vmatprep.subr.mxu0 0.0
  %526 = vmatpush1.xpose.msra.mxu0 0.0
  %527 = vmatprep.subr.mxu0 0.0
  %528 = vmatpush1.xpose.msra.mxu0 0.0
  %529 = vmatprep.subr.mxu0 0.0
  %530 = vmatpush1.xpose.msra.mxu0 0.0
  %531 = vmatprep.subr.mxu0 0.0
  %532 = vmatpush1.xpose.msra.mxu0 0.0
  %533 = vmatprep.subr.mxu0 0.0
  %534 = vmatpush1.xpose.msra.mxu0 0.0
  %535 = vmatprep.subr.mxu0 0.0
  %536 = vmatpush1.xpose.msra.mxu0 0.0
  %537 = vmatprep.subr.mxu0 0.0
  %538 = vmatpush1.xpose.msra.mxu0 0.0
  %539 = vmatprep.subr.mxu0 0.0
  %540 = vmatpush1.xpose.msra.mxu0 0.0
  %541 = vmatprep.subr.mxu0 0.0
  %542 = vmatpush1.xpose.msra.mxu0 0.0
  %543 = vmatprep.subr.mxu0 0.0
  %544 = vmatpush1.xpose.msra.mxu0 0.0
  %545 = vmatprep.subr.mxu0 0.0
  %546 = vmatpush1.xpose.msra.mxu0 0.0
  %547 = vmatprep.subr.mxu0 0.0
  %548 = vmatpush1.xpose.msra.mxu0 0.0
  %549 = vmatprep.subr.mxu0 0.0
  %550 = vmatpush1.xpose.msra.mxu0 0.0
  %551 = vmatprep.subr.mxu0 0.0
  %552 = vmatpush1.xpose.msra.mxu0 0.0
  %553 = vmatprep.subr.mxu0 0.0
  %554 = vmatpush1.xpose.msra.mxu0 0.0
  %555 = vmatprep.subr.mxu0 0.0
  %556 = vmatpush1.xpose.msra.mxu0 0.0
  %557 = vmatprep.subr.mxu0 0.0
  %558 = vmatpush1.xpose.msra.mxu0 0.0
  %559 = vmatprep.subr.mxu0 0.0
  %560 = vmatpush1.xpose.msra.mxu0 0.0
  %561 = vmatprep.subr.mxu0 0.0
  %562 = vmatpush1.xpose.msra.mxu0 0.0
  %563 = vmatprep.subr.mxu0 0.0
  %564 = vmatpush1.xpose.msra.mxu0 0.0
  %565 = vmatprep.subr.mxu0 0.0
  %566 = vmatpush1.xpose.msra.mxu0 0.0
  %567 = vmatprep.mubr.f32.mxu0 0.0
  %568 = vmatmul.mubr.f32.gmra.mrb[0].mxu0 %v499
  %v569 = vpop.f32.mrb[0].mxu0
  %v570 = vadd.f32 0.0, %v569
  %v571 = vpop.f32.mrb[0].mxu0
  %572 = vdwg.mxu0
  %574 = vrot.lane.b32.xlu0 %v319, 96
  %v575 = vpop.permute.xlu0 %574
  %v576 = vsel %vm68, %v319, 0
  %v578 = vsel %vm68, %v575, 0
  %580 = vmatprep.subr.mxu0 0.0
  %581 = vmatpush1.xpose.msra.mxu0 %v578
  %582 = vmatprep.subr.mxu0 0.0
  %583 = vmatpush1.xpose.msra.mxu0 0.0
  %584 = vmatprep.subr.mxu0 0.0
  %585 = vmatpush1.xpose.msra.mxu0 0.0
  %586 = vmatprep.subr.mxu0 0.0
  %587 = vmatpush1.xpose.msra.mxu0 0.0
  %588 = vmatprep.subr.mxu0 0.0
  %589 = vmatpush1.xpose.msra.mxu0 0.0
  %590 = vmatprep.subr.mxu0 0.0
  %591 = vmatpush1.xpose.msra.mxu0 0.0
  %592 = vmatprep.subr.mxu0 0.0
  %593 = vmatpush1.xpose.msra.mxu0 0.0
  %594 = vmatprep.subr.mxu0 0.0
  %595 = vmatpush1.xpose.msra.mxu0 0.0
  %596 = vmatprep.subr.mxu0 0.0
  %597 = vmatpush1.xpose.msra.mxu0 0.0
  %598 = vmatprep.subr.mxu0 0.0
  %599 = vmatpush1.xpose.msra.mxu0 0.0
  %600 = vmatprep.subr.mxu0 0.0
  %601 = vmatpush1.xpose.msra.mxu0 0.0
  %602 = vmatprep.subr.mxu0 0.0
  %603 = vmatpush1.xpose.msra.mxu0 0.0
  %604 = vmatprep.subr.mxu0 0.0
  %605 = vmatpush1.xpose.msra.mxu0 0.0
  %606 = vmatprep.subr.mxu0 0.0
  %607 = vmatpush1.xpose.msra.mxu0 0.0
  %608 = vmatprep.subr.mxu0 0.0
  %609 = vmatpush1.xpose.msra.mxu0 0.0
  %610 = vmatprep.subr.mxu0 0.0
  %611 = vmatpush1.xpose.msra.mxu0 0.0
  %612 = vmatprep.subr.mxu0 0.0
  %613 = vmatpush1.xpose.msra.mxu0 0.0
  %614 = vmatprep.subr.mxu0 0.0
  %615 = vmatpush1.xpose.msra.mxu0 0.0
  %616 = vmatprep.subr.mxu0 0.0
  %617 = vmatpush1.xpose.msra.mxu0 0.0
  %618 = vmatprep.subr.mxu0 0.0
  %619 = vmatpush1.xpose.msra.mxu0 0.0
  %620 = vmatprep.subr.mxu0 0.0
  %621 = vmatpush1.xpose.msra.mxu0 0.0
  %622 = vmatprep.subr.mxu0 0.0
  %623 = vmatpush1.xpose.msra.mxu0 0.0
  %624 = vmatprep.subr.mxu0 0.0
  %625 = vmatpush1.xpose.msra.mxu0 0.0
  %626 = vmatprep.subr.mxu0 0.0
  %627 = vmatpush1.xpose.msra.mxu0 0.0
  %628 = vmatprep.subr.mxu0 0.0
  %629 = vmatpush1.xpose.msra.mxu0 0.0
  %630 = vmatprep.subr.mxu0 0.0
  %631 = vmatpush1.xpose.msra.mxu0 0.0
  %632 = vmatprep.subr.mxu0 0.0
  %633 = vmatpush1.xpose.msra.mxu0 0.0
  %634 = vmatprep.subr.mxu0 0.0
  %635 = vmatpush1.xpose.msra.mxu0 0.0
  %636 = vmatprep.subr.mxu0 0.0
  %637 = vmatpush1.xpose.msra.mxu0 0.0
  %638 = vmatprep.subr.mxu0 0.0
  %639 = vmatpush1.xpose.msra.mxu0 0.0
  %640 = vmatprep.subr.mxu0 0.0
  %641 = vmatpush1.xpose.msra.mxu0 0.0
  %642 = vmatprep.subr.mxu0 0.0
  %643 = vmatpush1.xpose.msra.mxu0 0.0
  %644 = vmatprep.mubr.f32.mxu0 0.0
  %645 = vmatmul.mubr.f32.gmra.mrb[0].mxu0 %v576
  %v646 = vpop.f32.mrb[0].mxu0
  %v647 = vadd.f32 0.0, %v646
  %v648 = vpop.f32.mrb[0].mxu0
  %649 = vdwg.mxu0
  %651 = vrot.lane.b32.xlu0 %v324, 96
  %v652 = vpop.permute.xlu0 %651
  %v653 = vsel %vm68, %v324, 0
  %v655 = vsel %vm68, %v652, 0
  %657 = vmatprep.subr.mxu0 0.0
  %658 = vmatpush1.xpose.msra.mxu0 %v655
  %659 = vmatprep.subr.mxu0 0.0
  %660 = vmatpush1.xpose.msra.mxu0 0.0
  %661 = vmatprep.subr.mxu0 0.0
  %662 = vmatpush1.xpose.msra.mxu0 0.0
  %663 = vmatprep.subr.mxu0 0.0
  %664 = vmatpush1.xpose.msra.mxu0 0.0
  %665 = vmatprep.subr.mxu0 0.0
  %666 = vmatpush1.xpose.msra.mxu0 0.0
  %667 = vmatprep.subr.mxu0 0.0
  %668 = vmatpush1.xpose.msra.mxu0 0.0
  %669 = vmatprep.subr.mxu0 0.0
  %670 = vmatpush1.xpose.msra.mxu0 0.0
  %671 = vmatprep.subr.mxu0 0.0
  %672 = vmatpush1.xpose.msra.mxu0 0.0
  %673 = vmatprep.subr.mxu0 0.0
  %674 = vmatpush1.xpose.msra.mxu0 0.0
  %675 = vmatprep.subr.mxu0 0.0
  %676 = vmatpush1.xpose.msra.mxu0 0.0
  %677 = vmatprep.subr.mxu0 0.0
  %678 = vmatpush1.xpose.msra.mxu0 0.0
  %679 = vmatprep.subr.mxu0 0.0
  %680 = vmatpush1.xpose.msra.mxu0 0.0
  %681 = vmatprep.subr.mxu0 0.0
  %682 = vmatpush1.xpose.msra.mxu0 0.0
  %683 = vmatprep.subr.mxu0 0.0
  %684 = vmatpush1.xpose.msra.mxu0 0.0
  %685 = vmatprep.subr.mxu0 0.0
  %686 = vmatpush1.xpose.msra.mxu0 0.0
  %687 = vmatprep.subr.mxu0 0.0
  %688 = vmatpush1.xpose.msra.mxu0 0.0
  %689 = vmatprep.subr.mxu0 0.0
  %690 = vmatpush1.xpose.msra.mxu0 0.0
  %691 = vmatprep.subr.mxu0 0.0
  %692 = vmatpush1.xpose.msra.mxu0 0.0
  %693 = vmatprep.subr.mxu0 0.0
  %694 = vmatpush1.xpose.msra.mxu0 0.0
  %695 = vmatprep.subr.mxu0 0.0
  %696 = vmatpush1.xpose.msra.mxu0 0.0
  %697 = vmatprep.subr.mxu0 0.0
  %698 = vmatpush1.xpose.msra.mxu0 0.0
  %699 = vmatprep.subr.mxu0 0.0
  %700 = vmatpush1.xpose.msra.mxu0 0.0
  %701 = vmatprep.subr.mxu0 0.0
  %702 = vmatpush1.xpose.msra.mxu0 0.0
  %703 = vmatprep.subr.mxu0 0.0
  %704 = vmatpush1.xpose.msra.mxu0 0.0
  %705 = vmatprep.subr.mxu0 0.0
  %706 = vmatpush1.xpose.msra.mxu0 0.0
  %707 = vmatprep.subr.mxu0 0.0
  %708 = vmatpush1.xpose.msra.mxu0 0.0
  %709 = vmatprep.subr.mxu0 0.0
  %710 = vmatpush1.xpose.msra.mxu0 0.0
  %711 = vmatprep.subr.mxu0 0.0
  %712 = vmatpush1.xpose.msra.mxu0 0.0
  %713 = vmatprep.subr.mxu0 0.0
  %714 = vmatpush1.xpose.msra.mxu0 0.0
  %715 = vmatprep.subr.mxu0 0.0
  %716 = vmatpush1.xpose.msra.mxu0 0.0
  %717 = vmatprep.subr.mxu0 0.0
  %718 = vmatpush1.xpose.msra.mxu0 0.0
  %719 = vmatprep.subr.mxu0 0.0
  %720 = vmatpush1.xpose.msra.mxu0 0.0
  %721 = vmatprep.mubr.f32.mxu0 0.0
  %722 = vmatmul.mubr.f32.gmra.mrb[0].mxu0 %v653
  %v723 = vpop.f32.mrb[0].mxu0
  %v724 = vadd.f32 0.0, %v723
  %v725 = vpop.f32.mrb[0].mxu0
  %726 = vdwg.mxu0
  %728 = vrot.lane.b32.xlu0 %v329, 96
  %v729 = vpop.permute.xlu0 %728
  %v730 = vsel %vm68, %v329, 0
  %v732 = vsel %vm68, %v729, 0
  %734 = vmatprep.subr.mxu0 0.0
  %735 = vmatpush1.xpose.msra.mxu0 %v732
  %736 = vmatprep.subr.mxu0 0.0
  %737 = vmatpush1.xpose.msra.mxu0 0.0
  %738 = vmatprep.subr.mxu0 0.0
  %739 = vmatpush1.xpose.msra.mxu0 0.0
  %740 = vmatprep.subr.mxu0 0.0
  %741 = vmatpush1.xpose.msra.mxu0 0.0
  %742 = vmatprep.subr.mxu0 0.0
  %743 = vmatpush1.xpose.msra.mxu0 0.0
  %744 = vmatprep.subr.mxu0 0.0
  %745 = vmatpush1.xpose.msra.mxu0 0.0
  %746 = vmatprep.subr.mxu0 0.0
  %747 = vmatpush1.xpose.msra.mxu0 0.0
  %748 = vmatprep.subr.mxu0 0.0
  %749 = vmatpush1.xpose.msra.mxu0 0.0
  %750 = vmatprep.subr.mxu0 0.0
  %751 = vmatpush1.xpose.msra.mxu0 0.0
  %752 = vmatprep.subr.mxu0 0.0
  %753 = vmatpush1.xpose.msra.mxu0 0.0
  %754 = vmatprep.subr.mxu0 0.0
  %755 = vmatpush1.xpose.msra.mxu0 0.0
  %756 = vmatprep.subr.mxu0 0.0
  %757 = vmatpush1.xpose.msra.mxu0 0.0
  %758 = vmatprep.subr.mxu0 0.0
  %759 = vmatpush1.xpose.msra.mxu0 0.0
  %760 = vmatprep.subr.mxu0 0.0
  %761 = vmatpush1.xpose.msra.mxu0 0.0
  %762 = vmatprep.subr.mxu0 0.0
  %763 = vmatpush1.xpose.msra.mxu0 0.0
  %764 = vmatprep.subr.mxu0 0.0
  %765 = vmatpush1.xpose.msra.mxu0 0.0
  %766 = vmatprep.subr.mxu0 0.0
  %767 = vmatpush1.xpose.msra.mxu0 0.0
  %768 = vmatprep.subr.mxu0 0.0
  %769 = vmatpush1.xpose.msra.mxu0 0.0
  %770 = vmatprep.subr.mxu0 0.0
  %771 = vmatpush1.xpose.msra.mxu0 0.0
  %772 = vmatprep.subr.mxu0 0.0
  %773 = vmatpush1.xpose.msra.mxu0 0.0
  %774 = vmatprep.subr.mxu0 0.0
  %775 = vmatpush1.xpose.msra.mxu0 0.0
  %776 = vmatprep.subr.mxu0 0.0
  %777 = vmatpush1.xpose.msra.mxu0 0.0
  %778 = vmatprep.subr.mxu0 0.0
  %779 = vmatpush1.xpose.msra.mxu0 0.0
  %780 = vmatprep.subr.mxu0 0.0
  %781 = vmatpush1.xpose.msra.mxu0 0.0
  %782 = vmatprep.subr.mxu0 0.0
  %783 = vmatpush1.xpose.msra.mxu0 0.0
  %784 = vmatprep.subr.mxu0 0.0
  %785 = vmatpush1.xpose.msra.mxu0 0.0
  %786 = vmatprep.subr.mxu0 0.0
  %787 = vmatpush1.xpose.msra.mxu0 0.0
  %788 = vmatprep.subr.mxu0 0.0
  %789 = vmatpush1.xpose.msra.mxu0 0.0
  %790 = vmatprep.subr.mxu0 0.0
  %791 = vmatpush1.xpose.msra.mxu0 0.0
  %792 = vmatprep.subr.mxu0 0.0
  %793 = vmatpush1.xpose.msra.mxu0 0.0
  %794 = vmatprep.subr.mxu0 0.0
  %795 = vmatpush1.xpose.msra.mxu0 0.0
  %796 = vmatprep.subr.mxu0 0.0
  %797 = vmatpush1.xpose.msra.mxu0 0.0
  %798 = vmatprep.mubr.f32.mxu0 0.0
  %799 = vmatmul.mubr.f32.gmra.mrb[0].mxu0 %v730
  %v800 = vpop.f32.mrb[0].mxu0
  %v801 = vadd.f32 0.0, %v800
  %v802 = vpop.f32.mrb[0].mxu0
  %803 = vdwg.mxu0
  %805 = vrot.lane.b32.xlu0 %v334, 96
  %v806 = vpop.permute.xlu0 %805
  %v807 = vsel %vm68, %v334, 0
  %v809 = vsel %vm68, %v806, 0
  %811 = vmatprep.subr.mxu0 0.0
  %812 = vmatpush1.xpose.msra.mxu0 %v809
  %813 = vmatprep.subr.mxu0 0.0
  %814 = vmatpush1.xpose.msra.mxu0 0.0
  %815 = vmatprep.subr.mxu0 0.0
  %816 = vmatpush1.xpose.msra.mxu0 0.0
  %817 = vmatprep.subr.mxu0 0.0
  %818 = vmatpush1.xpose.msra.mxu0 0.0
  %819 = vmatprep.subr.mxu0 0.0
  %820 = vmatpush1.xpose.msra.mxu0 0.0
  %821 = vmatprep.subr.mxu0 0.0
  %822 = vmatpush1.xpose.msra.mxu0 0.0
  %823 = vmatprep.subr.mxu0 0.0
  %824 = vmatpush1.xpose.msra.mxu0 0.0
  %825 = vmatprep.subr.mxu0 0.0
  %826 = vmatpush1.xpose.msra.mxu0 0.0
  %827 = vmatprep.subr.mxu0 0.0
  %828 = vmatpush1.xpose.msra.mxu0 0.0
  %829 = vmatprep.subr.mxu0 0.0
  %830 = vmatpush1.xpose.msra.mxu0 0.0
  %831 = vmatprep.subr.mxu0 0.0
  %832 = vmatpush1.xpose.msra.mxu0 0.0
  %833 = vmatprep.subr.mxu0 0.0
  %834 = vmatpush1.xpose.msra.mxu0 0.0
  %835 = vmatprep.subr.mxu0 0.0
  %836 = vmatpush1.xpose.msra.mxu0 0.0
  %837 = vmatprep.subr.mxu0 0.0
  %838 = vmatpush1.xpose.msra.mxu0 0.0
  %839 = vmatprep.subr.mxu0 0.0
  %840 = vmatpush1.xpose.msra.mxu0 0.0
  %841 = vmatprep.subr.mxu0 0.0
  %842 = vmatpush1.xpose.msra.mxu0 0.0
  %843 = vmatprep.subr.mxu0 0.0
  %844 = vmatpush1.xpose.msra.mxu0 0.0
  %845 = vmatprep.subr.mxu0 0.0
  %846 = vmatpush1.xpose.msra.mxu0 0.0
  %847 = vmatprep.subr.mxu0 0.0
  %848 = vmatpush1.xpose.msra.mxu0 0.0
  %849 = vmatprep.subr.mxu0 0.0
  %850 = vmatpush1.xpose.msra.mxu0 0.0
  %851 = vmatprep.subr.mxu0 0.0
  %852 = vmatpush1.xpose.msra.mxu0 0.0
  %853 = vmatprep.subr.mxu0 0.0
  %854 = vmatpush1.xpose.msra.mxu0 0.0
  %855 = vmatprep.subr.mxu0 0.0
  %856 = vmatpush1.xpose.msra.mxu0 0.0
  %857 = vmatprep.subr.mxu0 0.0
  %858 = vmatpush1.xpose.msra.mxu0 0.0
  %859 = vmatprep.subr.mxu0 0.0
  %860 = vmatpush1.xpose.msra.mxu0 0.0
  %861 = vmatprep.subr.mxu0 0.0
  %862 = vmatpush1.xpose.msra.mxu0 0.0
  %863 = vmatprep.subr.mxu0 0.0
  %864 = vmatpush1.xpose.msra.mxu0 0.0
  %865 = vmatprep.subr.mxu0 0.0
  %866 = vmatpush1.xpose.msra.mxu0 0.0
  %867 = vmatprep.subr.mxu0 0.0
  %868 = vmatpush1.xpose.msra.mxu0 0.0
  %869 = vmatprep.subr.mxu0 0.0
  %870 = vmatpush1.xpose.msra.mxu0 0.0
  %871 = vmatprep.subr.mxu0 0.0
  %872 = vmatpush1.xpose.msra.mxu0 0.0
  %873 = vmatprep.subr.mxu0 0.0
  %874 = vmatpush1.xpose.msra.mxu0 0.0
  %875 = vmatprep.mubr.f32.mxu0 0.0
  %876 = vmatmul.mubr.f32.gmra.mrb[0].mxu0 %v807
  %v877 = vpop.f32.mrb[0].mxu0
  %v878 = vadd.f32 0.0, %v877
  %v879 = vpop.f32.mrb[0].mxu0
  %880 = vdwg.mxu0
  %882 = vrot.lane.b32.xlu0 %v339, 96
  %v883 = vpop.permute.xlu0 %882
  %v884 = vsel %vm68, %v339, 0
  %v886 = vsel %vm68, %v883, 0
  %888 = vmatprep.subr.mxu0 0.0
  %889 = vmatpush1.xpose.msra.mxu0 %v886
  %890 = vmatprep.subr.mxu0 0.0
  %891 = vmatpush1.xpose.msra.mxu0 0.0
  %892 = vmatprep.subr.mxu0 0.0
  %893 = vmatpush1.xpose.msra.mxu0 0.0
  %894 = vmatprep.subr.mxu0 0.0
  %895 = vmatpush1.xpose.msra.mxu0 0.0
  %896 = vmatprep.subr.mxu0 0.0
  %897 = vmatpush1.xpose.msra.mxu0 0.0
  %898 = vmatprep.subr.mxu0 0.0
  %899 = vmatpush1.xpose.msra.mxu0 0.0
  %900 = vmatprep.subr.mxu0 0.0
  %901 = vmatpush1.xpose.msra.mxu0 0.0
  %902 = vmatprep.subr.mxu0 0.0
  %903 = vmatpush1.xpose.msra.mxu0 0.0
  %904 = vmatprep.subr.mxu0 0.0
  %905 = vmatpush1.xpose.msra.mxu0 0.0
  %906 = vmatprep.subr.mxu0 0.0
  %907 = vmatpush1.xpose.msra.mxu0 0.0
  %908 = vmatprep.subr.mxu0 0.0
  %909 = vmatpush1.xpose.msra.mxu0 0.0
  %910 = vmatprep.subr.mxu0 0.0
  %911 = vmatpush1.xpose.msra.mxu0 0.0
  %912 = vmatprep.subr.mxu0 0.0
  %913 = vmatpush1.xpose.msra.mxu0 0.0
  %914 = vmatprep.subr.mxu0 0.0
  %915 = vmatpush1.xpose.msra.mxu0 0.0
  %916 = vmatprep.subr.mxu0 0.0
  %917 = vmatpush1.xpose.msra.mxu0 0.0
  %918 = vmatprep.subr.mxu0 0.0
  %919 = vmatpush1.xpose.msra.mxu0 0.0
  %920 = vmatprep.subr.mxu0 0.0
  %921 = vmatpush1.xpose.msra.mxu0 0.0
  %922 = vmatprep.subr.mxu0 0.0
  %923 = vmatpush1.xpose.msra.mxu0 0.0
  %924 = vmatprep.subr.mxu0 0.0
  %925 = vmatpush1.xpose.msra.mxu0 0.0
  %926 = vmatprep.subr.mxu0 0.0
  %927 = vmatpush1.xpose.msra.mxu0 0.0
  %928 = vmatprep.subr.mxu0 0.0
  %929 = vmatpush1.xpose.msra.mxu0 0.0
  %930 = vmatprep.subr.mxu0 0.0
  %931 = vmatpush1.xpose.msra.mxu0 0.0
  %932 = vmatprep.subr.mxu0 0.0
  %933 = vmatpush1.xpose.msra.mxu0 0.0
  %934 = vmatprep.subr.mxu0 0.0
  %935 = vmatpush1.xpose.msra.mxu0 0.0
  %936 = vmatprep.subr.mxu0 0.0
  %937 = vmatpush1.xpose.msra.mxu0 0.0
  %938 = vmatprep.subr.mxu0 0.0
  %939 = vmatpush1.xpose.msra.mxu0 0.0
  %940 = vmatprep.subr.mxu0 0.0
  %941 = vmatpush1.xpose.msra.mxu0 0.0
  %942 = vmatprep.subr.mxu0 0.0
  %943 = vmatpush1.xpose.msra.mxu0 0.0
  %944 = vmatprep.subr.mxu0 0.0
  %945 = vmatpush1.xpose.msra.mxu0 0.0
  %946 = vmatprep.subr.mxu0 0.0
  %947 = vmatpush1.xpose.msra.mxu0 0.0
  %948 = vmatprep.subr.mxu0 0.0
  %949 = vmatpush1.xpose.msra.mxu0 0.0
  %950 = vmatprep.subr.mxu0 0.0
  %951 = vmatpush1.xpose.msra.mxu0 0.0
  %952 = vmatprep.mubr.f32.mxu0 0.0
  %953 = vmatmul.mubr.f32.gmra.mrb[0].mxu0 %v884
  %v954 = vpop.f32.mrb[0].mxu0
  %v955 = vadd.f32 0.0, %v954
  %v956 = vpop.f32.mrb[0].mxu0
  %957 = vdwg.mxu0
  %v958 = vmul.f32 %v416, 0.17677669
  %v959 = vmul.f32 %v493, 0.17677669
  %v960 = vmul.f32 %v570, 0.17677669
  %v961 = vmul.f32 %v647, 0.17677669
  %v962 = vmul.f32 %v724, 0.17677669
  %v963 = vmul.f32 %v801, 0.17677669
  %v964 = vmul.f32 %v878, 0.17677669
  %v965 = vmul.f32 %v955, 0.17677669
  %v966 = vld [vmem:[%s1] sm:$0x1]
  %v967 = vld [vmem:[%s1 + $0x1] sm:$0x1]
  %v968 = vld [vmem:[%s1 + $0x2] sm:$0x1]
  %v969 = vld [vmem:[%s1 + $0x3] sm:$0x1]
  %v970 = vld [vmem:[%s1 + $0x4] sm:$0x1]
  %v971 = vld [vmem:[%s1 + $0x5] sm:$0x1]
  %v972 = vld [vmem:[%s1 + $0x6] sm:$0x1]
  %v973 = vld [vmem:[%s1 + $0x7] sm:$0x1]
  %v982 = vlaneseq
  %v983 = vshrl.u32 %v982, 7
  %v984 = vsub.s32 0, %v983
  %v985 = vrot.slane %v966, %v984
  %v986 = vlaneseq
  %v987 = vshrl.u32 %v986, 7
  %v988 = vsub.s32 0, %v987
  %v989 = vrot.slane %v967, %v988
  %v990 = vlaneseq
  %v991 = vshrl.u32 %v990, 7
  %v992 = vsub.s32 0, %v991
  %v993 = vrot.slane %v968, %v992
  %v994 = vlaneseq
  %v995 = vshrl.u32 %v994, 7
  %v996 = vsub.s32 0, %v995
  %v997 = vrot.slane %v969, %v996
  %v998 = vlaneseq
  %v999 = vshrl.u32 %v998, 7
  %v1000 = vsub.s32 0, %v999
  %v1001 = vrot.slane %v970, %v1000
  %v1002 = vlaneseq
  %v1003 = vshrl.u32 %v1002, 7
  %v1004 = vsub.s32 0, %v1003
  %v1005 = vrot.slane %v971, %v1004
  %v1006 = vlaneseq
  %v1007 = vshrl.u32 %v1006, 7
  %v1008 = vsub.s32 0, %v1007
  %v1009 = vrot.slane %v972, %v1008
  %v1010 = vlaneseq
  %v1011 = vshrl.u32 %v1010, 7
  %v1012 = vsub.s32 0, %v1011
  %v1013 = vrot.slane %v973, %v1012
  %v1022 = vadd.f32 %v958, %v985
  %v1023 = vadd.f32 %v959, %v989
  %v1024 = vadd.f32 %v960, %v993
  %v1025 = vadd.f32 %v961, %v997
  %v1026 = vadd.f32 %v962, %v1001
  %v1027 = vadd.f32 %v963, %v1005
  %v1028 = vadd.f32 %v964, %v1009
  %v1029 = vadd.f32 %v965, %v1013
  %vm1030 = vcmask 64512
  %v1031 = vsel %vm1030, %v1022, -inf
  %1032 = vmax.xlane.f32.xlu0 %v1031
  %v1033 = vpop.xlane.xlu0 %1032
  %v1034 = vsel %vm1030, %v1023, -inf
  %1035 = vmax.xlane.f32.xlu0 %v1034
  %v1036 = vpop.xlane.xlu0 %1035
  %v1037 = vsel %vm1030, %v1024, -inf
  %1038 = vmax.xlane.f32.xlu0 %v1037
  %v1039 = vpop.xlane.xlu0 %1038
  %v1040 = vsel %vm1030, %v1025, -inf
  %1041 = vmax.xlane.f32.xlu0 %v1040
  %v1042 = vpop.xlane.xlu0 %1041
  %v1043 = vsel %vm1030, %v1026, -inf
  %1044 = vmax.xlane.f32.xlu0 %v1043
  %v1045 = vpop.xlane.xlu0 %1044
  %v1046 = vsel %vm1030, %v1027, -inf
  %1047 = vmax.xlane.f32.xlu0 %v1046
  %v1048 = vpop.xlane.xlu0 %1047
  %v1049 = vsel %vm1030, %v1028, -inf
  %1050 = vmax.xlane.f32.xlu0 %v1049
  %v1051 = vpop.xlane.xlu0 %1050
  %v1052 = vsel %vm1030, %v1029, -inf
  %1053 = vmax.xlane.f32.xlu0 %v1052
  %v1054 = vpop.xlane.xlu0 %1053
  %v1055 = vsub.f32 %v1022, %v1033
  %v1056 = vsub.f32 %v1023, %v1036
  %v1057 = vsub.f32 %v1024, %v1039
  %v1058 = vsub.f32 %v1025, %v1042
  %v1059 = vsub.f32 %v1026, %v1045
  %v1060 = vsub.f32 %v1027, %v1048
  %v1061 = vsub.f32 %v1028, %v1051
  %v1062 = vsub.f32 %v1029, %v1054
  %v1063 = vmul.f32 %v1055, 1.442695
  %v1064 = vpow.pop %v1063
  %v1065 = vmul.f32 %v1056, 1.442695
  %v1066 = vpow.pop %v1065
  %v1067 = vmul.f32 %v1057, 1.442695
  %v1068 = vpow.pop %v1067
  %v1069 = vmul.f32 %v1058, 1.442695
  %v1070 = vpow.pop %v1069
  %v1071 = vmul.f32 %v1059, 1.442695
  %v1072 = vpow.pop %v1071
  %v1073 = vmul.f32 %v1060, 1.442695
  %v1074 = vpow.pop %v1073
  %v1075 = vmul.f32 %v1061, 1.442695
  %v1076 = vpow.pop %v1075
  %v1077 = vmul.f32 %v1062, 1.442695
  %v1078 = vpow.pop %v1077
  %v1079 = vsel %vm1030, %v1064, 0.0
  %1080 = vadd.xlane.f32.xlu0 %v1079
  %v1081 = vpop.xlane.xlu0 %1080
  %v1082 = vsel %vm1030, %v1066, 0.0
  %1083 = vadd.xlane.f32.xlu0 %v1082
  %v1084 = vpop.xlane.xlu0 %1083
  %v1085 = vsel %vm1030, %v1068, 0.0
  %1086 = vadd.xlane.f32.xlu0 %v1085
  %v1087 = vpop.xlane.xlu0 %1086
  %v1088 = vsel %vm1030, %v1070, 0.0
  %1089 = vadd.xlane.f32.xlu0 %v1088
  %v1090 = vpop.xlane.xlu0 %1089
  %v1091 = vsel %vm1030, %v1072, 0.0
  %1092 = vadd.xlane.f32.xlu0 %v1091
  %v1093 = vpop.xlane.xlu0 %1092
  %v1094 = vsel %vm1030, %v1074, 0.0
  %1095 = vadd.xlane.f32.xlu0 %v1094
  %v1096 = vpop.xlane.xlu0 %1095
  %v1097 = vsel %vm1030, %v1076, 0.0
  %1098 = vadd.xlane.f32.xlu0 %v1097
  %v1099 = vpop.xlane.xlu0 %1098
  %v1100 = vsel %vm1030, %v1078, 0.0
  %1101 = vadd.xlane.f32.xlu0 %v1100
  %v1102 = vpop.xlane.xlu0 %1101
  %v1103 = vrcp.pop %v1081
  %v1104 = vrcp.pop %v1084
  %v1105 = vrcp.pop %v1087
  %v1106 = vrcp.pop %v1090
  %v1107 = vrcp.pop %v1093
  %v1108 = vrcp.pop %v1096
  %v1109 = vrcp.pop %v1099
  %v1110 = vrcp.pop %v1102
  %v1111 = vmul.f32 %v1064, %v1103
  %v1112 = vmul.f32 %v1066, %v1104
  %v1113 = vmul.f32 %v1068, %v1105
  %v1114 = vmul.f32 %v1070, %v1106
  %v1115 = vmul.f32 %v1072, %v1107
  %v1116 = vmul.f32 %v1074, %v1108
  %v1117 = vmul.f32 %v1076, %v1109
  %v1118 = vmul.f32 %v1078, %v1110
  %1119 = vrot.lane.b32.xlu0 %v304, 64
  %v1120 = vpop.permute.xlu0 %1119
  %v1123 = vsel %vm1030, %v1111, 0
  %1125 = vmatprep.subr.mxu0 0.0
  %1126 = vmatpush1.msra.mxu0 %v1120
  %1127 = vmatprep.subr.mxu0 0.0
  %1128 = vmatpush1.msra.mxu0 0.0
  %1129 = vmatprep.subr.mxu0 0.0
  %1130 = vmatpush1.msra.mxu0 0.0
  %1131 = vmatprep.subr.mxu0 0.0
  %1132 = vmatpush1.msra.mxu0 0.0
  %1133 = vmatprep.subr.mxu0 0.0
  %1134 = vmatpush1.msra.mxu0 0.0
  %1135 = vmatprep.subr.mxu0 0.0
  %1136 = vmatpush1.msra.mxu0 0.0
  %1137 = vmatprep.subr.mxu0 0.0
  %1138 = vmatpush1.msra.mxu0 0.0
  %1139 = vmatprep.subr.mxu0 0.0
  %1140 = vmatpush1.msra.mxu0 0.0
  %1141 = vmatprep.subr.mxu0 0.0
  %1142 = vmatpush1.msra.mxu0 0.0
  %1143 = vmatprep.subr.mxu0 0.0
  %1144 = vmatpush1.msra.mxu0 0.0
  %1145 = vmatprep.subr.mxu0 0.0
  %1146 = vmatpush1.msra.mxu0 0.0
  %1147 = vmatprep.subr.mxu0 0.0
  %1148 = vmatpush1.msra.mxu0 0.0
  %1149 = vmatprep.subr.mxu0 0.0
  %1150 = vmatpush1.msra.mxu0 0.0
  %1151 = vmatprep.subr.mxu0 0.0
  %1152 = vmatpush1.msra.mxu0 0.0
  %1153 = vmatprep.subr.mxu0 0.0
  %1154 = vmatpush1.msra.mxu0 0.0
  %1155 = vmatprep.subr.mxu0 0.0
  %1156 = vmatpush1.msra.mxu0 0.0
  %1157 = vmatprep.subr.mxu0 0.0
  %1158 = vmatpush1.msra.mxu0 0.0
  %1159 = vmatprep.subr.mxu0 0.0
  %1160 = vmatpush1.msra.mxu0 0.0
  %1161 = vmatprep.subr.mxu0 0.0
  %1162 = vmatpush1.msra.mxu0 0.0
  %1163 = vmatprep.subr.mxu0 0.0
  %1164 = vmatpush1.msra.mxu0 0.0
  %1165 = vmatprep.subr.mxu0 0.0
  %1166 = vmatpush1.msra.mxu0 0.0
  %1167 = vmatprep.subr.mxu0 0.0
  %1168 = vmatpush1.msra.mxu0 0.0
  %1169 = vmatprep.subr.mxu0 0.0
  %1170 = vmatpush1.msra.mxu0 0.0
  %1171 = vmatprep.subr.mxu0 0.0
  %1172 = vmatpush1.msra.mxu0 0.0
  %1173 = vmatprep.subr.mxu0 0.0
  %1174 = vmatpush1.msra.mxu0 0.0
  %1175 = vmatprep.subr.mxu0 0.0
  %1176 = vmatpush1.msra.mxu0 0.0
  %1177 = vmatprep.subr.mxu0 0.0
  %1178 = vmatpush1.msra.mxu0 0.0
  %1179 = vmatprep.subr.mxu0 0.0
  %1180 = vmatpush1.msra.mxu0 0.0
  %1181 = vmatprep.subr.mxu0 0.0
  %1182 = vmatpush1.msra.mxu0 0.0
  %1183 = vmatprep.subr.mxu0 0.0
  %1184 = vmatpush1.msra.mxu0 0.0
  %1185 = vmatprep.subr.mxu0 0.0
  %1186 = vmatpush1.msra.mxu0 0.0
  %1187 = vmatprep.subr.mxu0 0.0
  %1188 = vmatpush1.msra.mxu0 0.0
  %1189 = vmatprep.mubr.f32.mxu0 0.0
  %1190 = vmatmul.mubr.f32.gmra.mrb[0].mxu0 %v1123
  %v1191 = vpop.f32.mrb[0].mxu0
  %v1192 = vadd.f32 0.0, %v1191
  %v1193 = vpop.f32.mrb[0].mxu0
  %1194 = vdwg.mxu0
  %1195 = vrot.lane.b32.xlu0 %v309, 64
  %v1196 = vpop.permute.xlu0 %1195
  %v1199 = vsel %vm1030, %v1112, 0
  %1201 = vmatprep.subr.mxu0 0.0
  %1202 = vmatpush1.msra.mxu0 %v1196
  %1203 = vmatprep.subr.mxu0 0.0
  %1204 = vmatpush1.msra.mxu0 0.0
  %1205 = vmatprep.subr.mxu0 0.0
  %1206 = vmatpush1.msra.mxu0 0.0
  %1207 = vmatprep.subr.mxu0 0.0
  %1208 = vmatpush1.msra.mxu0 0.0
  %1209 = vmatprep.subr.mxu0 0.0
  %1210 = vmatpush1.msra.mxu0 0.0
  %1211 = vmatprep.subr.mxu0 0.0
  %1212 = vmatpush1.msra.mxu0 0.0
  %1213 = vmatprep.subr.mxu0 0.0
  %1214 = vmatpush1.msra.mxu0 0.0
  %1215 = vmatprep.subr.mxu0 0.0
  %1216 = vmatpush1.msra.mxu0 0.0
  %1217 = vmatprep.subr.mxu0 0.0
  %1218 = vmatpush1.msra.mxu0 0.0
  %1219 = vmatprep.subr.mxu0 0.0
  %1220 = vmatpush1.msra.mxu0 0.0
  %1221 = vmatprep.subr.mxu0 0.0
  %1222 = vmatpush1.msra.mxu0 0.0
  %1223 = vmatprep.subr.mxu0 0.0
  %1224 = vmatpush1.msra.mxu0 0.0
  %1225 = vmatprep.subr.mxu0 0.0
  %1226 = vmatpush1.msra.mxu0 0.0
  %1227 = vmatprep.subr.mxu0 0.0
  %1228 = vmatpush1.msra.mxu0 0.0
  %1229 = vmatprep.subr.mxu0 0.0
  %1230 = vmatpush1.msra.mxu0 0.0
  %1231 = vmatprep.subr.mxu0 0.0
  %1232 = vmatpush1.msra.mxu0 0.0
  %1233 = vmatprep.subr.mxu0 0.0
  %1234 = vmatpush1.msra.mxu0 0.0
  %1235 = vmatprep.subr.mxu0 0.0
  %1236 = vmatpush1.msra.mxu0 0.0
  %1237 = vmatprep.subr.mxu0 0.0
  %1238 = vmatpush1.msra.mxu0 0.0
  %1239 = vmatprep.subr.mxu0 0.0
  %1240 = vmatpush1.msra.mxu0 0.0
  %1241 = vmatprep.subr.mxu0 0.0
  %1242 = vmatpush1.msra.mxu0 0.0
  %1243 = vmatprep.subr.mxu0 0.0
  %1244 = vmatpush1.msra.mxu0 0.0
  %1245 = vmatprep.subr.mxu0 0.0
  %1246 = vmatpush1.msra.mxu0 0.0
  %1247 = vmatprep.subr.mxu0 0.0
  %1248 = vmatpush1.msra.mxu0 0.0
  %1249 = vmatprep.subr.mxu0 0.0
  %1250 = vmatpush1.msra.mxu0 0.0
  %1251 = vmatprep.subr.mxu0 0.0
  %1252 = vmatpush1.msra.mxu0 0.0
  %1253 = vmatprep.subr.mxu0 0.0
  %1254 = vmatpush1.msra.mxu0 0.0
  %1255 = vmatprep.subr.mxu0 0.0
  %1256 = vmatpush1.msra.mxu0 0.0
  %1257 = vmatprep.subr.mxu0 0.0
  %1258 = vmatpush1.msra.mxu0 0.0
  %1259 = vmatprep.subr.mxu0 0.0
  %1260 = vmatpush1.msra.mxu0 0.0
  %1261 = vmatprep.subr.mxu0 0.0
  %1262 = vmatpush1.msra.mxu0 0.0
  %1263 = vmatprep.subr.mxu0 0.0
  %1264 = vmatpush1.msra.mxu0 0.0
  %1265 = vmatprep.mubr.f32.mxu0 0.0
  %1266 = vmatmul.mubr.f32.gmra.mrb[0].mxu0 %v1199
  %v1267 = vpop.f32.mrb[0].mxu0
  %v1268 = vadd.f32 0.0, %v1267
  %v1269 = vpop.f32.mrb[0].mxu0
  %1270 = vdwg.mxu0
  %1271 = vrot.lane.b32.xlu0 %v314, 64
  %v1272 = vpop.permute.xlu0 %1271
  %v1275 = vsel %vm1030, %v1113, 0
  %1277 = vmatprep.subr.mxu0 0.0
  %1278 = vmatpush1.msra.mxu0 %v1272
  %1279 = vmatprep.subr.mxu0 0.0
  %1280 = vmatpush1.msra.mxu0 0.0
  %1281 = vmatprep.subr.mxu0 0.0
  %1282 = vmatpush1.msra.mxu0 0.0
  %1283 = vmatprep.subr.mxu0 0.0
  %1284 = vmatpush1.msra.mxu0 0.0
  %1285 = vmatprep.subr.mxu0 0.0
  %1286 = vmatpush1.msra.mxu0 0.0
  %1287 = vmatprep.subr.mxu0 0.0
  %1288 = vmatpush1.msra.mxu0 0.0
  %1289 = vmatprep.subr.mxu0 0.0
  %1290 = vmatpush1.msra.mxu0 0.0
  %1291 = vmatprep.subr.mxu0 0.0
  %1292 = vmatpush1.msra.mxu0 0.0
  %1293 = vmatprep.subr.mxu0 0.0
  %1294 = vmatpush1.msra.mxu0 0.0
  %1295 = vmatprep.subr.mxu0 0.0
  %1296 = vmatpush1.msra.mxu0 0.0
  %1297 = vmatprep.subr.mxu0 0.0
  %1298 = vmatpush1.msra.mxu0 0.0
  %1299 = vmatprep.subr.mxu0 0.0
  %1300 = vmatpush1.msra.mxu0 0.0
  %1301 = vmatprep.subr.mxu0 0.0
  %1302 = vmatpush1.msra.mxu0 0.0
  %1303 = vmatprep.subr.mxu0 0.0
  %1304 = vmatpush1.msra.mxu0 0.0
  %1305 = vmatprep.subr.mxu0 0.0
  %1306 = vmatpush1.msra.mxu0 0.0
  %1307 = vmatprep.subr.mxu0 0.0
  %1308 = vmatpush1.msra.mxu0 0.0
  %1309 = vmatprep.subr.mxu0 0.0
  %1310 = vmatpush1.msra.mxu0 0.0
  %1311 = vmatprep.subr.mxu0 0.0
  %1312 = vmatpush1.msra.mxu0 0.0
  %1313 = vmatprep.subr.mxu0 0.0
  %1314 = vmatpush1.msra.mxu0 0.0
  %1315 = vmatprep.subr.mxu0 0.0
  %1316 = vmatpush1.msra.mxu0 0.0
  %1317 = vmatprep.subr.mxu0 0.0
  %1318 = vmatpush1.msra.mxu0 0.0
  %1319 = vmatprep.subr.mxu0 0.0
  %1320 = vmatpush1.msra.mxu0 0.0
  %1321 = vmatprep.subr.mxu0 0.0
  %1322 = vmatpush1.msra.mxu0 0.0
  %1323 = vmatprep.subr.mxu0 0.0
  %1324 = vmatpush1.msra.mxu0 0.0
  %1325 = vmatprep.subr.mxu0 0.0
  %1326 = vmatpush1.msra.mxu0 0.0
  %1327 = vmatprep.subr.mxu0 0.0
  %1328 = vmatpush1.msra.mxu0 0.0
  %1329 = vmatprep.subr.mxu0 0.0
  %1330 = vmatpush1.msra.mxu0 0.0
  %1331 = vmatprep.subr.mxu0 0.0
  %1332 = vmatpush1.msra.mxu0 0.0
  %1333 = vmatprep.subr.mxu0 0.0
  %1334 = vmatpush1.msra.mxu0 0.0
  %1335 = vmatprep.subr.mxu0 0.0
  %1336 = vmatpush1.msra.mxu0 0.0
  %1337 = vmatprep.subr.mxu0 0.0
  %1338 = vmatpush1.msra.mxu0 0.0
  %1339 = vmatprep.subr.mxu0 0.0
  %1340 = vmatpush1.msra.mxu0 0.0
  %1341 = vmatprep.mubr.f32.mxu0 0.0
  %1342 = vmatmul.mubr.f32.gmra.mrb[0].mxu0 %v1275
  %v1343 = vpop.f32.mrb[0].mxu0
  %v1344 = vadd.f32 0.0, %v1343
  %v1345 = vpop.f32.mrb[0].mxu0
  %1346 = vdwg.mxu0
  %1347 = vrot.lane.b32.xlu0 %v319, 64
  %v1348 = vpop.permute.xlu0 %1347
  %v1351 = vsel %vm1030, %v1114, 0
  %1353 = vmatprep.subr.mxu0 0.0
  %1354 = vmatpush1.msra.mxu0 %v1348
  %1355 = vmatprep.subr.mxu0 0.0
  %1356 = vmatpush1.msra.mxu0 0.0
  %1357 = vmatprep.subr.mxu0 0.0
  %1358 = vmatpush1.msra.mxu0 0.0
  %1359 = vmatprep.subr.mxu0 0.0
  %1360 = vmatpush1.msra.mxu0 0.0
  %1361 = vmatprep.subr.mxu0 0.0
  %1362 = vmatpush1.msra.mxu0 0.0
  %1363 = vmatprep.subr.mxu0 0.0
  %1364 = vmatpush1.msra.mxu0 0.0
  %1365 = vmatprep.subr.mxu0 0.0
  %1366 = vmatpush1.msra.mxu0 0.0
  %1367 = vmatprep.subr.mxu0 0.0
  %1368 = vmatpush1.msra.mxu0 0.0
  %1369 = vmatprep.subr.mxu0 0.0
  %1370 = vmatpush1.msra.mxu0 0.0
  %1371 = vmatprep.subr.mxu0 0.0
  %1372 = vmatpush1.msra.mxu0 0.0
  %1373 = vmatprep.subr.mxu0 0.0
  %1374 = vmatpush1.msra.mxu0 0.0
  %1375 = vmatprep.subr.mxu0 0.0
  %1376 = vmatpush1.msra.mxu0 0.0
  %1377 = vmatprep.subr.mxu0 0.0
  %1378 = vmatpush1.msra.mxu0 0.0
  %1379 = vmatprep.subr.mxu0 0.0
  %1380 = vmatpush1.msra.mxu0 0.0
  %1381 = vmatprep.subr.mxu0 0.0
  %1382 = vmatpush1.msra.mxu0 0.0
  %1383 = vmatprep.subr.mxu0 0.0
  %1384 = vmatpush1.msra.mxu0 0.0
  %1385 = vmatprep.subr.mxu0 0.0
  %1386 = vmatpush1.msra.mxu0 0.0
  %1387 = vmatprep.subr.mxu0 0.0
  %1388 = vmatpush1.msra.mxu0 0.0
  %1389 = vmatprep.subr.mxu0 0.0
  %1390 = vmatpush1.msra.mxu0 0.0
  %1391 = vmatprep.subr.mxu0 0.0
  %1392 = vmatpush1.msra.mxu0 0.0
  %1393 = vmatprep.subr.mxu0 0.0
  %1394 = vmatpush1.msra.mxu0 0.0
  %1395 = vmatprep.subr.mxu0 0.0
  %1396 = vmatpush1.msra.mxu0 0.0
  %1397 = vmatprep.subr.mxu0 0.0
  %1398 = vmatpush1.msra.mxu0 0.0
  %1399 = vmatprep.subr.mxu0 0.0
  %1400 = vmatpush1.msra.mxu0 0.0
  %1401 = vmatprep.subr.mxu0 0.0
  %1402 = vmatpush1.msra.mxu0 0.0
  %1403 = vmatprep.subr.mxu0 0.0
  %1404 = vmatpush1.msra.mxu0 0.0
  %1405 = vmatprep.subr.mxu0 0.0
  %1406 = vmatpush1.msra.mxu0 0.0
  %1407 = vmatprep.subr.mxu0 0.0
  %1408 = vmatpush1.msra.mxu0 0.0
  %1409 = vmatprep.subr.mxu0 0.0
  %1410 = vmatpush1.msra.mxu0 0.0
  %1411 = vmatprep.subr.mxu0 0.0
  %1412 = vmatpush1.msra.mxu0 0.0
  %1413 = vmatprep.subr.mxu0 0.0
  %1414 = vmatpush1.msra.mxu0 0.0
  %1415 = vmatprep.subr.mxu0 0.0
  %1416 = vmatpush1.msra.mxu0 0.0
  %1417 = vmatprep.mubr.f32.mxu0 0.0
  %1418 = vmatmul.mubr.f32.gmra.mrb[0].mxu0 %v1351
  %v1419 = vpop.f32.mrb[0].mxu0
  %v1420 = vadd.f32 0.0, %v1419
  %v1421 = vpop.f32.mrb[0].mxu0
  %1422 = vdwg.mxu0
  %1423 = vrot.lane.b32.xlu0 %v324, 64
  %v1424 = vpop.permute.xlu0 %1423
  %v1427 = vsel %vm1030, %v1115, 0
  %1429 = vmatprep.subr.mxu0 0.0
  %1430 = vmatpush1.msra.mxu0 %v1424
  %1431 = vmatprep.subr.mxu0 0.0
  %1432 = vmatpush1.msra.mxu0 0.0
  %1433 = vmatprep.subr.mxu0 0.0
  %1434 = vmatpush1.msra.mxu0 0.0
  %1435 = vmatprep.subr.mxu0 0.0
  %1436 = vmatpush1.msra.mxu0 0.0
  %1437 = vmatprep.subr.mxu0 0.0
  %1438 = vmatpush1.msra.mxu0 0.0
  %1439 = vmatprep.subr.mxu0 0.0
  %1440 = vmatpush1.msra.mxu0 0.0
  %1441 = vmatprep.subr.mxu0 0.0
  %1442 = vmatpush1.msra.mxu0 0.0
  %1443 = vmatprep.subr.mxu0 0.0
  %1444 = vmatpush1.msra.mxu0 0.0
  %1445 = vmatprep.subr.mxu0 0.0
  %1446 = vmatpush1.msra.mxu0 0.0
  %1447 = vmatprep.subr.mxu0 0.0
  %1448 = vmatpush1.msra.mxu0 0.0
  %1449 = vmatprep.subr.mxu0 0.0
  %1450 = vmatpush1.msra.mxu0 0.0
  %1451 = vmatprep.subr.mxu0 0.0
  %1452 = vmatpush1.msra.mxu0 0.0
  %1453 = vmatprep.subr.mxu0 0.0
  %1454 = vmatpush1.msra.mxu0 0.0
  %1455 = vmatprep.subr.mxu0 0.0
  %1456 = vmatpush1.msra.mxu0 0.0
  %1457 = vmatprep.subr.mxu0 0.0
  %1458 = vmatpush1.msra.mxu0 0.0
  %1459 = vmatprep.subr.mxu0 0.0
  %1460 = vmatpush1.msra.mxu0 0.0
  %1461 = vmatprep.subr.mxu0 0.0
  %1462 = vmatpush1.msra.mxu0 0.0
  %1463 = vmatprep.subr.mxu0 0.0
  %1464 = vmatpush1.msra.mxu0 0.0
  %1465 = vmatprep.subr.mxu0 0.0
  %1466 = vmatpush1.msra.mxu0 0.0
  %1467 = vmatprep.subr.mxu0 0.0
  %1468 = vmatpush1.msra.mxu0 0.0
  %1469 = vmatprep.subr.mxu0 0.0
  %1470 = vmatpush1.msra.mxu0 0.0
  %1471 = vmatprep.subr.mxu0 0.0
  %1472 = vmatpush1.msra.mxu0 0.0
  %1473 = vmatprep.subr.mxu0 0.0
  %1474 = vmatpush1.msra.mxu0 0.0
  %1475 = vmatprep.subr.mxu0 0.0
  %1476 = vmatpush1.msra.mxu0 0.0
  %1477 = vmatprep.subr.mxu0 0.0
  %1478 = vmatpush1.msra.mxu0 0.0
  %1479 = vmatprep.subr.mxu0 0.0
  %1480 = vmatpush1.msra.mxu0 0.0
  %1481 = vmatprep.subr.mxu0 0.0
  %1482 = vmatpush1.msra.mxu0 0.0
  %1483 = vmatprep.subr.mxu0 0.0
  %1484 = vmatpush1.msra.mxu0 0.0
  %1485 = vmatprep.subr.mxu0 0.0
  %1486 = vmatpush1.msra.mxu0 0.0
  %1487 = vmatprep.subr.mxu0 0.0
  %1488 = vmatpush1.msra.mxu0 0.0
  %1489 = vmatprep.subr.mxu0 0.0
  %1490 = vmatpush1.msra.mxu0 0.0
  %1491 = vmatprep.subr.mxu0 0.0
  %1492 = vmatpush1.msra.mxu0 0.0
  %1493 = vmatprep.mubr.f32.mxu0 0.0
  %1494 = vmatmul.mubr.f32.gmra.mrb[0].mxu0 %v1427
  %v1495 = vpop.f32.mrb[0].mxu0
  %v1496 = vadd.f32 0.0, %v1495
  %v1497 = vpop.f32.mrb[0].mxu0
  %1498 = vdwg.mxu0
  %1499 = vrot.lane.b32.xlu0 %v329, 64
  %v1500 = vpop.permute.xlu0 %1499
  %v1503 = vsel %vm1030, %v1116, 0
  %1505 = vmatprep.subr.mxu0 0.0
  %1506 = vmatpush1.msra.mxu0 %v1500
  %1507 = vmatprep.subr.mxu0 0.0
  %1508 = vmatpush1.msra.mxu0 0.0
  %1509 = vmatprep.subr.mxu0 0.0
  %1510 = vmatpush1.msra.mxu0 0.0
  %1511 = vmatprep.subr.mxu0 0.0
  %1512 = vmatpush1.msra.mxu0 0.0
  %1513 = vmatprep.subr.mxu0 0.0
  %1514 = vmatpush1.msra.mxu0 0.0
  %1515 = vmatprep.subr.mxu0 0.0
  %1516 = vmatpush1.msra.mxu0 0.0
  %1517 = vmatprep.subr.mxu0 0.0
  %1518 = vmatpush1.msra.mxu0 0.0
  %1519 = vmatprep.subr.mxu0 0.0
  %1520 = vmatpush1.msra.mxu0 0.0
  %1521 = vmatprep.subr.mxu0 0.0
  %1522 = vmatpush1.msra.mxu0 0.0
  %1523 = vmatprep.subr.mxu0 0.0
  %1524 = vmatpush1.msra.mxu0 0.0
  %1525 = vmatprep.subr.mxu0 0.0
  %1526 = vmatpush1.msra.mxu0 0.0
  %1527 = vmatprep.subr.mxu0 0.0
  %1528 = vmatpush1.msra.mxu0 0.0
  %1529 = vmatprep.subr.mxu0 0.0
  %1530 = vmatpush1.msra.mxu0 0.0
  %1531 = vmatprep.subr.mxu0 0.0
  %1532 = vmatpush1.msra.mxu0 0.0
  %1533 = vmatprep.subr.mxu0 0.0
  %1534 = vmatpush1.msra.mxu0 0.0
  %1535 = vmatprep.subr.mxu0 0.0
  %1536 = vmatpush1.msra.mxu0 0.0
  %1537 = vmatprep.subr.mxu0 0.0
  %1538 = vmatpush1.msra.mxu0 0.0
  %1539 = vmatprep.subr.mxu0 0.0
  %1540 = vmatpush1.msra.mxu0 0.0
  %1541 = vmatprep.subr.mxu0 0.0
  %1542 = vmatpush1.msra.mxu0 0.0
  %1543 = vmatprep.subr.mxu0 0.0
  %1544 = vmatpush1.msra.mxu0 0.0
  %1545 = vmatprep.subr.mxu0 0.0
  %1546 = vmatpush1.msra.mxu0 0.0
  %1547 = vmatprep.subr.mxu0 0.0
  %1548 = vmatpush1.msra.mxu0 0.0
  %1549 = vmatprep.subr.mxu0 0.0
  %1550 = vmatpush1.msra.mxu0 0.0
  %1551 = vmatprep.subr.mxu0 0.0
  %1552 = vmatpush1.msra.mxu0 0.0
  %1553 = vmatprep.subr.mxu0 0.0
  %1554 = vmatpush1.msra.mxu0 0.0
  %1555 = vmatprep.subr.mxu0 0.0
  %1556 = vmatpush1.msra.mxu0 0.0
  %1557 = vmatprep.subr.mxu0 0.0
  %1558 = vmatpush1.msra.mxu0 0.0
  %1559 = vmatprep.subr.mxu0 0.0
  %1560 = vmatpush1.msra.mxu0 0.0
  %1561 = vmatprep.subr.mxu0 0.0
  %1562 = vmatpush1.msra.mxu0 0.0
  %1563 = vmatprep.subr.mxu0 0.0
  %1564 = vmatpush1.msra.mxu0 0.0
  %1565 = vmatprep.subr.mxu0 0.0
  %1566 = vmatpush1.msra.mxu0 0.0
  %1567 = vmatprep.subr.mxu0 0.0
  %1568 = vmatpush1.msra.mxu0 0.0
  %1569 = vmatprep.mubr.f32.mxu0 0.0
  %1570 = vmatmul.mubr.f32.gmra.mrb[0].mxu0 %v1503
  %v1571 = vpop.f32.mrb[0].mxu0
  %v1572 = vadd.f32 0.0, %v1571
  %v1573 = vpop.f32.mrb[0].mxu0
  %1574 = vdwg.mxu0
  %1575 = vrot.lane.b32.xlu0 %v334, 64
  %v1576 = vpop.permute.xlu0 %1575
  %v1579 = vsel %vm1030, %v1117, 0
  %1581 = vmatprep.subr.mxu0 0.0
  %1582 = vmatpush1.msra.mxu0 %v1576
  %1583 = vmatprep.subr.mxu0 0.0
  %1584 = vmatpush1.msra.mxu0 0.0
  %1585 = vmatprep.subr.mxu0 0.0
  %1586 = vmatpush1.msra.mxu0 0.0
  %1587 = vmatprep.subr.mxu0 0.0
  %1588 = vmatpush1.msra.mxu0 0.0
  %1589 = vmatprep.subr.mxu0 0.0
  %1590 = vmatpush1.msra.mxu0 0.0
  %1591 = vmatprep.subr.mxu0 0.0
  %1592 = vmatpush1.msra.mxu0 0.0
  %1593 = vmatprep.subr.mxu0 0.0
  %1594 = vmatpush1.msra.mxu0 0.0
  %1595 = vmatprep.subr.mxu0 0.0
  %1596 = vmatpush1.msra.mxu0 0.0
  %1597 = vmatprep.subr.mxu0 0.0
  %1598 = vmatpush1.msra.mxu0 0.0
  %1599 = vmatprep.subr.mxu0 0.0
  %1600 = vmatpush1.msra.mxu0 0.0
  %1601 = vmatprep.subr.mxu0 0.0
  %1602 = vmatpush1.msra.mxu0 0.0
  %1603 = vmatprep.subr.mxu0 0.0
  %1604 = vmatpush1.msra.mxu0 0.0
  %1605 = vmatprep.subr.mxu0 0.0
  %1606 = vmatpush1.msra.mxu0 0.0
  %1607 = vmatprep.subr.mxu0 0.0
  %1608 = vmatpush1.msra.mxu0 0.0
  %1609 = vmatprep.subr.mxu0 0.0
  %1610 = vmatpush1.msra.mxu0 0.0
  %1611 = vmatprep.subr.mxu0 0.0
  %1612 = vmatpush1.msra.mxu0 0.0
  %1613 = vmatprep.subr.mxu0 0.0
  %1614 = vmatpush1.msra.mxu0 0.0
  %1615 = vmatprep.subr.mxu0 0.0
  %1616 = vmatpush1.msra.mxu0 0.0
  %1617 = vmatprep.subr.mxu0 0.0
  %1618 = vmatpush1.msra.mxu0 0.0
  %1619 = vmatprep.subr.mxu0 0.0
  %1620 = vmatpush1.msra.mxu0 0.0
  %1621 = vmatprep.subr.mxu0 0.0
  %1622 = vmatpush1.msra.mxu0 0.0
  %1623 = vmatprep.subr.mxu0 0.0
  %1624 = vmatpush1.msra.mxu0 0.0
  %1625 = vmatprep.subr.mxu0 0.0
  %1626 = vmatpush1.msra.mxu0 0.0
  %1627 = vmatprep.subr.mxu0 0.0
  %1628 = vmatpush1.msra.mxu0 0.0
  %1629 = vmatprep.subr.mxu0 0.0
  %1630 = vmatpush1.msra.mxu0 0.0
  %1631 = vmatprep.subr.mxu0 0.0
  %1632 = vmatpush1.msra.mxu0 0.0
  %1633 = vmatprep.subr.mxu0 0.0
  %1634 = vmatpush1.msra.mxu0 0.0
  %1635 = vmatprep.subr.mxu0 0.0
  %1636 = vmatpush1.msra.mxu0 0.0
  %1637 = vmatprep.subr.mxu0 0.0
  %1638 = vmatpush1.msra.mxu0 0.0
  %1639 = vmatprep.subr.mxu0 0.0
  %1640 = vmatpush1.msra.mxu0 0.0
  %1641 = vmatprep.subr.mxu0 0.0
  %1642 = vmatpush1.msra.mxu0 0.0
  %1643 = vmatprep.subr.mxu0 0.0
  %1644 = vmatpush1.msra.mxu0 0.0
  %1645 = vmatprep.mubr.f32.mxu0 0.0
  %1646 = vmatmul.mubr.f32.gmra.mrb[0].mxu0 %v1579
  %v1647 = vpop.f32.mrb[0].mxu0
  %v1648 = vadd.f32 0.0, %v1647
  %v1649 = vpop.f32.mrb[0].mxu0
  %1650 = vdwg.mxu0
  %1651 = vrot.lane.b32.xlu0 %v339, 64
  %v1652 = vpop.permute.xlu0 %1651
  %v1655 = vsel %vm1030, %v1118, 0
  %1657 = vmatprep.subr.mxu0 0.0
  %1658 = vmatpush1.msra.mxu0 %v1652
  %1659 = vmatprep.subr.mxu0 0.0
  %1660 = vmatpush1.msra.mxu0 0.0
  %1661 = vmatprep.subr.mxu0 0.0
  %1662 = vmatpush1.msra.mxu0 0.0
  %1663 = vmatprep.subr.mxu0 0.0
  %1664 = vmatpush1.msra.mxu0 0.0
  %1665 = vmatprep.subr.mxu0 0.0
  %1666 = vmatpush1.msra.mxu0 0.0
  %1667 = vmatprep.subr.mxu0 0.0
  %1668 = vmatpush1.msra.mxu0 0.0
  %1669 = vmatprep.subr.mxu0 0.0
  %1670 = vmatpush1.msra.mxu0 0.0
  %1671 = vmatprep.subr.mxu0 0.0
  %1672 = vmatpush1.msra.mxu0 0.0
  %1673 = vmatprep.subr.mxu0 0.0
  %1674 = vmatpush1.msra.mxu0 0.0
  %1675 = vmatprep.subr.mxu0 0.0
  %1676 = vmatpush1.msra.mxu0 0.0
  %1677 = vmatprep.subr.mxu0 0.0
  %1678 = vmatpush1.msra.mxu0 0.0
  %1679 = vmatprep.subr.mxu0 0.0
  %1680 = vmatpush1.msra.mxu0 0.0
  %1681 = vmatprep.subr.mxu0 0.0
  %1682 = vmatpush1.msra.mxu0 0.0
  %1683 = vmatprep.subr.mxu0 0.0
  %1684 = vmatpush1.msra.mxu0 0.0
  %1685 = vmatprep.subr.mxu0 0.0
  %1686 = vmatpush1.msra.mxu0 0.0
  %1687 = vmatprep.subr.mxu0 0.0
  %1688 = vmatpush1.msra.mxu0 0.0
  %1689 = vmatprep.subr.mxu0 0.0
  %1690 = vmatpush1.msra.mxu0 0.0
  %1691 = vmatprep.subr.mxu0 0.0
  %1692 = vmatpush1.msra.mxu0 0.0
  %1693 = vmatprep.subr.mxu0 0.0
  %1694 = vmatpush1.msra.mxu0 0.0
  %1695 = vmatprep.subr.mxu0 0.0
  %1696 = vmatpush1.msra.mxu0 0.0
  %1697 = vmatprep.subr.mxu0 0.0
  %1698 = vmatpush1.msra.mxu0 0.0
  %1699 = vmatprep.subr.mxu0 0.0
  %1700 = vmatpush1.msra.mxu0 0.0
  %1701 = vmatprep.subr.mxu0 0.0
  %1702 = vmatpush1.msra.mxu0 0.0
  %1703 = vmatprep.subr.mxu0 0.0
  %1704 = vmatpush1.msra.mxu0 0.0
  %1705 = vmatprep.subr.mxu0 0.0
  %1706 = vmatpush1.msra.mxu0 0.0
  %1707 = vmatprep.subr.mxu0 0.0
  %1708 = vmatpush1.msra.mxu0 0.0
  %1709 = vmatprep.subr.mxu0 0.0
  %1710 = vmatpush1.msra.mxu0 0.0
  %1711 = vmatprep.subr.mxu0 0.0
  %1712 = vmatpush1.msra.mxu0 0.0
  %1713 = vmatprep.subr.mxu0 0.0
  %1714 = vmatpush1.msra.mxu0 0.0
  %1715 = vmatprep.subr.mxu0 0.0
  %1716 = vmatpush1.msra.mxu0 0.0
  %1717 = vmatprep.subr.mxu0 0.0
  %1718 = vmatpush1.msra.mxu0 0.0
  %1719 = vmatprep.subr.mxu0 0.0
  %1720 = vmatpush1.msra.mxu0 0.0
  %1721 = vmatprep.mubr.f32.mxu0 0.0
  %1722 = vmatmul.mubr.f32.gmra.mrb[0].mxu0 %v1655
  %v1723 = vpop.f32.mrb[0].mxu0
  %v1724 = vadd.f32 0.0, %v1723
  %v1725 = vpop.f32.mrb[0].mxu0
  %1726 = vdwg.mxu0
  %v1727 = vld [vmem:[%s5] sm:$0xff]
  %v1728 = vld [vmem:[%s5 + $0x8] sm:$0xff]
  %v1729 = vld [vmem:[%s5 + $0x10] sm:$0xff]
  %v1730 = vld [vmem:[%s5 + $0x18] sm:$0xff]
  %v1731 = vld [vmem:[%s6] sm:$0x1]
  %v1733 = vlaneseq
  %v1734 = vshrl.u32 %v1733, 7
  %v1735 = vsub.s32 0, %v1734
  %v1736 = vrot.slane %v1731, %v1735
  %v1739 = vsel %vm68, %v1192, 0
  %v1742 = vsel %vm68, %v1268, 0
  %v1745 = vsel %vm68, %v1344, 0
  %v1748 = vsel %vm68, %v1420, 0
  %v1751 = vsel %vm68, %v1496, 0
  %v1754 = vsel %vm68, %v1572, 0
  %v1757 = vsel %vm68, %v1648, 0
  %v1760 = vsel %vm68, %v1724, 0
  %1762 = vmatprep.subr.mxu0 0.0
  %1763 = vmatpush1.msra.mxu0 %v1727
  %1764 = vmatprep.subr.mxu0 0.0
  %1765 = vmatpush1.msra.mxu0 %v1728
  %1766 = vmatprep.subr.mxu0 0.0
  %1767 = vmatpush1.msra.mxu0 %v1729
  %1768 = vmatprep.subr.mxu0 0.0
  %1769 = vmatpush1.msra.mxu0 %v1730
  %1770 = vmatprep.subr.mxu0 0.0
  %1771 = vmatpush1.msra.mxu0 0.0
  %1772 = vmatprep.subr.mxu0 0.0
  %1773 = vmatpush1.msra.mxu0 0.0
  %1774 = vmatprep.subr.mxu0 0.0
  %1775 = vmatpush1.msra.mxu0 0.0
  %1776 = vmatprep.subr.mxu0 0.0
  %1777 = vmatpush1.msra.mxu0 0.0
  %1778 = vmatprep.subr.mxu0 0.0
  %1779 = vmatpush1.msra.mxu0 0.0
  %1780 = vmatprep.subr.mxu0 0.0
  %1781 = vmatpush1.msra.mxu0 0.0
  %1782 = vmatprep.subr.mxu0 0.0
  %1783 = vmatpush1.msra.mxu0 0.0
  %1784 = vmatprep.subr.mxu0 0.0
  %1785 = vmatpush1.msra.mxu0 0.0
  %1786 = vmatprep.subr.mxu0 0.0
  %1787 = vmatpush1.msra.mxu0 0.0
  %1788 = vmatprep.subr.mxu0 0.0
  %1789 = vmatpush1.msra.mxu0 0.0
  %1790 = vmatprep.subr.mxu0 0.0
  %1791 = vmatpush1.msra.mxu0 0.0
  %1792 = vmatprep.subr.mxu0 0.0
  %1793 = vmatpush1.msra.mxu0 0.0
  %1794 = vmatprep.subr.mxu0 0.0
  %1795 = vmatpush1.msra.mxu0 0.0
  %1796 = vmatprep.subr.mxu0 0.0
  %1797 = vmatpush1.msra.mxu0 0.0
  %1798 = vmatprep.subr.mxu0 0.0
  %1799 = vmatpush1.msra.mxu0 0.0
  %1800 = vmatprep.subr.mxu0 0.0
  %1801 = vmatpush1.msra.mxu0 0.0
  %1802 = vmatprep.subr.mxu0 0.0
  %1803 = vmatpush1.msra.mxu0 0.0
  %1804 = vmatprep.subr.mxu0 0.0
  %1805 = vmatpush1.msra.mxu0 0.0
  %1806 = vmatprep.subr.mxu0 0.0
  %1807 = vmatpush1.msra.mxu0 0.0
  %1808 = vmatprep.subr.mxu0 0.0
  %1809 = vmatpush1.msra.mxu0 0.0
  %1810 = vmatprep.subr.mxu0 0.0
  %1811 = vmatpush1.msra.mxu0 0.0
  %1812 = vmatprep.subr.mxu0 0.0
  %1813 = vmatpush1.msra.mxu0 0.0
  %1814 = vmatprep.subr.mxu0 0.0
  %1815 = vmatpush1.msra.mxu0 0.0
  %1816 = vmatprep.subr.mxu0 0.0
  %1817 = vmatpush1.msra.mxu0 0.0
  %1818 = vmatprep.subr.mxu0 0.0
  %1819 = vmatpush1.msra.mxu0 0.0
  %1820 = vmatprep.subr.mxu0 0.0
  %1821 = vmatpush1.msra.mxu0 0.0
  %1822 = vmatprep.subr.mxu0 0.0
  %1823 = vmatpush1.msra.mxu0 0.0
  %1824 = vmatprep.subr.mxu0 0.0
  %1825 = vmatpush1.msra.mxu0 0.0
  %1826 = vmatprep.mubr.f32.mxu0 0.0
  %1827 = vmatmul.mubr.f32.gmra.mrb[0].mxu0 %v1739
  %v1828 = vpop.f32.mrb[0].mxu0
  %v1829 = vadd.f32 %v1736, %v1828
  %v1830 = vpop.f32.mrb[0].mxu0
  %1831 = vmatprep.mubr.f32.mxu0 0.0
  %1832 = vmatmul.mubr.f32.gmra.mrb[0].mxu0 %v1742
  %v1833 = vpop.f32.mrb[0].mxu0
  %v1834 = vadd.f32 %v1736, %v1833
  %v1835 = vpop.f32.mrb[0].mxu0
  %1836 = vmatprep.mubr.f32.mxu0 0.0
  %1837 = vmatmul.mubr.f32.gmra.mrb[0].mxu0 %v1745
  %v1838 = vpop.f32.mrb[0].mxu0
  %v1839 = vadd.f32 %v1736, %v1838
  %v1840 = vpop.f32.mrb[0].mxu0
  %1841 = vmatprep.mubr.f32.mxu0 0.0
  %1842 = vmatmul.mubr.f32.gmra.mrb[0].mxu0 %v1748
  %v1843 = vpop.f32.mrb[0].mxu0
  %v1844 = vadd.f32 %v1736, %v1843
  %v1845 = vpop.f32.mrb[0].mxu0
  %1846 = vmatprep.mubr.f32.mxu0 0.0
  %1847 = vmatmul.mubr.f32.gmra.mrb[0].mxu0 %v1751
  %v1848 = vpop.f32.mrb[0].mxu0
  %v1849 = vadd.f32 %v1736, %v1848
  %v1850 = vpop.f32.mrb[0].mxu0
  %1851 = vmatprep.mubr.f32.mxu0 0.0
  %1852 = vmatmul.mubr.f32.gmra.mrb[0].mxu0 %v1754
  %v1853 = vpop.f32.mrb[0].mxu0
  %v1854 = vadd.f32 %v1736, %v1853
  %v1855 = vpop.f32.mrb[0].mxu0
  %1856 = vmatprep.mubr.f32.mxu0 0.0
  %1857 = vmatmul.mubr.f32.gmra.mrb[0].mxu0 %v1757
  %v1858 = vpop.f32.mrb[0].mxu0
  %v1859 = vadd.f32 %v1736, %v1858
  %v1860 = vpop.f32.mrb[0].mxu0
  %1861 = vmatprep.mubr.f32.mxu0 0.0
  %1862 = vmatmul.mubr.f32.gmra.mrb[0].mxu0 %v1760
  %v1863 = vpop.f32.mrb[0].mxu0
  %v1864 = vadd.f32 %v1736, %v1863
  %v1865 = vpop.f32.mrb[0].mxu0
  %1866 = vdwg.mxu0
  %v1867 = vadd.f32 %v194, %v1829
  %v1868 = vadd.f32 %v195, %v1834
  %v1869 = vadd.f32 %v196, %v1839
  %v1870 = vadd.f32 %v197, %v1844
  %v1871 = vadd.f32 %v198, %v1849
  %v1872 = vadd.f32 %v199, %v1854
  %v1873 = vadd.f32 %v200, %v1859
  %v1874 = vadd.f32 %v201, %v1864
  %v1875 = vld [vmem:[%s9] sm:$0x1]
  %v1876 = vld [vmem:[%s10] sm:$0x1]
  %v1877 = vsel %vm68, %v1867, 0.0
  %1878 = vadd.xlane.f32.xlu0 %v1877
  %v1879 = vpop.xlane.xlu0 %1878
  %v1880 = vsel %vm68, %v1868, 0.0
  %1881 = vadd.xlane.f32.xlu0 %v1880
  %v1882 = vpop.xlane.xlu0 %1881
  %v1883 = vsel %vm68, %v1869, 0.0
  %1884 = vadd.xlane.f32.xlu0 %v1883
  %v1885 = vpop.xlane.xlu0 %1884
  %v1886 = vsel %vm68, %v1870, 0.0
  %1887 = vadd.xlane.f32.xlu0 %v1886
  %v1888 = vpop.xlane.xlu0 %1887
  %v1889 = vsel %vm68, %v1871, 0.0
  %1890 = vadd.xlane.f32.xlu0 %v1889
  %v1891 = vpop.xlane.xlu0 %1890
  %v1892 = vsel %vm68, %v1872, 0.0
  %1893 = vadd.xlane.f32.xlu0 %v1892
  %v1894 = vpop.xlane.xlu0 %1893
  %v1895 = vsel %vm68, %v1873, 0.0
  %1896 = vadd.xlane.f32.xlu0 %v1895
  %v1897 = vpop.xlane.xlu0 %1896
  %v1898 = vsel %vm68, %v1874, 0.0
  %1899 = vadd.xlane.f32.xlu0 %v1898
  %v1900 = vpop.xlane.xlu0 %1899
  %v1901 = vmul.f32 %v1879, %v93
  %v1902 = vmul.f32 %v1882, %v93
  %v1903 = vmul.f32 %v1885, %v93
  %v1904 = vmul.f32 %v1888, %v93
  %v1905 = vmul.f32 %v1891, %v93
  %v1906 = vmul.f32 %v1894, %v93
  %v1907 = vmul.f32 %v1897, %v93
  %v1908 = vmul.f32 %v1900, %v93
  %v1909 = vsub.f32 %v1867, %v1901
  %v1910 = vsub.f32 %v1868, %v1902
  %v1911 = vsub.f32 %v1869, %v1903
  %v1912 = vsub.f32 %v1870, %v1904
  %v1913 = vsub.f32 %v1871, %v1905
  %v1914 = vsub.f32 %v1872, %v1906
  %v1915 = vsub.f32 %v1873, %v1907
  %v1916 = vsub.f32 %v1874, %v1908
  %v1917 = vmul.f32 %v1909, %v1909
  %v1918 = vmul.f32 %v1910, %v1910
  %v1919 = vmul.f32 %v1911, %v1911
  %v1920 = vmul.f32 %v1912, %v1912
  %v1921 = vmul.f32 %v1913, %v1913
  %v1922 = vmul.f32 %v1914, %v1914
  %v1923 = vmul.f32 %v1915, %v1915
  %v1924 = vmul.f32 %v1916, %v1916
  %v1925 = vsel %vm68, %v1917, 0.0
  %1926 = vadd.xlane.f32.xlu0 %v1925
  %v1927 = vpop.xlane.xlu0 %1926
  %v1928 = vsel %vm68, %v1918, 0.0
  %1929 = vadd.xlane.f32.xlu0 %v1928
  %v1930 = vpop.xlane.xlu0 %1929
  %v1931 = vsel %vm68, %v1919, 0.0
  %1932 = vadd.xlane.f32.xlu0 %v1931
  %v1933 = vpop.xlane.xlu0 %1932
  %v1934 = vsel %vm68, %v1920, 0.0
  %1935 = vadd.xlane.f32.xlu0 %v1934
  %v1936 = vpop.xlane.xlu0 %1935
  %v1937 = vsel %vm68, %v1921, 0.0
  %1938 = vadd.xlane.f32.xlu0 %v1937
  %v1939 = vpop.xlane.xlu0 %1938
  %v1940 = vsel %vm68, %v1922, 0.0
  %1941 = vadd.xlane.f32.xlu0 %v1940
  %v1942 = vpop.xlane.xlu0 %1941
  %v1943 = vsel %vm68, %v1923, 0.0
  %1944 = vadd.xlane.f32.xlu0 %v1943
  %v1945 = vpop.xlane.xlu0 %1944
  %v1946 = vsel %vm68, %v1924, 0.0
  %1947 = vadd.xlane.f32.xlu0 %v1946
  %v1948 = vpop.xlane.xlu0 %1947
  %v1949 = vmul.f32 %v1927, %v93
  %v1950 = vmul.f32 %v1930, %v93
  %v1951 = vmul.f32 %v1933, %v93
  %v1952 = vmul.f32 %v1936, %v93
  %v1953 = vmul.f32 %v1939, %v93
  %v1954 = vmul.f32 %v1942, %v93
  %v1955 = vmul.f32 %v1945, %v93
  %v1956 = vmul.f32 %v1948, %v93
  %v1957 = vadd.f32 %v1949, 1e-12
  %v1958 = vadd.f32 %v1950, 1e-12
  %v1959 = vadd.f32 %v1951, 1e-12
  %v1960 = vadd.f32 %v1952, 1e-12
  %v1961 = vadd.f32 %v1953, 1e-12
  %v1962 = vadd.f32 %v1954, 1e-12
  %v1963 = vadd.f32 %v1955, 1e-12
  %v1964 = vadd.f32 %v1956, 1e-12
  %v1965 = vrsqrt.pop %v1957
  %v1966 = vrsqrt.pop %v1958
  %v1967 = vrsqrt.pop %v1959
  %v1968 = vrsqrt.pop %v1960
  %v1969 = vrsqrt.pop %v1961
  %v1970 = vrsqrt.pop %v1962
  %v1971 = vrsqrt.pop %v1963
  %v1972 = vrsqrt.pop %v1964
  %v1973 = vmul.f32 %v1909, %v1965
  %v1974 = vmul.f32 %v1910, %v1966
  %v1975 = vmul.f32 %v1911, %v1967
  %v1976 = vmul.f32 %v1912, %v1968
  %v1977 = vmul.f32 %v1913, %v1969
  %v1978 = vmul.f32 %v1914, %v1970
  %v1979 = vmul.f32 %v1915, %v1971
  %v1980 = vmul.f32 %v1916, %v1972
  %v1982 = vlaneseq
  %v1983 = vshrl.u32 %v1982, 7
  %v1984 = vsub.s32 0, %v1983
  %v1985 = vrot.slane %v1875, %v1984
  %v1987 = vmul.f32 %v1973, %v1985
  %v1988 = vmul.f32 %v1974, %v1985
  %v1989 = vmul.f32 %v1975, %v1985
  %v1990 = vmul.f32 %v1976, %v1985
  %v1991 = vmul.f32 %v1977, %v1985
  %v1992 = vmul.f32 %v1978, %v1985
  %v1993 = vmul.f32 %v1979, %v1985
  %v1994 = vmul.f32 %v1980, %v1985
  %v1996 = vlaneseq
  %v1997 = vshrl.u32 %v1996, 7
  %v1998 = vsub.s32 0, %v1997
  %v1999 = vrot.slane %v1876, %v1998
  %v2001 = vadd.f32 %v1987, %v1999
  %v2002 = vadd.f32 %v1988, %v1999
  %v2003 = vadd.f32 %v1989, %v1999
  %v2004 = vadd.f32 %v1990, %v1999
  %v2005 = vadd.f32 %v1991, %v1999
  %v2006 = vadd.f32 %v1992, %v1999
  %v2007 = vadd.f32 %v1993, %v1999
  %v2008 = vadd.f32 %v1994, %v1999
  %v2009 = vld [vmem:[%s11] sm:$0xff]
  %v2010 = vld [vmem:[%s11 + $0x8] sm:$0xff]
  %v2011 = vld [vmem:[%s11 + $0x10] sm:$0xff]
  %v2012 = vld [vmem:[%s11 + $0x18] sm:$0xff]
  %v2013 = vld [vmem:[%s12] sm:$0x1]
  %v2015 = vlaneseq
  %v2016 = vshrl.u32 %v2015, 7
  %v2017 = vsub.s32 0, %v2016
  %v2018 = vrot.slane %v2013, %v2017
  %v2021 = vsel %vm68, %v2001, 0
  %v2024 = vsel %vm68, %v2002, 0
  %v2027 = vsel %vm68, %v2003, 0
  %v2030 = vsel %vm68, %v2004, 0
  %v2033 = vsel %vm68, %v2005, 0
  %v2036 = vsel %vm68, %v2006, 0
  %v2039 = vsel %vm68, %v2007, 0
  %v2042 = vsel %vm68, %v2008, 0
  %2044 = vmatprep.subr.mxu0 0.0
  %2045 = vmatpush1.msra.mxu0 %v2009
  %2046 = vmatprep.subr.mxu0 0.0
  %2047 = vmatpush1.msra.mxu0 %v2010
  %2048 = vmatprep.subr.mxu0 0.0
  %2049 = vmatpush1.msra.mxu0 %v2011
  %2050 = vmatprep.subr.mxu0 0.0
  %2051 = vmatpush1.msra.mxu0 %v2012
  %2052 = vmatprep.subr.mxu0 0.0
  %2053 = vmatpush1.msra.mxu0 0.0
  %2054 = vmatprep.subr.mxu0 0.0
  %2055 = vmatpush1.msra.mxu0 0.0
  %2056 = vmatprep.subr.mxu0 0.0
  %2057 = vmatpush1.msra.mxu0 0.0
  %2058 = vmatprep.subr.mxu0 0.0
  %2059 = vmatpush1.msra.mxu0 0.0
  %2060 = vmatprep.subr.mxu0 0.0
  %2061 = vmatpush1.msra.mxu0 0.0
  %2062 = vmatprep.subr.mxu0 0.0
  %2063 = vmatpush1.msra.mxu0 0.0
  %2064 = vmatprep.subr.mxu0 0.0
  %2065 = vmatpush1.msra.mxu0 0.0
  %2066 = vmatprep.subr.mxu0 0.0
  %2067 = vmatpush1.msra.mxu0 0.0
  %2068 = vmatprep.subr.mxu0 0.0
  %2069 = vmatpush1.msra.mxu0 0.0
  %2070 = vmatprep.subr.mxu0 0.0
  %2071 = vmatpush1.msra.mxu0 0.0
  %2072 = vmatprep.subr.mxu0 0.0
  %2073 = vmatpush1.msra.mxu0 0.0
  %2074 = vmatprep.subr.mxu0 0.0
  %2075 = vmatpush1.msra.mxu0 0.0
  %2076 = vmatprep.subr.mxu0 0.0
  %2077 = vmatpush1.msra.mxu0 0.0
  %2078 = vmatprep.subr.mxu0 0.0
  %2079 = vmatpush1.msra.mxu0 0.0
  %2080 = vmatprep.subr.mxu0 0.0
  %2081 = vmatpush1.msra.mxu0 0.0
  %2082 = vmatprep.subr.mxu0 0.0
  %2083 = vmatpush1.msra.mxu0 0.0
  %2084 = vmatprep.subr.mxu0 0.0
  %2085 = vmatpush1.msra.mxu0 0.0
  %2086 = vmatprep.subr.mxu0 0.0
  %2087 = vmatpush1.msra.mxu0 0.0
  %2088 = vmatprep.subr.mxu0 0.0
  %2089 = vmatpush1.msra.mxu0 0.0
  %2090 = vmatprep.subr.mxu0 0.0
  %2091 = vmatpush1.msra.mxu0 0.0
  %2092 = vmatprep.subr.mxu0 0.0
  %2093 = vmatpush1.msra.mxu0 0.0
  %2094 = vmatprep.subr.mxu0 0.0
  %2095 = vmatpush1.msra.mxu0 0.0
  %2096 = vmatprep.subr.mxu0 0.0
  %2097 = vmatpush1.msra.mxu0 0.0
  %2098 = vmatprep.subr.mxu0 0.0
  %2099 = vmatpush1.msra.mxu0 0.0
  %2100 = vmatprep.subr.mxu0 0.0
  %2101 = vmatpush1.msra.mxu0 0.0
  %2102 = vmatprep.subr.mxu0 0.0
  %2103 = vmatpush1.msra.mxu0 0.0
  %2104 = vmatprep.subr.mxu0 0.0
  %2105 = vmatpush1.msra.mxu0 0.0
  %2106 = vmatprep.subr.mxu0 0.0
  %2107 = vmatpush1.msra.mxu0 0.0
  %2108 = vmatprep.mubr.f32.mxu0 0.0
  %2109 = vmatmul.mubr.f32.gmra.mrb[0].mxu0 %v2021
  %v2110 = vpop.f32.mrb[0].mxu0
  %v2111 = vadd.f32 %v2018, %v2110
  %v2112 = vpop.f32.mrb[0].mxu0
  %2113 = vmatprep.mubr.f32.mxu0 0.0
  %2114 = vmatmul.mubr.f32.gmra.mrb[0].mxu0 %v2024
  %v2115 = vpop.f32.mrb[0].mxu0
  %v2116 = vadd.f32 %v2018, %v2115
  %v2117 = vpop.f32.mrb[0].mxu0
  %2118 = vmatprep.mubr.f32.mxu0 0.0
  %2119 = vmatmul.mubr.f32.gmra.mrb[0].mxu0 %v2027
  %v2120 = vpop.f32.mrb[0].mxu0
  %v2121 = vadd.f32 %v2018, %v2120
  %v2122 = vpop.f32.mrb[0].mxu0
  %2123 = vmatprep.mubr.f32.mxu0 0.0
  %2124 = vmatmul.mubr.f32.gmra.mrb[0].mxu0 %v2030
  %v2125 = vpop.f32.mrb[0].mxu0
  %v2126 = vadd.f32 %v2018, %v2125
  %v2127 = vpop.f32.mrb[0].mxu0
  %2128 = vmatprep.mubr.f32.mxu0 0.0
  %2129 = vmatmul.mubr.f32.gmra.mrb[0].mxu0 %v2033
  %v2130 = vpop.f32.mrb[0].mxu0
  %v2131 = vadd.f32 %v2018, %v2130
  %v2132 = vpop.f32.mrb[0].mxu0
  %2133 = vmatprep.mubr.f32.mxu0 0.0
  %2134 = vmatmul.mubr.f32.gmra.mrb[0].mxu0 %v2036
  %v2135 = vpop.f32.mrb[0].mxu0
  %v2136 = vadd.f32 %v2018, %v2135
  %v2137 = vpop.f32.mrb[0].mxu0
  %2138 = vmatprep.mubr.f32.mxu0 0.0
  %2139 = vmatmul.mubr.f32.gmra.mrb[0].mxu0 %v2039
  %v2140 = vpop.f32.mrb[0].mxu0
  %v2141 = vadd.f32 %v2018, %v2140
  %v2142 = vpop.f32.mrb[0].mxu0
  %2143 = vmatprep.mubr.f32.mxu0 0.0
  %2144 = vmatmul.mubr.f32.gmra.mrb[0].mxu0 %v2042
  %v2145 = vpop.f32.mrb[0].mxu0
  %v2146 = vadd.f32 %v2018, %v2145
  %v2147 = vpop.f32.mrb[0].mxu0
  %2148 = vdwg.mxu0
  %v2149 = vmul.f32 %v2111, 0.5
  %v2150 = vmul.f32 %v2116, 0.5
  %v2151 = vmul.f32 %v2121, 0.5
  %v2152 = vmul.f32 %v2126, 0.5
  %v2153 = vmul.f32 %v2131, 0.5
  %v2154 = vmul.f32 %v2136, 0.5
  %v2155 = vmul.f32 %v2141, 0.5
  %v2156 = vmul.f32 %v2146, 0.5
  %v2157 = vmul.f32 %v2111, 0.044715
  %v2158 = vmul.f32 %v2116, 0.044715
  %v2159 = vmul.f32 %v2121, 0.044715
  %v2160 = vmul.f32 %v2126, 0.044715
  %v2161 = vmul.f32 %v2131, 0.044715
  %v2162 = vmul.f32 %v2136, 0.044715
  %v2163 = vmul.f32 %v2141, 0.044715
  %v2164 = vmul.f32 %v2146, 0.044715
  %v2165 = vmul.f32 %v2157, %v2111
  %v2166 = vmul.f32 %v2158, %v2116
  %v2167 = vmul.f32 %v2159, %v2121
  %v2168 = vmul.f32 %v2160, %v2126
  %v2169 = vmul.f32 %v2161, %v2131
  %v2170 = vmul.f32 %v2162, %v2136
  %v2171 = vmul.f32 %v2163, %v2141
  %v2172 = vmul.f32 %v2164, %v2146
  %v2173 = vmul.f32 %v2165, %v2111
  %v2174 = vmul.f32 %v2166, %v2116
  %v2175 = vmul.f32 %v2167, %v2121
  %v2176 = vmul.f32 %v2168, %v2126
  %v2177 = vmul.f32 %v2169, %v2131
  %v2178 = vmul.f32 %v2170, %v2136
  %v2179 = vmul.f32 %v2171, %v2141
  %v2180 = vmul.f32 %v2172, %v2146
  %v2181 = vadd.f32 %v2111, %v2173
  %v2182 = vadd.f32 %v2116, %v2174
  %v2183 = vadd.f32 %v2121, %v2175
  %v2184 = vadd.f32 %v2126, %v2176
  %v2185 = vadd.f32 %v2131, %v2177
  %v2186 = vadd.f32 %v2136, %v2178
  %v2187 = vadd.f32 %v2141, %v2179
  %v2188 = vadd.f32 %v2146, %v2180
  %v2189 = vmul.f32 %v2181, 0.7978846
  %v2190 = vmul.f32 %v2182, 0.7978846
  %v2191 = vmul.f32 %v2183, 0.7978846
  %v2192 = vmul.f32 %v2184, 0.7978846
  %v2193 = vmul.f32 %v2185, 0.7978846
  %v2194 = vmul.f32 %v2186, 0.7978846
  %v2195 = vmul.f32 %v2187, 0.7978846
  %v2196 = vmul.f32 %v2188, 0.7978846
  %v2197 = vtanh.pop %v2189
  %v2198 = vtanh.pop %v2190
  %v2199 = vtanh.pop %v2191
  %v2200 = vtanh.pop %v2192
  %v2201 = vtanh.pop %v2193
  %v2202 = vtanh.pop %v2194
  %v2203 = vtanh.pop %v2195
  %v2204 = vtanh.pop %v2196
  %v2205 = vadd.f32 %v2197, 1.0
  %v2206 = vadd.f32 %v2198, 1.0
  %v2207 = vadd.f32 %v2199, 1.0
  %v2208 = vadd.f32 %v2200, 1.0
  %v2209 = vadd.f32 %v2201, 1.0
  %v2210 = vadd.f32 %v2202, 1.0
  %v2211 = vadd.f32 %v2203, 1.0
  %v2212 = vadd.f32 %v2204, 1.0
  %v2213 = vmul.f32 %v2149, %v2205
  %v2214 = vmul.f32 %v2150, %v2206
  %v2215 = vmul.f32 %v2151, %v2207
  %v2216 = vmul.f32 %v2152, %v2208
  %v2217 = vmul.f32 %v2153, %v2209
  %v2218 = vmul.f32 %v2154, %v2210
  %v2219 = vmul.f32 %v2155, %v2211
  %v2220 = vmul.f32 %v2156, %v2212
  %v2221 = vld [vmem:[%s13] sm:$0xff]
  %v2222 = vld [vmem:[%s13 + $0x8] sm:$0xff]
  %v2223 = vld [vmem:[%s13 + $0x10] sm:$0xff]
  %v2224 = vld [vmem:[%s13 + $0x18] sm:$0xff]
  %v2225 = vld [vmem:[%s13 + $0x20] sm:$0xff]
  %v2226 = vld [vmem:[%s13 + $0x28] sm:$0xff]
  %v2227 = vld [vmem:[%s13 + $0x30] sm:$0xff]
  %v2228 = vld [vmem:[%s13 + $0x38] sm:$0xff]
  %v2229 = vld [vmem:[%s14] sm:$0x1]
  %v2231 = vlaneseq
  %v2232 = vshrl.u32 %v2231, 7
  %v2233 = vsub.s32 0, %v2232
  %v2234 = vrot.slane %v2229, %v2233
  %vm2236 = vcmask 523264
  %v2238 = vsel %vm2236, %v2213, 0
  %v2241 = vsel %vm2236, %v2214, 0
  %v2244 = vsel %vm2236, %v2215, 0
  %v2247 = vsel %vm2236, %v2216, 0
  %v2250 = vsel %vm2236, %v2217, 0
  %v2253 = vsel %vm2236, %v2218, 0
  %v2256 = vsel %vm2236, %v2219, 0
  %v2259 = vsel %vm2236, %v2220, 0
  %2261 = vmatprep.subr.mxu0 0.0
  %2262 = vmatpush1.msra.mxu0 %v2221
  %2263 = vmatprep.subr.mxu0 0.0
  %2264 = vmatpush1.msra.mxu0 %v2222
  %2265 = vmatprep.subr.mxu0 0.0
  %2266 = vmatpush1.msra.mxu0 %v2223
  %2267 = vmatprep.subr.mxu0 0.0
  %2268 = vmatpush1.msra.mxu0 %v2224
  %2269 = vmatprep.subr.mxu0 0.0
  %2270 = vmatpush1.msra.mxu0 %v2225
  %2271 = vmatprep.subr.mxu0 0.0
  %2272 = vmatpush1.msra.mxu0 %v2226
  %2273 = vmatprep.subr.mxu0 0.0
  %2274 = vmatpush1.msra.mxu0 %v2227
  %2275 = vmatprep.subr.mxu0 0.0
  %2276 = vmatpush1.msra.mxu0 %v2228
  %2277 = vmatprep.subr.mxu0 0.0
  %2278 = vmatpush1.msra.mxu0 0.0
  %2279 = vmatprep.subr.mxu0 0.0
  %2280 = vmatpush1.msra.mxu0 0.0
  %2281 = vmatprep.subr.mxu0 0.0
  %2282 = vmatpush1.msra.mxu0 0.0
  %2283 = vmatprep.subr.mxu0 0.0
  %2284 = vmatpush1.msra.mxu0 0.0
  %2285 = vmatprep.subr.mxu0 0.0
  %2286 = vmatpush1.msra.mxu0 0.0
  %2287 = vmatprep.subr.mxu0 0.0
  %2288 = vmatpush1.msra.mxu0 0.0
  %2289 = vmatprep.subr.mxu0 0.0
  %2290 = vmatpush1.msra.mxu0 0.0
  %2291 = vmatprep.subr.mxu0 0.0
  %2292 = vmatpush1.msra.mxu0 0.0
  %2293 = vmatprep.subr.mxu0 0.0
  %2294 = vmatpush1.msra.mxu0 0.0
  %2295 = vmatprep.subr.mxu0 0.0
  %2296 = vmatpush1.msra.mxu0 0.0
  %2297 = vmatprep.subr.mxu0 0.0
  %2298 = vmatpush1.msra.mxu0 0.0
  %2299 = vmatprep.subr.mxu0 0.0
  %2300 = vmatpush1.msra.mxu0 0.0
  %2301 = vmatprep.subr.mxu0 0.0
  %2302 = vmatpush1.msra.mxu0 0.0
  %2303 = vmatprep.subr.mxu0 0.0
  %2304 = vmatpush1.msra.mxu0 0.0
  %2305 = vmatprep.subr.mxu0 0.0
  %2306 = vmatpush1.msra.mxu0 0.0
  %2307 = vmatprep.subr.mxu0 0.0
  %2308 = vmatpush1.msra.mxu0 0.0
  %2309 = vmatprep.subr.mxu0 0.0
  %2310 = vmatpush1.msra.mxu0 0.0
  %2311 = vmatprep.subr.mxu0 0.0
  %2312 = vmatpush1.msra.mxu0 0.0
  %2313 = vmatprep.subr.mxu0 0.0
  %2314 = vmatpush1.msra.mxu0 0.0
  %2315 = vmatprep.subr.mxu0 0.0
  %2316 = vmatpush1.msra.mxu0 0.0
  %2317 = vmatprep.subr.mxu0 0.0
  %2318 = vmatpush1.msra.mxu0 0.0
  %2319 = vmatprep.subr.mxu0 0.0
  %2320 = vmatpush1.msra.mxu0 0.0
  %2321 = vmatprep.subr.mxu0 0.0
  %2322 = vmatpush1.msra.mxu0 0.0
  %2323 = vmatprep.subr.mxu0 0.0
  %2324 = vmatpush1.msra.mxu0 0.0
  %2325 = vmatprep.mubr.f32.mxu0 0.0
  %2326 = vmatmul.mubr.f32.gmra.mrb[0].mxu0 %v2238
  %v2327 = vpop.f32.mrb[0].mxu0
  %v2328 = vadd.f32 %v2234, %v2327
  %v2329 = vpop.f32.mrb[0].mxu0
  %2330 = vmatprep.mubr.f32.mxu0 0.0
  %2331 = vmatmul.mubr.f32.gmra.mrb[0].mxu0 %v2241
  %v2332 = vpop.f32.mrb[0].mxu0
  %v2333 = vadd.f32 %v2234, %v2332
  %v2334 = vpop.f32.mrb[0].mxu0
  %2335 = vmatprep.mubr.f32.mxu0 0.0
  %2336 = vmatmul.mubr.f32.gmra.mrb[0].mxu0 %v2244
  %v2337 = vpop.f32.mrb[0].mxu0
  %v2338 = vadd.f32 %v2234, %v2337
  %v2339 = vpop.f32.mrb[0].mxu0
  %2340 = vmatprep.mubr.f32.mxu0 0.0
  %2341 = vmatmul.mubr.f32.gmra.mrb[0].mxu0 %v2247
  %v2342 = vpop.f32.mrb[0].mxu0
  %v2343 = vadd.f32 %v2234, %v2342
  %v2344 = vpop.f32.mrb[0].mxu0
  %2345 = vmatprep.mubr.f32.mxu0 0.0
  %2346 = vmatmul.mubr.f32.gmra.mrb[0].mxu0 %v2250
  %v2347 = vpop.f32.mrb[0].mxu0
  %v2348 = vadd.f32 %v2234, %v2347
  %v2349 = vpop.f32.mrb[0].mxu0
  %2350 = vmatprep.mubr.f32.mxu0 0.0
  %2351 = vmatmul.mubr.f32.gmra.mrb[0].mxu0 %v2253
  %v2352 = vpop.f32.mrb[0].mxu0
  %v2353 = vadd.f32 %v2234, %v2352
  %v2354 = vpop.f32.mrb[0].mxu0
  %2355 = vmatprep.mubr.f32.mxu0 0.0
  %2356 = vmatmul.mubr.f32.gmra.mrb[0].mxu0 %v2256
  %v2357 = vpop.f32.mrb[0].mxu0
  %v2358 = vadd.f32 %v2234, %v2357
  %v2359 = vpop.f32.mrb[0].mxu0
  %2360 = vmatprep.mubr.f32.mxu0 0.0
  %2361 = vmatmul.mubr.f32.gmra.mrb[0].mxu0 %v2259
  %v2362 = vpop.f32.mrb[0].mxu0
  %v2363 = vadd.f32 %v2234, %v2362
  %v2364 = vpop.f32.mrb[0].mxu0
  %2365 = vdwg.mxu0
  %v2366 = vadd.f32 %v2001, %v2328
  %v2367 = vadd.f32 %v2002, %v2333
  %v2368 = vadd.f32 %v2003, %v2338
  %v2369 = vadd.f32 %v2004, %v2343
  %v2370 = vadd.f32 %v2005, %v2348
  %v2371 = vadd.f32 %v2006, %v2353
  %v2372 = vadd.f32 %v2007, %v2358
  %v2373 = vadd.f32 %v2008, %v2363
  %v2374 = vld [vmem:[%s15] sm:$0x1]
  %v2375 = vld [vmem:[%s16] sm:$0x1]
  %v2376 = vsel %vm68, %v2366, 0.0
  %2377 = vadd.xlane.f32.xlu0 %v2376
  %v2378 = vpop.xlane.xlu0 %2377
  %v2379 = vsel %vm68, %v2367, 0.0
  %2380 = vadd.xlane.f32.xlu0 %v2379
  %v2381 = vpop.xlane.xlu0 %2380
  %v2382 = vsel %vm68, %v2368, 0.0
  %2383 = vadd.xlane.f32.xlu0 %v2382
  %v2384 = vpop.xlane.xlu0 %2383
  %v2385 = vsel %vm68, %v2369, 0.0
  %2386 = vadd.xlane.f32.xlu0 %v2385
  %v2387 = vpop.xlane.xlu0 %2386
  %v2388 = vsel %vm68, %v2370, 0.0
  %2389 = vadd.xlane.f32.xlu0 %v2388
  %v2390 = vpop.xlane.xlu0 %2389
  %v2391 = vsel %vm68, %v2371, 0.0
  %2392 = vadd.xlane.f32.xlu0 %v2391
  %v2393 = vpop.xlane.xlu0 %2392
  %v2394 = vsel %vm68, %v2372, 0.0
  %2395 = vadd.xlane.f32.xlu0 %v2394
  %v2396 = vpop.xlane.xlu0 %2395
  %v2397 = vsel %vm68, %v2373, 0.0
  %2398 = vadd.xlane.f32.xlu0 %v2397
  %v2399 = vpop.xlane.xlu0 %2398
  %v2400 = vmul.f32 %v2378, %v93
  %v2401 = vmul.f32 %v2381, %v93
  %v2402 = vmul.f32 %v2384, %v93
  %v2403 = vmul.f32 %v2387, %v93
  %v2404 = vmul.f32 %v2390, %v93
  %v2405 = vmul.f32 %v2393, %v93
  %v2406 = vmul.f32 %v2396, %v93
  %v2407 = vmul.f32 %v2399, %v93
  %v2408 = vsub.f32 %v2366, %v2400
  %v2409 = vsub.f32 %v2367, %v2401
  %v2410 = vsub.f32 %v2368, %v2402
  %v2411 = vsub.f32 %v2369, %v2403
  %v2412 = vsub.f32 %v2370, %v2404
  %v2413 = vsub.f32 %v2371, %v2405
  %v2414 = vsub.f32 %v2372, %v2406
  %v2415 = vsub.f32 %v2373, %v2407
  %v2416 = vmul.f32 %v2408, %v2408
  %v2417 = vmul.f32 %v2409, %v2409
  %v2418 = vmul.f32 %v2410, %v2410
  %v2419 = vmul.f32 %v2411, %v2411
  %v2420 = vmul.f32 %v2412, %v2412
  %v2421 = vmul.f32 %v2413, %v2413
  %v2422 = vmul.f32 %v2414, %v2414
  %v2423 = vmul.f32 %v2415, %v2415
  %v2424 = vsel %vm68, %v2416, 0.0
  %2425 = vadd.xlane.f32.xlu0 %v2424
  %v2426 = vpop.xlane.xlu0 %2425
  %v2427 = vsel %vm68, %v2417, 0.0
  %2428 = vadd.xlane.f32.xlu0 %v2427
  %v2429 = vpop.xlane.xlu0 %2428
  %v2430 = vsel %vm68, %v2418, 0.0
  %2431 = vadd.xlane.f32.xlu0 %v2430
  %v2432 = vpop.xlane.xlu0 %2431
  %v2433 = vsel %vm68, %v2419, 0.0
  %2434 = vadd.xlane.f32.xlu0 %v2433
  %v2435 = vpop.xlane.xlu0 %2434
  %v2436 = vsel %vm68, %v2420, 0.0
  %2437 = vadd.xlane.f32.xlu0 %v2436
  %v2438 = vpop.xlane.xlu0 %2437
  %v2439 = vsel %vm68, %v2421, 0.0
  %2440 = vadd.xlane.f32.xlu0 %v2439
  %v2441 = vpop.xlane.xlu0 %2440
  %v2442 = vsel %vm68, %v2422, 0.0
  %2443 = vadd.xlane.f32.xlu0 %v2442
  %v2444 = vpop.xlane.xlu0 %2443
  %v2445 = vsel %vm68, %v2423, 0.0
  %2446 = vadd.xlane.f32.xlu0 %v2445
  %v2447 = vpop.xlane.xlu0 %2446
  %v2448 = vmul.f32 %v2426, %v93
  %v2449 = vmul.f32 %v2429, %v93
  %v2450 = vmul.f32 %v2432, %v93
  %v2451 = vmul.f32 %v2435, %v93
  %v2452 = vmul.f32 %v2438, %v93
  %v2453 = vmul.f32 %v2441, %v93
  %v2454 = vmul.f32 %v2444, %v93
  %v2455 = vmul.f32 %v2447, %v93
  %v2456 = vadd.f32 %v2448, 1e-12
  %v2457 = vadd.f32 %v2449, 1e-12
  %v2458 = vadd.f32 %v2450, 1e-12
  %v2459 = vadd.f32 %v2451, 1e-12
  %v2460 = vadd.f32 %v2452, 1e-12
  %v2461 = vadd.f32 %v2453, 1e-12
  %v2462 = vadd.f32 %v2454, 1e-12
  %v2463 = vadd.f32 %v2455, 1e-12
  %v2464 = vrsqrt.pop %v2456
  %v2465 = vrsqrt.pop %v2457
  %v2466 = vrsqrt.pop %v2458
  %v2467 = vrsqrt.pop %v2459
  %v2468 = vrsqrt.pop %v2460
  %v2469 = vrsqrt.pop %v2461
  %v2470 = vrsqrt.pop %v2462
  %v2471 = vrsqrt.pop %v2463
  %v2472 = vmul.f32 %v2408, %v2464
  %v2473 = vmul.f32 %v2409, %v2465
  %v2474 = vmul.f32 %v2410, %v2466
  %v2475 = vmul.f32 %v2411, %v2467
  %v2476 = vmul.f32 %v2412, %v2468
  %v2477 = vmul.f32 %v2413, %v2469
  %v2478 = vmul.f32 %v2414, %v2470
  %v2479 = vmul.f32 %v2415, %v2471
  %v2481 = vlaneseq
  %v2482 = vshrl.u32 %v2481, 7
  %v2483 = vsub.s32 0, %v2482
  %v2484 = vrot.slane %v2374, %v2483
  %v2486 = vmul.f32 %v2472, %v2484
  %v2487 = vmul.f32 %v2473, %v2484
  %v2488 = vmul.f32 %v2474, %v2484
  %v2489 = vmul.f32 %v2475, %v2484
  %v2490 = vmul.f32 %v2476, %v2484
  %v2491 = vmul.f32 %v2477, %v2484
  %v2492 = vmul.f32 %v2478, %v2484
  %v2493 = vmul.f32 %v2479, %v2484
  %v2495 = vlaneseq
  %v2496 = vshrl.u32 %v2495, 7
  %v2497 = vsub.s32 0, %v2496
  %v2498 = vrot.slane %v2375, %v2497
  %v2500 = vadd.f32 %v2486, %v2498
  %v2501 = vadd.f32 %v2487, %v2498
  %v2502 = vadd.f32 %v2488, %v2498
  %v2503 = vadd.f32 %v2489, %v2498
  %v2504 = vadd.f32 %v2490, %v2498
  %v2505 = vadd.f32 %v2491, %v2498
  %v2506 = vadd.f32 %v2492, %v2498
  %v2507 = vadd.f32 %v2493, %v2498
  %2508 = vst.msk [vmem:[%s17] sm:$0xff] %vm68, %v2500
  %2509 = vst.msk [vmem:[%s17 + $0x8] sm:$0xff] %vm68, %v2501
  %2510 = vst.msk [vmem:[%s17 + $0x10] sm:$0xff] %vm68, %v2502
  %2511 = vst.msk [vmem:[%s17 + $0x18] sm:$0xff] %vm68, %v2503
  %2512 = vst.msk [vmem:[%s17 + $0x20] sm:$0xff] %vm68, %v2504
  %2513 = vst.msk [vmem:[%s17 + $0x28] sm:$0xff] %vm68, %v2505
  %2514 = vst.msk [vmem:[%s17 + $0x30] sm:$0xff] %vm68, %v2506
  %2515 = vst.msk [vmem:[%s17 + $0x38] sm:$0xff] %vm68, %v2507
  %v2516 = vld [vmem:[%s2] sm:$0xff]
  %v2517 = vld [vmem:[%s2 + $0x8] sm:$0xff]
  %v2518 = vld [vmem:[%s2 + $0x10] sm:$0xff]
  %v2519 = vld [vmem:[%s2 + $0x18] sm:$0xff]
  %v2520 = vld [vmem:[%s2 + $0x20] sm:$0xff]
  %v2521 = vld [vmem:[%s2 + $0x28] sm:$0xff]
  %v2522 = vld [vmem:[%s2 + $0x30] sm:$0xff]
  %v2523 = vld [vmem:[%s2 + $0x38] sm:$0xff]
  %2525 = vset.pattern.permute.xlu0 0
  %2526 = vperm.xlu0 %2525, %v2516
  %v2527 = vpop.permute.xlu0 %2526
  %2530 = vset.pattern.permute.xlu0 0
  %2531 = vperm.xlu0 %2530, %v2517
  %v2532 = vpop.permute.xlu0 %2531
  %2535 = vset.pattern.permute.xlu0 0
  %2536 = vperm.xlu0 %2535, %v2518
  %v2537 = vpop.permute.xlu0 %2536
  %2540 = vset.pattern.permute.xlu0 0
  %2541 = vperm.xlu0 %2540, %v2519
  %v2542 = vpop.permute.xlu0 %2541
  %2545 = vset.pattern.permute.xlu0 0
  %2546 = vperm.xlu0 %2545, %v2520
  %v2547 = vpop.permute.xlu0 %2546
  %2550 = vset.pattern.permute.xlu0 0
  %2551 = vperm.xlu0 %2550, %v2521
  %v2552 = vpop.permute.xlu0 %2551
  %2555 = vset.pattern.permute.xlu0 0
  %2556 = vperm.xlu0 %2555, %v2522
  %v2557 = vpop.permute.xlu0 %2556
  %2560 = vset.pattern.permute.xlu0 0
  %2561 = vperm.xlu0 %2560, %v2523
  %v2562 = vpop.permute.xlu0 %2561
  %v2564 = vmul.f32 %v2500, %v2527
  %v2565 = vmul.f32 %v2501, %v2532
  %v2566 = vmul.f32 %v2502, %v2537
  %v2567 = vmul.f32 %v2503, %v2542
  %v2568 = vmul.f32 %v2504, %v2547
  %v2569 = vmul.f32 %v2505, %v2552
  %v2570 = vmul.f32 %v2506, %v2557
  %v2571 = vmul.f32 %v2507, %v2562
  %v2572 = vsel %vm68, %v2564, 0.0
  %v2573 = vrot.slane %v2572, 4
  %v2574 = vadd.f32 %v2572, %v2573
  %v2575 = vrot.slane %v2574, 2
  %v2576 = vadd.f32 %v2574, %v2575
  %v2577 = vrot.slane %v2576, 1
  %v2578 = vadd.f32 %v2576, %v2577
  %v2579 = vsel %vm68, %v2565, 0.0
  %v2580 = vrot.slane %v2579, 4
  %v2581 = vadd.f32 %v2579, %v2580
  %v2582 = vrot.slane %v2581, 2
  %v2583 = vadd.f32 %v2581, %v2582
  %v2584 = vrot.slane %v2583, 1
  %v2585 = vadd.f32 %v2583, %v2584
  %v2586 = vsel %vm68, %v2566, 0.0
  %v2587 = vrot.slane %v2586, 4
  %v2588 = vadd.f32 %v2586, %v2587
  %v2589 = vrot.slane %v2588, 2
  %v2590 = vadd.f32 %v2588, %v2589
  %v2591 = vrot.slane %v2590, 1
  %v2592 = vadd.f32 %v2590, %v2591
  %v2593 = vsel %vm68, %v2567, 0.0
  %v2594 = vrot.slane %v2593, 4
  %v2595 = vadd.f32 %v2593, %v2594
  %v2596 = vrot.slane %v2595, 2
  %v2597 = vadd.f32 %v2595, %v2596
  %v2598 = vrot.slane %v2597, 1
  %v2599 = vadd.f32 %v2597, %v2598
  %v2600 = vsel %vm68, %v2568, 0.0
  %v2601 = vrot.slane %v2600, 4
  %v2602 = vadd.f32 %v2600, %v2601
  %v2603 = vrot.slane %v2602, 2
  %v2604 = vadd.f32 %v2602, %v2603
  %v2605 = vrot.slane %v2604, 1
  %v2606 = vadd.f32 %v2604, %v2605
  %v2607 = vsel %vm68, %v2569, 0.0
  %v2608 = vrot.slane %v2607, 4
  %v2609 = vadd.f32 %v2607, %v2608
  %v2610 = vrot.slane %v2609, 2
  %v2611 = vadd.f32 %v2609, %v2610
  %v2612 = vrot.slane %v2611, 1
  %v2613 = vadd.f32 %v2611, %v2612
  %v2614 = vsel %vm68, %v2570, 0.0
  %v2615 = vrot.slane %v2614, 4
  %v2616 = vadd.f32 %v2614, %v2615
  %v2617 = vrot.slane %v2616, 2
  %v2618 = vadd.f32 %v2616, %v2617
  %v2619 = vrot.slane %v2618, 1
  %v2620 = vadd.f32 %v2618, %v2619
  %v2621 = vsel %vm68, %v2571, 0.0
  %v2622 = vrot.slane %v2621, 4
  %v2623 = vadd.f32 %v2621, %v2622
  %v2624 = vrot.slane %v2623, 2
  %v2625 = vadd.f32 %v2623, %v2624
  %v2626 = vrot.slane %v2625, 1
  %v2627 = vadd.f32 %v2625, %v2626
  %vm2628 = vcmask 7168
  %v2629 = vsel %vm2628, %v2516, 0.0
  %v2630 = vrot.slane %v2629, 4
  %v2631 = vadd.f32 %v2629, %v2630
  %v2632 = vrot.slane %v2631, 2
  %v2633 = vadd.f32 %v2631, %v2632
  %v2634 = vrot.slane %v2633, 1
  %v2635 = vadd.f32 %v2633, %v2634
  %v2636 = vsel %vm2628, %v2517, 0.0
  %v2637 = vrot.slane %v2636, 4
  %v2638 = vadd.f32 %v2636, %v2637
  %v2639 = vrot.slane %v2638, 2
  %v2640 = vadd.f32 %v2638, %v2639
  %v2641 = vrot.slane %v2640, 1
  %v2642 = vadd.f32 %v2640, %v2641
  %v2643 = vsel %vm2628, %v2518, 0.0
  %v2644 = vrot.slane %v2643, 4
  %v2645 = vadd.f32 %v2643, %v2644
  %v2646 = vrot.slane %v2645, 2
  %v2647 = vadd.f32 %v2645, %v2646
  %v2648 = vrot.slane %v2647, 1
  %v2649 = vadd.f32 %v2647, %v2648
  %v2650 = vsel %vm2628, %v2519, 0.0
  %v2651 = vrot.slane %v2650, 4
  %v2652 = vadd.f32 %v2650, %v2651
  %v2653 = vrot.slane %v2652, 2
  %v2654 = vadd.f32 %v2652, %v2653
  %v2655 = vrot.slane %v2654, 1
  %v2656 = vadd.f32 %v2654, %v2655
  %v2657 = vsel %vm2628, %v2520, 0.0
  %v2658 = vrot.slane %v2657, 4
  %v2659 = vadd.f32 %v2657, %v2658
  %v2660 = vrot.slane %v2659, 2
  %v2661 = vadd.f32 %v2659, %v2660
  %v2662 = vrot.slane %v2661, 1
  %v2663 = vadd.f32 %v2661, %v2662
  %v2664 = vsel %vm2628, %v2521, 0.0
  %v2665 = vrot.slane %v2664, 4
  %v2666 = vadd.f32 %v2664, %v2665
  %v2667 = vrot.slane %v2666, 2
  %v2668 = vadd.f32 %v2666, %v2667
  %v2669 = vrot.slane %v2668, 1
  %v2670 = vadd.f32 %v2668, %v2669
  %v2671 = vsel %vm2628, %v2522, 0.0
  %v2672 = vrot.slane %v2671, 4
  %v2673 = vadd.f32 %v2671, %v2672
  %v2674 = vrot.slane %v2673, 2
  %v2675 = vadd.f32 %v2673, %v2674
  %v2676 = vrot.slane %v2675, 1
  %v2677 = vadd.f32 %v2675, %v2676
  %v2678 = vsel %vm2628, %v2523, 0.0
  %v2679 = vrot.slane %v2678, 4
  %v2680 = vadd.f32 %v2678, %v2679
  %v2681 = vrot.slane %v2680, 2
  %v2682 = vadd.f32 %v2680, %v2681
  %v2683 = vrot.slane %v2682, 1
  %v2684 = vadd.f32 %v2682, %v2683
  %v2685 = vmax.f32 %v2635, 1.0
  %v2686 = vmax.f32 %v2642, 1.0
  %v2687 = vmax.f32 %v2649, 1.0
  %v2688 = vmax.f32 %v2656, 1.0
  %v2689 = vmax.f32 %v2663, 1.0
  %v2690 = vmax.f32 %v2670, 1.0
  %v2691 = vmax.f32 %v2677, 1.0
  %v2692 = vmax.f32 %v2684, 1.0
  %2694 = vset.pattern.permute.xlu0 0
  %2695 = vperm.xlu0 %2694, %v2685
  %v2696 = vpop.permute.xlu0 %2695
  %2699 = vset.pattern.permute.xlu0 0
  %2700 = vperm.xlu0 %2699, %v2686
  %v2701 = vpop.permute.xlu0 %2700
  %2704 = vset.pattern.permute.xlu0 0
  %2705 = vperm.xlu0 %2704, %v2687
  %v2706 = vpop.permute.xlu0 %2705
  %2709 = vset.pattern.permute.xlu0 0
  %2710 = vperm.xlu0 %2709, %v2688
  %v2711 = vpop.permute.xlu0 %2710
  %2714 = vset.pattern.permute.xlu0 0
  %2715 = vperm.xlu0 %2714, %v2689
  %v2716 = vpop.permute.xlu0 %2715
  %2719 = vset.pattern.permute.xlu0 0
  %2720 = vperm.xlu0 %2719, %v2690
  %v2721 = vpop.permute.xlu0 %2720
  %2724 = vset.pattern.permute.xlu0 0
  %2725 = vperm.xlu0 %2724, %v2691
  %v2726 = vpop.permute.xlu0 %2725
  %2729 = vset.pattern.permute.xlu0 0
  %2730 = vperm.xlu0 %2729, %v2692
  %v2731 = vpop.permute.xlu0 %2730
  %v2733 = vrcp.pop %v2696
  %v2734 = vmul.f32 %v2578, %v2733
  %v2735 = vrcp.pop %v2701
  %v2736 = vmul.f32 %v2585, %v2735
  %v2737 = vrcp.pop %v2706
  %v2738 = vmul.f32 %v2592, %v2737
  %v2739 = vrcp.pop %v2711
  %v2740 = vmul.f32 %v2599, %v2739
  %v2741 = vrcp.pop %v2716
  %v2742 = vmul.f32 %v2606, %v2741
  %v2743 = vrcp.pop %v2721
  %v2744 = vmul.f32 %v2613, %v2743
  %v2745 = vrcp.pop %v2726
  %v2746 = vmul.f32 %v2620, %v2745
  %v2747 = vrcp.pop %v2731
  %v2748 = vmul.f32 %v2627, %v2747
  %vm2757 = vcmask 1041409
  %v2758 = vsel %vm2757, %v2736, %v2734
  %vm2759 = vcmask 1042434
  %v2760 = vsel %vm2759, %v2738, %v2758
  %vm2761 = vcmask 1043459
  %v2762 = vsel %vm2761, %v2740, %v2760
  %vm2763 = vcmask 1044484
  %v2764 = vsel %vm2763, %v2742, %v2762
  %vm2765 = vcmask 1045509
  %v2766 = vsel %vm2765, %v2744, %v2764
  %vm2767 = vcmask 1046534
  %v2768 = vsel %vm2767, %v2746, %v2766
  %vm2769 = vcmask 1047559
  %v2770 = vsel %vm2769, %v2748, %v2768
  %2772 = vst.msk [vmem:[%s18] sm:$0xff] %vm68, %v2770
  // Predicated region
  $region70: #{forward.4} parent=0 // pred_check
    _
  $region71: #{forward.4} parent=0 // pred_check_branch
    %2774 = sbr.rel (0) target = $region73
  $region72: #{forward.4} parent=0 // pred_region
    _
  $region73: #{forward.4} parent=0 // pred_fallthru
    _
  // Predicated region
  $region74: #{forward.4} parent=0 // pred_check
    _
  $region75: #{forward.4} parent=0 // pred_check_branch
    %2776 = sbr.rel (0) target = $region77
  $region76: #{forward.4} parent=0 // pred_region
    _
  $region77: #{forward.4} parent=0 // pred_fallthru
    _
  // Predicated region
  $region78: #{forward.4} parent=0 // pred_check
    _
  $region79: #{forward.4} parent=0 // pred_check_branch
    %2778 = sbr.rel (0) target = $region81
  $region80: #{forward.4} parent=0 // pred_region
    _
  $region81: #{forward.4} parent=0 // pred_fallthru
    _
  // Predicated region
  $region82: #{forward.4} parent=0 // pred_check
    _
  $region83: #{forward.4} parent=0 // pred_check_branch
    %2780 = sbr.rel (0) target = $region85
  $region84: #{forward.4} parent=0 // pred_region
    _
  $region85: #{forward.4} parent=0 // pred_fallthru
    _

</llo_original>
